<compile_context>
chip_gen: v6e
topology: v6e:2x2x1
jax: 0.10.0
libtpu: 0.0.40
codegen_flags: <defaults>
</compile_context>

<pallas_src>
import jax
import jax.numpy as jnp
from jax import lax
from jax.experimental import pallas as pl
from jax.experimental.pallas import tpu as pltpu

LANE = 128          # TPU vreg lane width; gate / tag padding target
NEG_INF = -1e30     # padded-logit mask; exp(NEG_INF - max) underflows to exactly 0 in f32


def _round_up(v, m):
    return ((v + m - 1) // m) * m


# -----------------------------------------------------------------------------
# Fused kernel factory: embedding output in, padded NER/SA probabilities out.
# -----------------------------------------------------------------------------
def _make_joint_kernel(num_layers, T, NB, N_total, Hp):
    """T: time steps (PyTorch batch_size / LSTM dim0); NB: per-block batch rows (PyTorch
    seq_length slice / LSTM dim1); N_total: full batch rows; Hp: 128-padded hidden dim."""
    G4 = 4 * Hp
    inv_n = 1.0 / float(N_total)   # fold the mean's 1/N into a constant multiply

    def _softmax_lane(logits):
        # Exact softmax (rows must sum to 1; the approx reciprocal version failed that check).
        m = jnp.max(logits, axis=-1, keepdims=True)
        e = jnp.exp(logits - m)
        return e / jnp.sum(e, axis=-1, keepdims=True)

    def _lstm_cell(g, c):
        # Hp % 128 == 0, so every gate slice is a whole 128-lane block (no relayouts).
        i_g = jax.nn.sigmoid(g[:, 0 * Hp:1 * Hp])
        f_g = jax.nn.sigmoid(g[:, 1 * Hp:2 * Hp])
        g_g = jnp.tanh(g[:, 2 * Hp:3 * Hp])
        o_g = jax.nn.sigmoid(g[:, 3 * Hp:4 * Hp])
        c_new = f_g * c + i_g * g_g
        h_new = o_g * jnp.tanh(c_new)
        return h_new, c_new

    def kernel(*refs):
        n_w = 4 * num_layers
        x_ref = refs[0]
        lw = refs[1:1 + n_w]                                  # per-layer packed LSTM weights
        wner_ref, bner_ref, wsa_ref, bsa_ref = refs[1 + n_w:5 + n_w]
        ner_ref, sa_ref = refs[5 + n_w], refs[6 + n_w]
        buf, gx, sa_acc = refs[7 + n_w:]                      # VMEM scratch

        # SA pooled-sum accumulator persists across the N-grid: init on the first block.
        @pl.when(pl.program_id(0) == 0)
        def _():
            sa_acc[...] = jnp.zeros_like(sa_acc)

        for layer in range(num_layers):
            w_in = lw[4 * layer + 0][...]    # [Din_p, 8*Hp]  fwd|rev gate columns, packed
            b_in = lw[4 * layer + 1][...]    # [1, 8*Hp]      b_ih + b_hh pre-summed
            whh_f = lw[4 * layer + 2][...]   # [Hp, 4*Hp]
            whh_r = lw[4 * layer + 3][...]   # [Hp, 4*Hp]

            # Hoisted input projection for BOTH directions as a single 2-D MXU matmul.
            if layer == 0:
                h2d = x_ref[...].reshape(T * NB, -1)          # [T*NB, E]
            else:
                h2d = buf[...].reshape(T * NB, 2 * Hp)        # [T*NB, 2Hp] fwd|rev lanes
            gx[...] = (jnp.dot(h2d, w_in, preferred_element_type=jnp.float32)
                       + b_in).reshape(T, NB, 8 * Hp)

            # Interleaved recurrence: fwd step at t=i, rev step at t=T-1-i each iteration.
            # Only h @ W_hh stays inside the serial time loop; both dots are issued before
            # either direction's gate math so one hides under the other's VPU/EUP work.
            def step(i, carry):
                hf, cf, hr, cr = carry
                tf = i
                tr = T - 1 - i
                gf = gx[tf, :, 0:G4] + jnp.dot(hf, whh_f,
                                               preferred_element_type=jnp.float32)
                gr = gx[tr, :, G4:2 * G4] + jnp.dot(hr, whh_r,
                                                    preferred_element_type=jnp.float32)
                hf, cf = _lstm_cell(gf, cf)
                hr, cr = _lstm_cell(gr, cr)
                buf[tf, :, 0:Hp] = hf                          # lane-dense (Hp-aligned) store
                buf[tr, :, Hp:2 * Hp] = hr
                return (hf, cf, hr, cr)

            z = jnp.zeros((NB, Hp), jnp.float32)
            lax.fori_loop(0, T, step, (z, z, z, z), unroll=min(T, 8))

        # ----------------------- heads (fused epilogue) -----------------------
        # TODO(synk): fuse the NER matmul into the last layer's recurrence as MXU filler.
        h2d = buf[...].reshape(T * NB, 2 * Hp)
        ner_logits = (jnp.dot(h2d, wner_ref[...], preferred_element_type=jnp.float32)
                      + bner_ref[...])                          # padded lanes biased to -1e30
        ner_ref[...] = _softmax_lane(ner_logits).reshape(T, NB, -1)

        # Accumulate pooled sums for the SA mean over the FULL batch axis.
        sa_acc[...] = sa_acc[...] + jnp.sum(buf[...], axis=1)

        @pl.when(pl.program_id(0) == pl.num_programs(0) - 1)
        def _():
            pooled = sa_acc[...] * inv_n                        # [T, 2Hp]
            sa_logits = (jnp.dot(pooled, wsa_ref[...], preferred_element_type=jnp.float32)
                         + bsa_ref[...])
            sa_ref[...] = _softmax_lane(sa_logits)

    return kernel


# -----------------------------------------------------------------------------
# Wrapper: embedding gather in plain JAX, single pallas_call, slice off padding.
# -----------------------------------------------------------------------------
def joint_model_forward(inputs, packed, *, n_block=None,
                        vmem_limit_bytes=48 * 1024 * 1024):
    # TODO(synk): fuse the embedding gather via PrefetchScalarGridSpec + DMA gather.
    x = packed['embedding'][inputs].astype(jnp.float32)        # [T, N, E] (time-major)
    T, N, E = x.shape
    Hp = packed['hidden_pad']
    Kp_ner = packed['kp_ner']
    Kp_sa = packed['kp_sa']
    num_layers = len(packed['lstm'])

    if n_block is None:
        cands = [c for c in range(8, min(N, 256) + 1, 8) if N % c == 0]
        n_block = cands[-1] if cands else N
    assert N % n_block == 0 and (n_block % 8 == 0 or n_block == N), (N, n_block)
    grid = (N // n_block,)

    flat = [x]
    for layer_w in packed['lstm']:
        flat += list(layer_w)
    flat += [packed['w_ner'], packed['b_ner'], packed['w_sa'], packed['b_sa']]

    def pinned(arr):   # whole-array block, constant index -> fetched once, stays in VMEM
        zeros = (0,) * arr.ndim
        return pl.BlockSpec(arr.shape, lambda j, _z=zeros: _z)

    in_specs = [pl.BlockSpec((T, n_block, E), lambda j: (0, j, 0))]
    in_specs += [pinned(a) for a in flat[1:]]

    out_specs = (pl.BlockSpec((T, n_block, Kp_ner), lambda j: (0, j, 0)),
                 pl.BlockSpec((T, Kp_sa), lambda j: (0, 0)))
    out_shape = (jax.ShapeDtypeStruct((T, N, Kp_ner), jnp.float32),
                 jax.ShapeDtypeStruct((T, Kp_sa), jnp.float32))

    kernel = _make_joint_kernel(num_layers, T, n_block, N, Hp)

    ner_full, sa_full = pl.pallas_call(
        kernel,
        grid=grid,
        in_specs=in_specs,
        out_specs=out_specs,
        out_shape=out_shape,
        scratch_shapes=[
            pltpu.VMEM((T, n_block, 2 * Hp), jnp.float32),     # bidir hidden (fwd|rev lanes)
            pltpu.VMEM((T, n_block, 8 * Hp), jnp.float32),     # hoisted gates (fwd|rev)
            pltpu.VMEM((T, 2 * Hp), jnp.float32),              # SA pooled-sum accumulator
        ],
        compiler_params=pltpu.CompilerParams(
            # "arbitrary": SA pooled sums accumulate across N-blocks in scratch.
            # TODO(synk): on v7x split the grid (or directions) across both TensorCores.
            dimension_semantics=("arbitrary",),
            vmem_limit_bytes=vmem_limit_bytes),
    )(*flat)

    return (ner_full[:, :, :packed['num_ner_tags']],
            sa_full[:, :packed['num_sa_tags']])


# -----------------------------------------------------------------------------
# Parameter init (raw PyTorch layout) + one-time packing into the kernel layout.
# -----------------------------------------------------------------------------
def init_params(key, vocab_size, emb_dim, hidden, num_layers, num_ner_tags, num_sa_tags):
    keys = jax.random.split(key, 1 + num_layers * 2 * 4 + 4)
    it = iter(keys)
    raw = {'hidden': hidden}
    raw['embedding'] = jax.random.normal(next(it), (vocab_size, emb_dim), jnp.float32)

    k = hidden ** -0.5
    lstm = []
    for layer in range(num_layers):
        din = emb_dim if layer == 0 else 2 * hidden
        dirs = []
        for _direction in range(2):  # forward, reverse
            w_ih = jax.random.uniform(next(it), (4 * hidden, din), jnp.float32, -k, k)
            w_hh = jax.random.uniform(next(it), (4 * hidden, hidden), jnp.float32, -k, k)
            b_ih = jax.random.uniform(next(it), (4 * hidden,), jnp.float32, -k, k)
            b_hh = jax.random.uniform(next(it), (4 * hidden,), jnp.float32, -k, k)
            dirs.append((w_ih, w_hh, b_ih, b_hh))
        lstm.append(tuple(dirs))
    raw['lstm'] = lstm

    kin = (2 * hidden) ** -0.5
    raw['w_ner'] = jax.random.uniform(next(it), (num_ner_tags, 2 * hidden), jnp.float32, -kin, kin)
    raw['b_ner'] = jax.random.uniform(next(it), (num_ner_tags,), jnp.float32, -kin, kin)
    raw['w_sa'] = jax.random.uniform(next(it), (num_sa_tags, 2 * hidden), jnp.float32, -kin, kin)
    raw['b_sa'] = jax.random.uniform(next(it), (num_sa_tags,), jnp.float32, -kin, kin)
    return raw


def _pad_gate_cols(w, H, Hp):
    """[Din, 4H] -> [Din, 4Hp]: gate k's H columns land at [k*Hp, k*Hp+H); zeros elsewhere."""
    out = jnp.zeros((w.shape[0], 4 * Hp), jnp.float32)
    for k in range(4):
        out = out.at[:, k * Hp:k * Hp + H].set(w[:, k * H:(k + 1) * H])
    return out


def _pad_bidir_rows(w, H, Hp):
    """[2H, C] -> [2Hp, C]: fwd rows -> [0, H), rev rows -> [Hp, Hp+H); zeros elsewhere."""
    out = jnp.zeros((2 * Hp, w.shape[1]), jnp.float32)
    out = out.at[0:H].set(w[0:H])
    out = out.at[Hp:Hp + H].set(w[H:2 * H])
    return out


def pack_params(raw, lane=LANE):
    """Pre-transpose, gate-scatter to 128-lane slots, pre-sum biases, pad heads to 128 tags.
    Padded hidden lanes stay identically zero through the recurrence (zero weights/bias ->
    g=0 -> h=0.5*tanh(0)=0, c stays 0), so results on the real lanes are unchanged."""
    H = raw['hidden']
    Hp = _round_up(H, lane)
    packed = {'embedding': raw['embedding'], 'hidden': H, 'hidden_pad': Hp,
              'num_ner_tags': raw['b_ner'].shape[0], 'num_sa_tags': raw['b_sa'].shape[0]}

    lstm_packed = []
    for layer, (fwd, rev) in enumerate(raw['lstm']):
        def pack_dir(w_ih, w_hh, b_ih, b_hh):
            w_ih_p = _pad_gate_cols(jnp.transpose(w_ih), H, Hp)              # [Din, 4Hp]
            w_hh_p = jnp.zeros((Hp, 4 * Hp), jnp.float32)
            w_hh_p = w_hh_p.at[:H].set(_pad_gate_cols(jnp.transpose(w_hh), H, Hp))
            b_p = _pad_gate_cols((b_ih + b_hh)[None, :], H, Hp)              # [1, 4Hp]
            return w_ih_p, w_hh_p, b_p
        wif, whf, bf = pack_dir(*fwd)
        wir, whr, br = pack_dir(*rev)
        if layer > 0:  # input rows are [h_fwd | h_rev]; scatter into the padded lane layout
            wif = _pad_bidir_rows(wif, H, Hp)
            wir = _pad_bidir_rows(wir, H, Hp)
        w_in = jnp.concatenate([wif, wir], axis=1)                           # [Din_p, 8Hp]
        b_in = jnp.concatenate([bf, br], axis=1)                             # [1, 8Hp]
        lstm_packed.append((w_in, b_in, whf, whr))
    packed['lstm'] = lstm_packed

    def pack_head(w, b):
        K = w.shape[0]
        Kp = _round_up(K, lane)
        w_p = jnp.zeros((2 * Hp, Kp), jnp.float32)
        w_p = w_p.at[:, :K].set(_pad_bidir_rows(jnp.transpose(w), H, Hp))
        b_p = jnp.full((1, Kp), NEG_INF, jnp.float32).at[0, :K].set(b)       # mask padded logits
        return w_p, b_p, Kp

    packed['w_ner'], packed['b_ner'], packed['kp_ner'] = pack_head(raw['w_ner'], raw['b_ner'])
    packed['w_sa'], packed['b_sa'], packed['kp_sa'] = pack_head(raw['w_sa'], raw['b_sa'])
    return packed


# -----------------------------------------------------------------------------
# Pure-JAX reference (PyTorch semantics, raw weights) for correctness checking.
# -----------------------------------------------------------------------------
def reference_forward(inputs, raw):
    x = raw['embedding'][inputs].astype(jnp.float32)           # [T, N, E]
    _, N, _ = x.shape
    H = raw['hidden']
    for fwd, rev in raw['lstm']:
        outs = []
        for (w_ih, w_hh, b_ih, b_hh), reverse in ((fwd, False), (rev, True)):
            w_ih_t = jnp.transpose(w_ih)
            w_hh_t = jnp.transpose(w_hh)
            b = (b_ih + b_hh)[None, :]
            seq = x[::-1] if reverse else x

            def step(carry, x_t, w_ih_t=w_ih_t, w_hh_t=w_hh_t, b=b):
                h, c = carry
                g = x_t @ w_ih_t + h @ w_hh_t + b
                i = jax.nn.sigmoid(g[:, :H])
                f = jax.nn.sigmoid(g[:, H:2 * H])
                gg = jnp.tanh(g[:, 2 * H:3 * H])
                o = jax.nn.sigmoid(g[:, 3 * H:])
                c = f * c + i * gg
                h = o * jnp.tanh(c)
                return (h, c), h

            init = (jnp.zeros((N, H), jnp.float32), jnp.zeros((N, H), jnp.float32))
            _, ys = lax.scan(step, init, seq)
            outs.append(ys[::-1] if reverse else ys)
        x = jnp.concatenate(outs, axis=-1)                      # [T, N, 2H]

    ner = jax.nn.softmax(jnp.einsum('tnh,hk->tnk', x, jnp.transpose(raw['w_ner']))
                         + raw['b_ner'], axis=-1)
    sa = jax.nn.softmax(jnp.mean(x, axis=1) @ jnp.transpose(raw['w_sa'])
                        + raw['b_sa'], axis=-1)
    return ner, sa


if __name__ == "__main__":
    VOCAB = 32
    EMB_DIM = 16
    HIDDEN = 16
    NUM_LAYERS = 2
    NUM_NER = 9
    NUM_SA = 2
    B, S = 2, 16   # inputs: [batch_size, seq_length] as in the PyTorch module

    root = jax.random.PRNGKey(0)
    k_params, k_inputs = jax.random.split(root)
    raw = init_params(k_params, VOCAB, EMB_DIM, HIDDEN, NUM_LAYERS, NUM_NER, NUM_SA)
    packed = pack_params(raw)
    inputs = jax.random.randint(k_inputs, (B, S), 0, VOCAB, dtype=jnp.int32)

    # n_block=8 -> grid of 2 N-blocks, exercising the pipelined grid + SA accumulation path.
    fwd_fn = jax.jit(lambda t: joint_model_forward(t, packed, n_block=8))
    ner, sa = fwd_fn(inputs)
    jax.block_until_ready((ner, sa))

    assert ner.shape == (B, S, NUM_NER), ner.shape
    assert sa.shape == (B, NUM_SA), sa.shape

    ner_ref, sa_ref = jax.jit(lambda t: reference_forward(t, raw))(inputs)
    err_ner = float(jnp.max(jnp.abs(ner - ner_ref)))
    err_sa = float(jnp.max(jnp.abs(sa - sa_ref)))
    assert jnp.allclose(ner, ner_ref, atol=2e-3, rtol=2e-3), err_ner
    assert jnp.allclose(sa, sa_ref, atol=2e-3, rtol=2e-3), err_sa
    # Softmax rows must sum to 1 (exact reciprocal in-kernel; padded lanes carry zero mass).
    assert jnp.allclose(jnp.sum(ner, axis=-1), 1.0, atol=1e-3)
    assert jnp.allclose(jnp.sum(sa, axis=-1), 1.0, atol=1e-3)
    print("KERNEL_OK")
</pallas_src>

<mosaic_0001>
module attributes {stable_mosaic.version = 11 : i64} {
  func.func @kernel(%arg0: i32, %arg1: memref<2x8x16xf32, #tpu.memory_space<vmem>>, %arg2: memref<16x1024xf32, #tpu.memory_space<vmem>>, %arg3: memref<1x1024xf32, #tpu.memory_space<vmem>>, %arg4: memref<128x512xf32, #tpu.memory_space<vmem>>, %arg5: memref<128x512xf32, #tpu.memory_space<vmem>>, %arg6: memref<256x1024xf32, #tpu.memory_space<vmem>>, %arg7: memref<1x1024xf32, #tpu.memory_space<vmem>>, %arg8: memref<128x512xf32, #tpu.memory_space<vmem>>, %arg9: memref<128x512xf32, #tpu.memory_space<vmem>>, %arg10: memref<256x128xf32, #tpu.memory_space<vmem>>, %arg11: memref<1x128xf32, #tpu.memory_space<vmem>>, %arg12: memref<256x128xf32, #tpu.memory_space<vmem>>, %arg13: memref<1x128xf32, #tpu.memory_space<vmem>>, %arg14: memref<2x8x128xf32, #tpu.memory_space<vmem>>, %arg15: memref<2x128xf32, #tpu.memory_space<vmem>>, %arg16: memref<2x8x256xf32, #tpu.memory_space<vmem>>, %arg17: memref<2x8x1024xf32, #tpu.memory_space<vmem>>, %arg18: memref<2x256xf32, #tpu.memory_space<vmem>>) attributes {dimension_semantics = [#tpu.dimension_semantics<arbitrary>], iteration_bounds = array<i64: 2>, scalar_prefetch = 0 : i64, scratch_operands = 3 : i64, tpu.core_type = #tpu.core_type<tc>, window_params = [{transform_indices = @transform_0, window_bounds = array<i64: 2, 8, 16>}, {pipeline_mode = #tpu.pipeline_mode<synchronous>, transform_indices = @transform_1, window_bounds = array<i64: 16, 1024>}, {pipeline_mode = #tpu.pipeline_mode<synchronous>, transform_indices = @transform_2, window_bounds = array<i64: 1, 1024>}, {pipeline_mode = #tpu.pipeline_mode<synchronous>, transform_indices = @transform_3, window_bounds = array<i64: 128, 512>}, {pipeline_mode = #tpu.pipeline_mode<synchronous>, transform_indices = @transform_4, window_bounds = array<i64: 128, 512>}, {pipeline_mode = #tpu.pipeline_mode<synchronous>, transform_indices = @transform_5, window_bounds = array<i64: 256, 1024>}, {pipeline_mode = #tpu.pipeline_mode<synchronous>, transform_indices = @transform_6, window_bounds = array<i64: 1, 1024>}, {pipeline_mode = #tpu.pipeline_mode<synchronous>, transform_indices = @transform_7, window_bounds = array<i64: 128, 512>}, {pipeline_mode = #tpu.pipeline_mode<synchronous>, transform_indices = @transform_8, window_bounds = array<i64: 128, 512>}, {pipeline_mode = #tpu.pipeline_mode<synchronous>, transform_indices = @transform_9, window_bounds = array<i64: 256, 128>}, {pipeline_mode = #tpu.pipeline_mode<synchronous>, transform_indices = @transform_10, window_bounds = array<i64: 1, 128>}, {pipeline_mode = #tpu.pipeline_mode<synchronous>, transform_indices = @transform_11, window_bounds = array<i64: 256, 128>}, {pipeline_mode = #tpu.pipeline_mode<synchronous>, transform_indices = @transform_12, window_bounds = array<i64: 1, 128>}, {transform_indices = @transform_13, window_bounds = array<i64: 2, 8, 128>}, {pipeline_mode = #tpu.pipeline_mode<synchronous>, transform_indices = @transform_14, window_bounds = array<i64: 2, 128>}]} {
    %c0_i32 = arith.constant 0 : i32
    %0 = arith.cmpi eq, %arg0, %c0_i32 : i32
    %1 = arith.extui %0 : i1 to i32
    %c0_i32_0 = arith.constant 0 : i32
    %2 = arith.cmpi ne, %1, %c0_i32_0 : i32
    scf.if %2 {
      %cst_124 = arith.constant 0.000000e+00 : f32
      %329 = vector.broadcast %cst_124 : f32 to vector<2x256xf32>
      %c0_125 = arith.constant 0 : index
      %c0_126 = arith.constant 0 : index
      %330 = vector.load %arg18[%c0_125, %c0_126] : memref<2x256xf32, #tpu.memory_space<vmem>>, vector<2x256xf32>
      tpu.vector_store %arg18[%c0_125, %c0_126], %329 {strides = array<i32>} : memref<2x256xf32, #tpu.memory_space<vmem>>, vector<2x256xf32>,
    } else {
    }
    %c0 = arith.constant 0 : index
    %c0_1 = arith.constant 0 : index
    %3 = vector.load %arg2[%c0, %c0_1] : memref<16x1024xf32, #tpu.memory_space<vmem>>, vector<16x1024xf32>
    %c0_2 = arith.constant 0 : index
    %c0_3 = arith.constant 0 : index
    %4 = vector.load %arg3[%c0_2, %c0_3] : memref<1x1024xf32, #tpu.memory_space<vmem>>, vector<1x1024xf32>
    %c0_4 = arith.constant 0 : index
    %c0_5 = arith.constant 0 : index
    %5 = vector.load %arg4[%c0_4, %c0_5] : memref<128x512xf32, #tpu.memory_space<vmem>>, vector<128x512xf32>
    %c0_6 = arith.constant 0 : index
    %c0_7 = arith.constant 0 : index
    %6 = vector.load %arg5[%c0_6, %c0_7] : memref<128x512xf32, #tpu.memory_space<vmem>>, vector<128x512xf32>
    %c0_8 = arith.constant 0 : index
    %c0_9 = arith.constant 0 : index
    %c0_10 = arith.constant 0 : index
    %7 = vector.load %arg1[%c0_8, %c0_9, %c0_10] : memref<2x8x16xf32, #tpu.memory_space<vmem>>, vector<2x8x16xf32>
    %8 = vector.shape_cast %7 : vector<2x8x16xf32> to vector<16x16xf32>
    %cst = arith.constant dense<0.000000e+00> : vector<16x1024xf32>
    %9 = tpu.matmul %8, %3, %cst {dimension_numbers = #tpu.dot_dimension_numbers<[1], [0], [0], [1], [0, 0, 1, 1], [], []>} : vector<16x16xf32>, vector<16x1024xf32>, vector<16x1024xf32> -> vector<16x1024xf32>
    %10 = vector.broadcast %4 : vector<1x1024xf32> to vector<16x1024xf32>
    %11 = arith.addf %9, %10 : vector<16x1024xf32>
    %12 = vector.shape_cast %11 : vector<16x1024xf32> to vector<2x8x1024xf32>
    %c0_11 = arith.constant 0 : index
    %c0_12 = arith.constant 0 : index
    %c0_13 = arith.constant 0 : index
    %13 = vector.load %arg17[%c0_11, %c0_12, %c0_13] : memref<2x8x1024xf32, #tpu.memory_space<vmem>>, vector<2x8x1024xf32>
    tpu.vector_store %arg17[%c0_11, %c0_12, %c0_13], %12 {strides = array<i32>} : memref<2x8x1024xf32, #tpu.memory_space<vmem>>, vector<2x8x1024xf32>,
    %cst_14 = arith.constant 0.000000e+00 : f32
    %14 = vector.broadcast %cst_14 : f32 to vector<8x128xf32>
    %c0_i32_15 = arith.constant 0 : i32
    %c1_i32 = arith.constant 1 : i32
    %15 = arith.subi %c1_i32, %c0_i32_15 : i32
    %16 = arith.index_cast %c0_i32_15 : i32 to index
    %c0_16 = arith.constant 0 : index
    %c0_17 = arith.constant 0 : index
    %17 = vector.load %arg17[%16, %c0_16, %c0_17] : memref<2x8x1024xf32, #tpu.memory_space<vmem>>, vector<1x8x512xf32>
    %18 = vector.shape_cast %17 : vector<1x8x512xf32> to vector<8x512xf32>
    %cst_18 = arith.constant dense<0.000000e+00> : vector<8x512xf32>
    %19 = tpu.matmul %14, %5, %cst_18 {dimension_numbers = #tpu.dot_dimension_numbers<[1], [0], [0], [1], [0, 0, 1, 1], [], []>} : vector<8x128xf32>, vector<128x512xf32>, vector<8x512xf32> -> vector<8x512xf32>
    %20 = arith.addf %18, %19 : vector<8x512xf32>
    %21 = arith.index_cast %15 : i32 to index
    %c0_19 = arith.constant 0 : index
    %c512 = arith.constant 512 : index
    %22 = vector.load %arg17[%21, %c0_19, %c512] : memref<2x8x1024xf32, #tpu.memory_space<vmem>>, vector<1x8x512xf32>
    %23 = vector.shape_cast %22 : vector<1x8x512xf32> to vector<8x512xf32>
    %cst_20 = arith.constant dense<0.000000e+00> : vector<8x512xf32>
    %24 = tpu.matmul %14, %6, %cst_20 {dimension_numbers = #tpu.dot_dimension_numbers<[1], [0], [0], [1], [0, 0, 1, 1], [], []>} : vector<8x128xf32>, vector<128x512xf32>, vector<8x512xf32> -> vector<8x512xf32>
    %25 = arith.addf %23, %24 : vector<8x512xf32>
    %26 = vector.extract_strided_slice %20 {offsets = [0, 0], sizes = [8, 128], strides = [1, 1]} : vector<8x512xf32> to vector<8x128xf32>
    %27 = arith.negf %26 : vector<8x128xf32>
    %28 = math.exp %27 : vector<8x128xf32>
    %cst_21 = arith.constant 1.000000e+00 : f32
    %29 = vector.broadcast %cst_21 : f32 to vector<8x128xf32>
    %30 = arith.addf %29, %28 : vector<8x128xf32>
    %31 = arith.divf %29, %30 : vector<8x128xf32>
    %32 = vector.extract_strided_slice %20 {offsets = [0, 128], sizes = [8, 128], strides = [1, 1]} : vector<8x512xf32> to vector<8x128xf32>
    %33 = arith.negf %32 : vector<8x128xf32>
    %34 = math.exp %33 : vector<8x128xf32>
    %cst_22 = arith.constant 1.000000e+00 : f32
    %35 = vector.broadcast %cst_22 : f32 to vector<8x128xf32>
    %36 = arith.addf %35, %34 : vector<8x128xf32>
    %37 = arith.divf %35, %36 : vector<8x128xf32>
    %38 = vector.extract_strided_slice %20 {offsets = [0, 256], sizes = [8, 128], strides = [1, 1]} : vector<8x512xf32> to vector<8x128xf32>
    %39 = math.tanh %38 : vector<8x128xf32>
    %40 = vector.extract_strided_slice %20 {offsets = [0, 384], sizes = [8, 128], strides = [1, 1]} : vector<8x512xf32> to vector<8x128xf32>
    %41 = arith.negf %40 : vector<8x128xf32>
    %42 = math.exp %41 : vector<8x128xf32>
    %cst_23 = arith.constant 1.000000e+00 : f32
    %43 = vector.broadcast %cst_23 : f32 to vector<8x128xf32>
    %44 = arith.addf %43, %42 : vector<8x128xf32>
    %45 = arith.divf %43, %44 : vector<8x128xf32>
    %46 = arith.mulf %37, %14 : vector<8x128xf32>
    %47 = arith.mulf %31, %39 : vector<8x128xf32>
    %48 = arith.addf %46, %47 : vector<8x128xf32>
    %49 = math.tanh %48 : vector<8x128xf32>
    %50 = arith.mulf %45, %49 : vector<8x128xf32>
    %51 = vector.extract_strided_slice %25 {offsets = [0, 0], sizes = [8, 128], strides = [1, 1]} : vector<8x512xf32> to vector<8x128xf32>
    %52 = arith.negf %51 : vector<8x128xf32>
    %53 = math.exp %52 : vector<8x128xf32>
    %cst_24 = arith.constant 1.000000e+00 : f32
    %54 = vector.broadcast %cst_24 : f32 to vector<8x128xf32>
    %55 = arith.addf %54, %53 : vector<8x128xf32>
    %56 = arith.divf %54, %55 : vector<8x128xf32>
    %57 = vector.extract_strided_slice %25 {offsets = [0, 128], sizes = [8, 128], strides = [1, 1]} : vector<8x512xf32> to vector<8x128xf32>
    %58 = arith.negf %57 : vector<8x128xf32>
    %59 = math.exp %58 : vector<8x128xf32>
    %cst_25 = arith.constant 1.000000e+00 : f32
    %60 = vector.broadcast %cst_25 : f32 to vector<8x128xf32>
    %61 = arith.addf %60, %59 : vector<8x128xf32>
    %62 = arith.divf %60, %61 : vector<8x128xf32>
    %63 = vector.extract_strided_slice %25 {offsets = [0, 256], sizes = [8, 128], strides = [1, 1]} : vector<8x512xf32> to vector<8x128xf32>
    %64 = math.tanh %63 : vector<8x128xf32>
    %65 = vector.extract_strided_slice %25 {offsets = [0, 384], sizes = [8, 128], strides = [1, 1]} : vector<8x512xf32> to vector<8x128xf32>
    %66 = arith.negf %65 : vector<8x128xf32>
    %67 = math.exp %66 : vector<8x128xf32>
    %cst_26 = arith.constant 1.000000e+00 : f32
    %68 = vector.broadcast %cst_26 : f32 to vector<8x128xf32>
    %69 = arith.addf %68, %67 : vector<8x128xf32>
    %70 = arith.divf %68, %69 : vector<8x128xf32>
    %71 = arith.mulf %62, %14 : vector<8x128xf32>
    %72 = arith.mulf %56, %64 : vector<8x128xf32>
    %73 = arith.addf %71, %72 : vector<8x128xf32>
    %74 = math.tanh %73 : vector<8x128xf32>
    %75 = arith.mulf %70, %74 : vector<8x128xf32>
    %76 = arith.index_cast %c0_i32_15 : i32 to index
    %c0_27 = arith.constant 0 : index
    %c0_28 = arith.constant 0 : index
    %77 = vector.load %arg16[%76, %c0_27, %c0_28] : memref<2x8x256xf32, #tpu.memory_space<vmem>>, vector<1x8x128xf32>
    %78 = vector.shape_cast %77 : vector<1x8x128xf32> to vector<8x128xf32>
    %79 = vector.shape_cast %50 : vector<8x128xf32> to vector<1x8x128xf32>
    tpu.vector_store %arg16[%76, %c0_27, %c0_28], %79 {strides = array<i32>} : memref<2x8x256xf32, #tpu.memory_space<vmem>>, vector<1x8x128xf32>,
    %80 = arith.index_cast %15 : i32 to index
    %c0_29 = arith.constant 0 : index
    %c128 = arith.constant 128 : index
    %81 = vector.load %arg16[%80, %c0_29, %c128] : memref<2x8x256xf32, #tpu.memory_space<vmem>>, vector<1x8x128xf32>
    %82 = vector.shape_cast %81 : vector<1x8x128xf32> to vector<8x128xf32>
    %83 = vector.shape_cast %75 : vector<8x128xf32> to vector<1x8x128xf32>
    tpu.vector_store %arg16[%80, %c0_29, %c128], %83 {strides = array<i32>} : memref<2x8x256xf32, #tpu.memory_space<vmem>>, vector<1x8x128xf32>,
    %c1_i32_30 = arith.constant 1 : i32
    %c1_i32_31 = arith.constant 1 : i32
    %84 = arith.subi %c1_i32_31, %c1_i32_30 : i32
    %85 = arith.index_cast %c1_i32_30 : i32 to index
    %c0_32 = arith.constant 0 : index
    %c0_33 = arith.constant 0 : index
    %86 = vector.load %arg17[%85, %c0_32, %c0_33] : memref<2x8x1024xf32, #tpu.memory_space<vmem>>, vector<1x8x512xf32>
    %87 = vector.shape_cast %86 : vector<1x8x512xf32> to vector<8x512xf32>
    %cst_34 = arith.constant dense<0.000000e+00> : vector<8x512xf32>
    %88 = tpu.matmul %50, %5, %cst_34 {dimension_numbers = #tpu.dot_dimension_numbers<[1], [0], [0], [1], [0, 0, 1, 1], [], []>} : vector<8x128xf32>, vector<128x512xf32>, vector<8x512xf32> -> vector<8x512xf32>
    %89 = arith.addf %87, %88 : vector<8x512xf32>
    %90 = arith.index_cast %84 : i32 to index
    %c0_35 = arith.constant 0 : index
    %c512_36 = arith.constant 512 : index
    %91 = vector.load %arg17[%90, %c0_35, %c512_36] : memref<2x8x1024xf32, #tpu.memory_space<vmem>>, vector<1x8x512xf32>
    %92 = vector.shape_cast %91 : vector<1x8x512xf32> to vector<8x512xf32>
    %cst_37 = arith.constant dense<0.000000e+00> : vector<8x512xf32>
    %93 = tpu.matmul %75, %6, %cst_37 {dimension_numbers = #tpu.dot_dimension_numbers<[1], [0], [0], [1], [0, 0, 1, 1], [], []>} : vector<8x128xf32>, vector<128x512xf32>, vector<8x512xf32> -> vector<8x512xf32>
    %94 = arith.addf %92, %93 : vector<8x512xf32>
    %95 = vector.extract_strided_slice %89 {offsets = [0, 0], sizes = [8, 128], strides = [1, 1]} : vector<8x512xf32> to vector<8x128xf32>
    %96 = arith.negf %95 : vector<8x128xf32>
    %97 = math.exp %96 : vector<8x128xf32>
    %cst_38 = arith.constant 1.000000e+00 : f32
    %98 = vector.broadcast %cst_38 : f32 to vector<8x128xf32>
    %99 = arith.addf %98, %97 : vector<8x128xf32>
    %100 = arith.divf %98, %99 : vector<8x128xf32>
    %101 = vector.extract_strided_slice %89 {offsets = [0, 128], sizes = [8, 128], strides = [1, 1]} : vector<8x512xf32> to vector<8x128xf32>
    %102 = arith.negf %101 : vector<8x128xf32>
    %103 = math.exp %102 : vector<8x128xf32>
    %cst_39 = arith.constant 1.000000e+00 : f32
    %104 = vector.broadcast %cst_39 : f32 to vector<8x128xf32>
    %105 = arith.addf %104, %103 : vector<8x128xf32>
    %106 = arith.divf %104, %105 : vector<8x128xf32>
    %107 = vector.extract_strided_slice %89 {offsets = [0, 256], sizes = [8, 128], strides = [1, 1]} : vector<8x512xf32> to vector<8x128xf32>
    %108 = math.tanh %107 : vector<8x128xf32>
    %109 = vector.extract_strided_slice %89 {offsets = [0, 384], sizes = [8, 128], strides = [1, 1]} : vector<8x512xf32> to vector<8x128xf32>
    %110 = arith.negf %109 : vector<8x128xf32>
    %111 = math.exp %110 : vector<8x128xf32>
    %cst_40 = arith.constant 1.000000e+00 : f32
    %112 = vector.broadcast %cst_40 : f32 to vector<8x128xf32>
    %113 = arith.addf %112, %111 : vector<8x128xf32>
    %114 = arith.divf %112, %113 : vector<8x128xf32>
    %115 = arith.mulf %106, %48 : vector<8x128xf32>
    %116 = arith.mulf %100, %108 : vector<8x128xf32>
    %117 = arith.addf %115, %116 : vector<8x128xf32>
    %118 = math.tanh %117 : vector<8x128xf32>
    %119 = arith.mulf %114, %118 : vector<8x128xf32>
    %120 = vector.extract_strided_slice %94 {offsets = [0, 0], sizes = [8, 128], strides = [1, 1]} : vector<8x512xf32> to vector<8x128xf32>
    %121 = arith.negf %120 : vector<8x128xf32>
    %122 = math.exp %121 : vector<8x128xf32>
    %cst_41 = arith.constant 1.000000e+00 : f32
    %123 = vector.broadcast %cst_41 : f32 to vector<8x128xf32>
    %124 = arith.addf %123, %122 : vector<8x128xf32>
    %125 = arith.divf %123, %124 : vector<8x128xf32>
    %126 = vector.extract_strided_slice %94 {offsets = [0, 128], sizes = [8, 128], strides = [1, 1]} : vector<8x512xf32> to vector<8x128xf32>
    %127 = arith.negf %126 : vector<8x128xf32>
    %128 = math.exp %127 : vector<8x128xf32>
    %cst_42 = arith.constant 1.000000e+00 : f32
    %129 = vector.broadcast %cst_42 : f32 to vector<8x128xf32>
    %130 = arith.addf %129, %128 : vector<8x128xf32>
    %131 = arith.divf %129, %130 : vector<8x128xf32>
    %132 = vector.extract_strided_slice %94 {offsets = [0, 256], sizes = [8, 128], strides = [1, 1]} : vector<8x512xf32> to vector<8x128xf32>
    %133 = math.tanh %132 : vector<8x128xf32>
    %134 = vector.extract_strided_slice %94 {offsets = [0, 384], sizes = [8, 128], strides = [1, 1]} : vector<8x512xf32> to vector<8x128xf32>
    %135 = arith.negf %134 : vector<8x128xf32>
    %136 = math.exp %135 : vector<8x128xf32>
    %cst_43 = arith.constant 1.000000e+00 : f32
    %137 = vector.broadcast %cst_43 : f32 to vector<8x128xf32>
    %138 = arith.addf %137, %136 : vector<8x128xf32>
    %139 = arith.divf %137, %138 : vector<8x128xf32>
    %140 = arith.mulf %131, %73 : vector<8x128xf32>
    %141 = arith.mulf %125, %133 : vector<8x128xf32>
    %142 = arith.addf %140, %141 : vector<8x128xf32>
    %143 = math.tanh %142 : vector<8x128xf32>
    %144 = arith.mulf %139, %143 : vector<8x128xf32>
    %145 = arith.index_cast %c1_i32_30 : i32 to index
    %c0_44 = arith.constant 0 : index
    %c0_45 = arith.constant 0 : index
    %146 = vector.load %arg16[%145, %c0_44, %c0_45] : memref<2x8x256xf32, #tpu.memory_space<vmem>>, vector<1x8x128xf32>
    %147 = vector.shape_cast %146 : vector<1x8x128xf32> to vector<8x128xf32>
    %148 = vector.shape_cast %119 : vector<8x128xf32> to vector<1x8x128xf32>
    tpu.vector_store %arg16[%145, %c0_44, %c0_45], %148 {strides = array<i32>} : memref<2x8x256xf32, #tpu.memory_space<vmem>>, vector<1x8x128xf32>,
    %149 = arith.index_cast %84 : i32 to index
    %c0_46 = arith.constant 0 : index
    %c128_47 = arith.constant 128 : index
    %150 = vector.load %arg16[%149, %c0_46, %c128_47] : memref<2x8x256xf32, #tpu.memory_space<vmem>>, vector<1x8x128xf32>
    %151 = vector.shape_cast %150 : vector<1x8x128xf32> to vector<8x128xf32>
    %152 = vector.shape_cast %144 : vector<8x128xf32> to vector<1x8x128xf32>
    tpu.vector_store %arg16[%149, %c0_46, %c128_47], %152 {strides = array<i32>} : memref<2x8x256xf32, #tpu.memory_space<vmem>>, vector<1x8x128xf32>,
    %c2_i32 = arith.constant 2 : i32
    %c0_48 = arith.constant 0 : index
    %c0_49 = arith.constant 0 : index
    %153 = vector.load %arg6[%c0_48, %c0_49] : memref<256x1024xf32, #tpu.memory_space<vmem>>, vector<256x1024xf32>
    %c0_50 = arith.constant 0 : index
    %c0_51 = arith.constant 0 : index
    %154 = vector.load %arg7[%c0_50, %c0_51] : memref<1x1024xf32, #tpu.memory_space<vmem>>, vector<1x1024xf32>
    %c0_52 = arith.constant 0 : index
    %c0_53 = arith.constant 0 : index
    %155 = vector.load %arg8[%c0_52, %c0_53] : memref<128x512xf32, #tpu.memory_space<vmem>>, vector<128x512xf32>
    %c0_54 = arith.constant 0 : index
    %c0_55 = arith.constant 0 : index
    %156 = vector.load %arg9[%c0_54, %c0_55] : memref<128x512xf32, #tpu.memory_space<vmem>>, vector<128x512xf32>
    %c0_56 = arith.constant 0 : index
    %c0_57 = arith.constant 0 : index
    %c0_58 = arith.constant 0 : index
    %157 = vector.load %arg16[%c0_56, %c0_57, %c0_58] : memref<2x8x256xf32, #tpu.memory_space<vmem>>, vector<2x8x256xf32>
    %158 = vector.shape_cast %157 : vector<2x8x256xf32> to vector<16x256xf32>
    %cst_59 = arith.constant dense<0.000000e+00> : vector<16x1024xf32>
    %159 = tpu.matmul %158, %153, %cst_59 {dimension_numbers = #tpu.dot_dimension_numbers<[1], [0], [0], [1], [0, 0, 1, 1], [], []>} : vector<16x256xf32>, vector<256x1024xf32>, vector<16x1024xf32> -> vector<16x1024xf32>
    %160 = vector.broadcast %154 : vector<1x1024xf32> to vector<16x1024xf32>
    %161 = arith.addf %159, %160 : vector<16x1024xf32>
    %162 = vector.shape_cast %161 : vector<16x1024xf32> to vector<2x8x1024xf32>
    %c0_60 = arith.constant 0 : index
    %c0_61 = arith.constant 0 : index
    %c0_62 = arith.constant 0 : index
    %163 = vector.load %arg17[%c0_60, %c0_61, %c0_62] : memref<2x8x1024xf32, #tpu.memory_space<vmem>>, vector<2x8x1024xf32>
    tpu.vector_store %arg17[%c0_60, %c0_61, %c0_62], %162 {strides = array<i32>} : memref<2x8x1024xf32, #tpu.memory_space<vmem>>, vector<2x8x1024xf32>,
    %cst_63 = arith.constant 0.000000e+00 : f32
    %164 = vector.broadcast %cst_63 : f32 to vector<8x128xf32>
    %c0_i32_64 = arith.constant 0 : i32
    %c1_i32_65 = arith.constant 1 : i32
    %165 = arith.subi %c1_i32_65, %c0_i32_64 : i32
    %166 = arith.index_cast %c0_i32_64 : i32 to index
    %c0_66 = arith.constant 0 : index
    %c0_67 = arith.constant 0 : index
    %167 = vector.load %arg17[%166, %c0_66, %c0_67] : memref<2x8x1024xf32, #tpu.memory_space<vmem>>, vector<1x8x512xf32>
    %168 = vector.shape_cast %167 : vector<1x8x512xf32> to vector<8x512xf32>
    %cst_68 = arith.constant dense<0.000000e+00> : vector<8x512xf32>
    %169 = tpu.matmul %164, %155, %cst_68 {dimension_numbers = #tpu.dot_dimension_numbers<[1], [0], [0], [1], [0, 0, 1, 1], [], []>} : vector<8x128xf32>, vector<128x512xf32>, vector<8x512xf32> -> vector<8x512xf32>
    %170 = arith.addf %168, %169 : vector<8x512xf32>
    %171 = arith.index_cast %165 : i32 to index
    %c0_69 = arith.constant 0 : index
    %c512_70 = arith.constant 512 : index
    %172 = vector.load %arg17[%171, %c0_69, %c512_70] : memref<2x8x1024xf32, #tpu.memory_space<vmem>>, vector<1x8x512xf32>
    %173 = vector.shape_cast %172 : vector<1x8x512xf32> to vector<8x512xf32>
    %cst_71 = arith.constant dense<0.000000e+00> : vector<8x512xf32>
    %174 = tpu.matmul %164, %156, %cst_71 {dimension_numbers = #tpu.dot_dimension_numbers<[1], [0], [0], [1], [0, 0, 1, 1], [], []>} : vector<8x128xf32>, vector<128x512xf32>, vector<8x512xf32> -> vector<8x512xf32>
    %175 = arith.addf %173, %174 : vector<8x512xf32>
    %176 = vector.extract_strided_slice %170 {offsets = [0, 0], sizes = [8, 128], strides = [1, 1]} : vector<8x512xf32> to vector<8x128xf32>
    %177 = arith.negf %176 : vector<8x128xf32>
    %178 = math.exp %177 : vector<8x128xf32>
    %cst_72 = arith.constant 1.000000e+00 : f32
    %179 = vector.broadcast %cst_72 : f32 to vector<8x128xf32>
    %180 = arith.addf %179, %178 : vector<8x128xf32>
    %181 = arith.divf %179, %180 : vector<8x128xf32>
    %182 = vector.extract_strided_slice %170 {offsets = [0, 128], sizes = [8, 128], strides = [1, 1]} : vector<8x512xf32> to vector<8x128xf32>
    %183 = arith.negf %182 : vector<8x128xf32>
    %184 = math.exp %183 : vector<8x128xf32>
    %cst_73 = arith.constant 1.000000e+00 : f32
    %185 = vector.broadcast %cst_73 : f32 to vector<8x128xf32>
    %186 = arith.addf %185, %184 : vector<8x128xf32>
    %187 = arith.divf %185, %186 : vector<8x128xf32>
    %188 = vector.extract_strided_slice %170 {offsets = [0, 256], sizes = [8, 128], strides = [1, 1]} : vector<8x512xf32> to vector<8x128xf32>
    %189 = math.tanh %188 : vector<8x128xf32>
    %190 = vector.extract_strided_slice %170 {offsets = [0, 384], sizes = [8, 128], strides = [1, 1]} : vector<8x512xf32> to vector<8x128xf32>
    %191 = arith.negf %190 : vector<8x128xf32>
    %192 = math.exp %191 : vector<8x128xf32>
    %cst_74 = arith.constant 1.000000e+00 : f32
    %193 = vector.broadcast %cst_74 : f32 to vector<8x128xf32>
    %194 = arith.addf %193, %192 : vector<8x128xf32>
    %195 = arith.divf %193, %194 : vector<8x128xf32>
    %196 = arith.mulf %187, %164 : vector<8x128xf32>
    %197 = arith.mulf %181, %189 : vector<8x128xf32>
    %198 = arith.addf %196, %197 : vector<8x128xf32>
    %199 = math.tanh %198 : vector<8x128xf32>
    %200 = arith.mulf %195, %199 : vector<8x128xf32>
    %201 = vector.extract_strided_slice %175 {offsets = [0, 0], sizes = [8, 128], strides = [1, 1]} : vector<8x512xf32> to vector<8x128xf32>
    %202 = arith.negf %201 : vector<8x128xf32>
    %203 = math.exp %202 : vector<8x128xf32>
    %cst_75 = arith.constant 1.000000e+00 : f32
    %204 = vector.broadcast %cst_75 : f32 to vector<8x128xf32>
    %205 = arith.addf %204, %203 : vector<8x128xf32>
    %206 = arith.divf %204, %205 : vector<8x128xf32>
    %207 = vector.extract_strided_slice %175 {offsets = [0, 128], sizes = [8, 128], strides = [1, 1]} : vector<8x512xf32> to vector<8x128xf32>
    %208 = arith.negf %207 : vector<8x128xf32>
    %209 = math.exp %208 : vector<8x128xf32>
    %cst_76 = arith.constant 1.000000e+00 : f32
    %210 = vector.broadcast %cst_76 : f32 to vector<8x128xf32>
    %211 = arith.addf %210, %209 : vector<8x128xf32>
    %212 = arith.divf %210, %211 : vector<8x128xf32>
    %213 = vector.extract_strided_slice %175 {offsets = [0, 256], sizes = [8, 128], strides = [1, 1]} : vector<8x512xf32> to vector<8x128xf32>
    %214 = math.tanh %213 : vector<8x128xf32>
    %215 = vector.extract_strided_slice %175 {offsets = [0, 384], sizes = [8, 128], strides = [1, 1]} : vector<8x512xf32> to vector<8x128xf32>
    %216 = arith.negf %215 : vector<8x128xf32>
    %217 = math.exp %216 : vector<8x128xf32>
    %cst_77 = arith.constant 1.000000e+00 : f32
    %218 = vector.broadcast %cst_77 : f32 to vector<8x128xf32>
    %219 = arith.addf %218, %217 : vector<8x128xf32>
    %220 = arith.divf %218, %219 : vector<8x128xf32>
    %221 = arith.mulf %212, %164 : vector<8x128xf32>
    %222 = arith.mulf %206, %214 : vector<8x128xf32>
    %223 = arith.addf %221, %222 : vector<8x128xf32>
    %224 = math.tanh %223 : vector<8x128xf32>
    %225 = arith.mulf %220, %224 : vector<8x128xf32>
    %226 = arith.index_cast %c0_i32_64 : i32 to index
    %c0_78 = arith.constant 0 : index
    %c0_79 = arith.constant 0 : index
    %227 = vector.load %arg16[%226, %c0_78, %c0_79] : memref<2x8x256xf32, #tpu.memory_space<vmem>>, vector<1x8x128xf32>
    %228 = vector.shape_cast %227 : vector<1x8x128xf32> to vector<8x128xf32>
    %229 = vector.shape_cast %200 : vector<8x128xf32> to vector<1x8x128xf32>
    tpu.vector_store %arg16[%226, %c0_78, %c0_79], %229 {strides = array<i32>} : memref<2x8x256xf32, #tpu.memory_space<vmem>>, vector<1x8x128xf32>,
    %230 = arith.index_cast %165 : i32 to index
    %c0_80 = arith.constant 0 : index
    %c128_81 = arith.constant 128 : index
    %231 = vector.load %arg16[%230, %c0_80, %c128_81] : memref<2x8x256xf32, #tpu.memory_space<vmem>>, vector<1x8x128xf32>
    %232 = vector.shape_cast %231 : vector<1x8x128xf32> to vector<8x128xf32>
    %233 = vector.shape_cast %225 : vector<8x128xf32> to vector<1x8x128xf32>
    tpu.vector_store %arg16[%230, %c0_80, %c128_81], %233 {strides = array<i32>} : memref<2x8x256xf32, #tpu.memory_space<vmem>>, vector<1x8x128xf32>,
    %c1_i32_82 = arith.constant 1 : i32
    %c1_i32_83 = arith.constant 1 : i32
    %234 = arith.subi %c1_i32_83, %c1_i32_82 : i32
    %235 = arith.index_cast %c1_i32_82 : i32 to index
    %c0_84 = arith.constant 0 : index
    %c0_85 = arith.constant 0 : index
    %236 = vector.load %arg17[%235, %c0_84, %c0_85] : memref<2x8x1024xf32, #tpu.memory_space<vmem>>, vector<1x8x512xf32>
    %237 = vector.shape_cast %236 : vector<1x8x512xf32> to vector<8x512xf32>
    %cst_86 = arith.constant dense<0.000000e+00> : vector<8x512xf32>
    %238 = tpu.matmul %200, %155, %cst_86 {dimension_numbers = #tpu.dot_dimension_numbers<[1], [0], [0], [1], [0, 0, 1, 1], [], []>} : vector<8x128xf32>, vector<128x512xf32>, vector<8x512xf32> -> vector<8x512xf32>
    %239 = arith.addf %237, %238 : vector<8x512xf32>
    %240 = arith.index_cast %234 : i32 to index
    %c0_87 = arith.constant 0 : index
    %c512_88 = arith.constant 512 : index
    %241 = vector.load %arg17[%240, %c0_87, %c512_88] : memref<2x8x1024xf32, #tpu.memory_space<vmem>>, vector<1x8x512xf32>
    %242 = vector.shape_cast %241 : vector<1x8x512xf32> to vector<8x512xf32>
    %cst_89 = arith.constant dense<0.000000e+00> : vector<8x512xf32>
    %243 = tpu.matmul %225, %156, %cst_89 {dimension_numbers = #tpu.dot_dimension_numbers<[1], [0], [0], [1], [0, 0, 1, 1], [], []>} : vector<8x128xf32>, vector<128x512xf32>, vector<8x512xf32> -> vector<8x512xf32>
    %244 = arith.addf %242, %243 : vector<8x512xf32>
    %245 = vector.extract_strided_slice %239 {offsets = [0, 0], sizes = [8, 128], strides = [1, 1]} : vector<8x512xf32> to vector<8x128xf32>
    %246 = arith.negf %245 : vector<8x128xf32>
    %247 = math.exp %246 : vector<8x128xf32>
    %cst_90 = arith.constant 1.000000e+00 : f32
    %248 = vector.broadcast %cst_90 : f32 to vector<8x128xf32>
    %249 = arith.addf %248, %247 : vector<8x128xf32>
    %250 = arith.divf %248, %249 : vector<8x128xf32>
    %251 = vector.extract_strided_slice %239 {offsets = [0, 128], sizes = [8, 128], strides = [1, 1]} : vector<8x512xf32> to vector<8x128xf32>
    %252 = arith.negf %251 : vector<8x128xf32>
    %253 = math.exp %252 : vector<8x128xf32>
    %cst_91 = arith.constant 1.000000e+00 : f32
    %254 = vector.broadcast %cst_91 : f32 to vector<8x128xf32>
    %255 = arith.addf %254, %253 : vector<8x128xf32>
    %256 = arith.divf %254, %255 : vector<8x128xf32>
    %257 = vector.extract_strided_slice %239 {offsets = [0, 256], sizes = [8, 128], strides = [1, 1]} : vector<8x512xf32> to vector<8x128xf32>
    %258 = math.tanh %257 : vector<8x128xf32>
    %259 = vector.extract_strided_slice %239 {offsets = [0, 384], sizes = [8, 128], strides = [1, 1]} : vector<8x512xf32> to vector<8x128xf32>
    %260 = arith.negf %259 : vector<8x128xf32>
    %261 = math.exp %260 : vector<8x128xf32>
    %cst_92 = arith.constant 1.000000e+00 : f32
    %262 = vector.broadcast %cst_92 : f32 to vector<8x128xf32>
    %263 = arith.addf %262, %261 : vector<8x128xf32>
    %264 = arith.divf %262, %263 : vector<8x128xf32>
    %265 = arith.mulf %256, %198 : vector<8x128xf32>
    %266 = arith.mulf %250, %258 : vector<8x128xf32>
    %267 = arith.addf %265, %266 : vector<8x128xf32>
    %268 = math.tanh %267 : vector<8x128xf32>
    %269 = arith.mulf %264, %268 : vector<8x128xf32>
    %270 = vector.extract_strided_slice %244 {offsets = [0, 0], sizes = [8, 128], strides = [1, 1]} : vector<8x512xf32> to vector<8x128xf32>
    %271 = arith.negf %270 : vector<8x128xf32>
    %272 = math.exp %271 : vector<8x128xf32>
    %cst_93 = arith.constant 1.000000e+00 : f32
    %273 = vector.broadcast %cst_93 : f32 to vector<8x128xf32>
    %274 = arith.addf %273, %272 : vector<8x128xf32>
    %275 = arith.divf %273, %274 : vector<8x128xf32>
    %276 = vector.extract_strided_slice %244 {offsets = [0, 128], sizes = [8, 128], strides = [1, 1]} : vector<8x512xf32> to vector<8x128xf32>
    %277 = arith.negf %276 : vector<8x128xf32>
    %278 = math.exp %277 : vector<8x128xf32>
    %cst_94 = arith.constant 1.000000e+00 : f32
    %279 = vector.broadcast %cst_94 : f32 to vector<8x128xf32>
    %280 = arith.addf %279, %278 : vector<8x128xf32>
    %281 = arith.divf %279, %280 : vector<8x128xf32>
    %282 = vector.extract_strided_slice %244 {offsets = [0, 256], sizes = [8, 128], strides = [1, 1]} : vector<8x512xf32> to vector<8x128xf32>
    %283 = math.tanh %282 : vector<8x128xf32>
    %284 = vector.extract_strided_slice %244 {offsets = [0, 384], sizes = [8, 128], strides = [1, 1]} : vector<8x512xf32> to vector<8x128xf32>
    %285 = arith.negf %284 : vector<8x128xf32>
    %286 = math.exp %285 : vector<8x128xf32>
    %cst_95 = arith.constant 1.000000e+00 : f32
    %287 = vector.broadcast %cst_95 : f32 to vector<8x128xf32>
    %288 = arith.addf %287, %286 : vector<8x128xf32>
    %289 = arith.divf %287, %288 : vector<8x128xf32>
    %290 = arith.mulf %281, %223 : vector<8x128xf32>
    %291 = arith.mulf %275, %283 : vector<8x128xf32>
    %292 = arith.addf %290, %291 : vector<8x128xf32>
    %293 = math.tanh %292 : vector<8x128xf32>
    %294 = arith.mulf %289, %293 : vector<8x128xf32>
    %295 = arith.index_cast %c1_i32_82 : i32 to index
    %c0_96 = arith.constant 0 : index
    %c0_97 = arith.constant 0 : index
    %296 = vector.load %arg16[%295, %c0_96, %c0_97] : memref<2x8x256xf32, #tpu.memory_space<vmem>>, vector<1x8x128xf32>
    %297 = vector.shape_cast %296 : vector<1x8x128xf32> to vector<8x128xf32>
    %298 = vector.shape_cast %269 : vector<8x128xf32> to vector<1x8x128xf32>
    tpu.vector_store %arg16[%295, %c0_96, %c0_97], %298 {strides = array<i32>} : memref<2x8x256xf32, #tpu.memory_space<vmem>>, vector<1x8x128xf32>,
    %299 = arith.index_cast %234 : i32 to index
    %c0_98 = arith.constant 0 : index
    %c128_99 = arith.constant 128 : index
    %300 = vector.load %arg16[%299, %c0_98, %c128_99] : memref<2x8x256xf32, #tpu.memory_space<vmem>>, vector<1x8x128xf32>
    %301 = vector.shape_cast %300 : vector<1x8x128xf32> to vector<8x128xf32>
    %302 = vector.shape_cast %294 : vector<8x128xf32> to vector<1x8x128xf32>
    tpu.vector_store %arg16[%299, %c0_98, %c128_99], %302 {strides = array<i32>} : memref<2x8x256xf32, #tpu.memory_space<vmem>>, vector<1x8x128xf32>,
    %c2_i32_100 = arith.constant 2 : i32
    %c0_101 = arith.constant 0 : index
    %c0_102 = arith.constant 0 : index
    %c0_103 = arith.constant 0 : index
    %303 = vector.load %arg16[%c0_101, %c0_102, %c0_103] : memref<2x8x256xf32, #tpu.memory_space<vmem>>, vector<2x8x256xf32>
    %304 = vector.shape_cast %303 : vector<2x8x256xf32> to vector<16x256xf32>
    %c0_104 = arith.constant 0 : index
    %c0_105 = arith.constant 0 : index
    %305 = vector.load %arg10[%c0_104, %c0_105] : memref<256x128xf32, #tpu.memory_space<vmem>>, vector<256x128xf32>
    %cst_106 = arith.constant dense<0.000000e+00> : vector<16x128xf32>
    %306 = tpu.matmul %304, %305, %cst_106 {dimension_numbers = #tpu.dot_dimension_numbers<[1], [0], [0], [1], [0, 0, 1, 1], [], []>} : vector<16x256xf32>, vector<256x128xf32>, vector<16x128xf32> -> vector<16x128xf32>
    %c0_107 = arith.constant 0 : index
    %c0_108 = arith.constant 0 : index
    %307 = vector.load %arg11[%c0_107, %c0_108] : memref<1x128xf32, #tpu.memory_space<vmem>>, vector<1x128xf32>
    %308 = vector.broadcast %307 : vector<1x128xf32> to vector<16x128xf32>
    %309 = arith.addf %306, %308 : vector<16x128xf32>
    %cst_109 = arith.constant dense<0xFF800000> : vector<16xf32>
    %310 = vector.multi_reduction <maximumf>, %309, %cst_109 [1] : vector<16x128xf32> to vector<16xf32>
    %311 = vector.shape_cast %310 : vector<16xf32> to vector<16x1xf32>
    %312 = vector.broadcast %311 : vector<16x1xf32> to vector<16x128xf32>
    %313 = arith.subf %309, %312 : vector<16x128xf32>
    %314 = math.exp %313 : vector<16x128xf32>
    %cst_110 = arith.constant dense<0.000000e+00> : vector<16xf32>
    %315 = vector.multi_reduction <add>, %314, %cst_110 [1] : vector<16x128xf32> to vector<16xf32>
    %316 = vector.shape_cast %315 : vector<16xf32> to vector<16x1xf32>
    %317 = vector.broadcast %316 : vector<16x1xf32> to vector<16x128xf32>
    %318 = arith.divf %314, %317 : vector<16x128xf32>
    %319 = vector.shape_cast %318 : vector<16x128xf32> to vector<2x8x128xf32>
    %c0_111 = arith.constant 0 : index
    %c0_112 = arith.constant 0 : index
    %c0_113 = arith.constant 0 : index
    %320 = vector.load %arg14[%c0_111, %c0_112, %c0_113] : memref<2x8x128xf32, #tpu.memory_space<vmem>>, vector<2x8x128xf32>
    tpu.vector_store %arg14[%c0_111, %c0_112, %c0_113], %319 {strides = array<i32>} : memref<2x8x128xf32, #tpu.memory_space<vmem>>, vector<2x8x128xf32>,
    %c0_114 = arith.constant 0 : index
    %c0_115 = arith.constant 0 : index
    %321 = vector.load %arg18[%c0_114, %c0_115] : memref<2x256xf32, #tpu.memory_space<vmem>>, vector<2x256xf32>
    %c0_116 = arith.constant 0 : index
    %c0_117 = arith.constant 0 : index
    %c0_118 = arith.constant 0 : index
    %322 = vector.load %arg16[%c0_116, %c0_117, %c0_118] : memref<2x8x256xf32, #tpu.memory_space<vmem>>, vector<2x8x256xf32>
    %cst_119 = arith.constant dense<0.000000e+00> : vector<2x256xf32>
    %323 = vector.multi_reduction <add>, %322, %cst_119 [1] : vector<2x8x256xf32> to vector<2x256xf32>
    %324 = arith.addf %321, %323 : vector<2x256xf32>
    %c0_120 = arith.constant 0 : index
    %c0_121 = arith.constant 0 : index
    %325 = vector.load %arg18[%c0_120, %c0_121] : memref<2x256xf32, #tpu.memory_space<vmem>>, vector<2x256xf32>
    tpu.vector_store %arg18[%c0_120, %c0_121], %324 {strides = array<i32>} : memref<2x256xf32, #tpu.memory_space<vmem>>, vector<2x256xf32>,
    %c1_i32_122 = arith.constant 1 : i32
    %326 = arith.cmpi eq, %arg0, %c1_i32_122 : i32
    %327 = arith.extui %326 : i1 to i32
    %c0_i32_123 = arith.constant 0 : i32
    %328 = arith.cmpi ne, %327, %c0_i32_123 : i32
    scf.if %328 {
      %c0_124 = arith.constant 0 : index
      %c0_125 = arith.constant 0 : index
      %329 = vector.load %arg18[%c0_124, %c0_125] : memref<2x256xf32, #tpu.memory_space<vmem>>, vector<2x256xf32>
      %cst_126 = arith.constant 6.250000e-02 : f32
      %330 = vector.broadcast %cst_126 : f32 to vector<2x256xf32>
      %331 = arith.mulf %329, %330 : vector<2x256xf32>
      %c0_127 = arith.constant 0 : index
      %c0_128 = arith.constant 0 : index
      %332 = vector.load %arg12[%c0_127, %c0_128] : memref<256x128xf32, #tpu.memory_space<vmem>>, vector<256x128xf32>
      %cst_129 = arith.constant dense<0.000000e+00> : vector<2x128xf32>
      %333 = tpu.matmul %331, %332, %cst_129 {dimension_numbers = #tpu.dot_dimension_numbers<[1], [0], [0], [1], [0, 0, 1, 1], [], []>} : vector<2x256xf32>, vector<256x128xf32>, vector<2x128xf32> -> vector<2x128xf32>
      %c0_130 = arith.constant 0 : index
      %c0_131 = arith.constant 0 : index
      %334 = vector.load %arg13[%c0_130, %c0_131] : memref<1x128xf32, #tpu.memory_space<vmem>>, vector<1x128xf32>
      %335 = vector.broadcast %334 : vector<1x128xf32> to vector<2x128xf32>
      %336 = arith.addf %333, %335 : vector<2x128xf32>
      %cst_132 = arith.constant dense<0xFF800000> : vector<2xf32>
      %337 = vector.multi_reduction <maximumf>, %336, %cst_132 [1] : vector<2x128xf32> to vector<2xf32>
      %338 = vector.shape_cast %337 : vector<2xf32> to vector<2x1xf32>
      %339 = vector.broadcast %338 : vector<2x1xf32> to vector<2x128xf32>
      %340 = arith.subf %336, %339 : vector<2x128xf32>
      %341 = math.exp %340 : vector<2x128xf32>
      %cst_133 = arith.constant dense<0.000000e+00> : vector<2xf32>
      %342 = vector.multi_reduction <add>, %341, %cst_133 [1] : vector<2x128xf32> to vector<2xf32>
      %343 = vector.shape_cast %342 : vector<2xf32> to vector<2x1xf32>
      %344 = vector.broadcast %343 : vector<2x1xf32> to vector<2x128xf32>
      %345 = arith.divf %341, %344 : vector<2x128xf32>
      %c0_134 = arith.constant 0 : index
      %c0_135 = arith.constant 0 : index
      %346 = vector.load %arg15[%c0_134, %c0_135] : memref<2x128xf32, #tpu.memory_space<vmem>>, vector<2x128xf32>
      tpu.vector_store %arg15[%c0_134, %c0_135], %345 {strides = array<i32>} : memref<2x128xf32, #tpu.memory_space<vmem>>, vector<2x128xf32>,
    } else {
    }
    return
  }
  func.func @transform_0(%arg0: i32) -> (i32, i32, i32) {
    %c0_i32 = arith.constant 0 : i32
    %c0_i32_0 = arith.constant 0 : i32
    %c0_i32_1 = arith.constant 0 : i32
    return %c0_i32, %arg0, %c0_i32_0 : i32, i32, i32
  }
  func.func @transform_1(%arg0: i32) -> (i32, i32) {
    %c0_i32 = arith.constant 0 : i32
    %c0_i32_0 = arith.constant 0 : i32
    %c0_i32_1 = arith.constant 0 : i32
    return %c0_i32, %c0_i32_0 : i32, i32
  }
  func.func @transform_2(%arg0: i32) -> (i32, i32) {
    %c0_i32 = arith.constant 0 : i32
    %c0_i32_0 = arith.constant 0 : i32
    %c0_i32_1 = arith.constant 0 : i32
    return %c0_i32, %c0_i32_0 : i32, i32
  }
  func.func @transform_3(%arg0: i32) -> (i32, i32) {
    %c0_i32 = arith.constant 0 : i32
    %c0_i32_0 = arith.constant 0 : i32
    %c0_i32_1 = arith.constant 0 : i32
    return %c0_i32, %c0_i32_0 : i32, i32
  }
  func.func @transform_4(%arg0: i32) -> (i32, i32) {
    %c0_i32 = arith.constant 0 : i32
    %c0_i32_0 = arith.constant 0 : i32
    %c0_i32_1 = arith.constant 0 : i32
    return %c0_i32, %c0_i32_0 : i32, i32
  }
  func.func @transform_5(%arg0: i32) -> (i32, i32) {
    %c0_i32 = arith.constant 0 : i32
    %c0_i32_0 = arith.constant 0 : i32
    %c0_i32_1 = arith.constant 0 : i32
    return %c0_i32, %c0_i32_0 : i32, i32
  }
  func.func @transform_6(%arg0: i32) -> (i32, i32) {
    %c0_i32 = arith.constant 0 : i32
    %c0_i32_0 = arith.constant 0 : i32
    %c0_i32_1 = arith.constant 0 : i32
    return %c0_i32, %c0_i32_0 : i32, i32
  }
  func.func @transform_7(%arg0: i32) -> (i32, i32) {
    %c0_i32 = arith.constant 0 : i32
    %c0_i32_0 = arith.constant 0 : i32
    %c0_i32_1 = arith.constant 0 : i32
    return %c0_i32, %c0_i32_0 : i32, i32
  }
  func.func @transform_8(%arg0: i32) -> (i32, i32) {
    %c0_i32 = arith.constant 0 : i32
    %c0_i32_0 = arith.constant 0 : i32
    %c0_i32_1 = arith.constant 0 : i32
    return %c0_i32, %c0_i32_0 : i32, i32
  }
  func.func @transform_9(%arg0: i32) -> (i32, i32) {
    %c0_i32 = arith.constant 0 : i32
    %c0_i32_0 = arith.constant 0 : i32
    %c0_i32_1 = arith.constant 0 : i32
    return %c0_i32, %c0_i32_0 : i32, i32
  }
  func.func @transform_10(%arg0: i32) -> (i32, i32) {
    %c0_i32 = arith.constant 0 : i32
    %c0_i32_0 = arith.constant 0 : i32
    %c0_i32_1 = arith.constant 0 : i32
    return %c0_i32, %c0_i32_0 : i32, i32
  }
  func.func @transform_11(%arg0: i32) -> (i32, i32) {
    %c0_i32 = arith.constant 0 : i32
    %c0_i32_0 = arith.constant 0 : i32
    %c0_i32_1 = arith.constant 0 : i32
    return %c0_i32, %c0_i32_0 : i32, i32
  }
  func.func @transform_12(%arg0: i32) -> (i32, i32) {
    %c0_i32 = arith.constant 0 : i32
    %c0_i32_0 = arith.constant 0 : i32
    %c0_i32_1 = arith.constant 0 : i32
    return %c0_i32, %c0_i32_0 : i32, i32
  }
  func.func @transform_13(%arg0: i32) -> (i32, i32, i32) {
    %c0_i32 = arith.constant 0 : i32
    %c0_i32_0 = arith.constant 0 : i32
    %c0_i32_1 = arith.constant 0 : i32
    return %c0_i32, %arg0, %c0_i32_0 : i32, i32, i32
  }
  func.func @transform_14(%arg0: i32) -> (i32, i32) {
    %c0_i32 = arith.constant 0 : i32
    %c0_i32_0 = arith.constant 0 : i32
    %c0_i32_1 = arith.constant 0 : i32
    return %c0_i32, %c0_i32_0 : i32, i32
  }
}

</mosaic_0001>

<llo_original>
// kernel: _lambda_.1
$region0: #{_lambda_.1}
  #allocation0 [shape = 'u32[]', space=smem, size = 0x4, offset = 0x4, fixed_abs, tag = 'smem constant byte address 0x4 - core index']
  #allocation1 [shape = 'u32[144,128]{1,0:T(1,128)}', space=vmem, size = 0x12000, scoped, tag = 'internal scratch']
  #allocation2 [shape = 'f32[2,8,256]{2,1,0:T(8,128)}', space=vmem, size = 0x4000, scoped, tag = 'scratch operand']
  #allocation3 [shape = 'f32[2,8,1024]{2,1,0:T(8,128)}', space=vmem, size = 0x10000, scoped, tag = 'scratch operand']
  #allocation4 [shape = 'f32[2,256]{1,0:T(2,128)}', space=vmem, size = 0x800, scoped, tag = 'scratch operand']
  %s0 = inlined_call_operand.vmem [shape: f32[2,16,16], index: 0, kind: input, shape index: {}]
  %s1 = inlined_call_operand.hbm [shape: f32[16,1024], index: 1, kind: input, shape index: {}]
  %s2 = inlined_call_operand.vmem [shape: f32[1,1024], index: 2, kind: input, shape index: {}]
  %s3 = inlined_call_operand.hbm [shape: f32[128,512], index: 3, kind: input, shape index: {}]
  %s4 = inlined_call_operand.hbm [shape: f32[128,512], index: 4, kind: input, shape index: {}]
  %s5 = inlined_call_operand.hbm [shape: f32[256,1024], index: 5, kind: input, shape index: {}]
  %s6 = inlined_call_operand.vmem [shape: f32[1,1024], index: 6, kind: input, shape index: {}]
  %s7 = inlined_call_operand.hbm [shape: f32[128,512], index: 7, kind: input, shape index: {}]
  %s8 = inlined_call_operand.hbm [shape: f32[128,512], index: 8, kind: input, shape index: {}]
  %s9 = inlined_call_operand.hbm [shape: f32[256,128], index: 9, kind: input, shape index: {}]
  %s10 = inlined_call_operand.vmem [shape: f32[1,128], index: 10, kind: input, shape index: {}]
  %s11 = inlined_call_operand.vmem [shape: f32[256,128], index: 11, kind: input, shape index: {}]
  %s12 = inlined_call_operand.vmem [shape: f32[1,128], index: 12, kind: input, shape index: {}]
  %s13 = inlined_call_operand.vmem [shape: f32[2,16,128], index: 13, kind: output, shape index: {0}]
  %s14 = inlined_call_operand.hbm [shape: f32[2,128], index: 14, kind: output, shape index: {1}]
  %15 = xla_tuple %s13, %s14
  %s16 = sld [smem:[#allocation0]]
  $region201: #{_lambda_.1} parent=0
    _
  %s18 = ssub.s32 1, %s16
  %s19 = scalar_select 0, %s18, %s16
  $region1: #{_lambda_.1} parent=0
    #allocation5 [shape = 'u8[16384]{0}', space=vmem, size = 0x4000, scoped, tag = 'input window, operand 0']
    #allocation6 [shape = 'u8[65536]{0}', space=vmem, size = 0x10000, scoped, tag = 'input window, operand 1, single buffered']
    #allocation7 [shape = 's32[2]{0}', space=sflag, size = 0x8, scoped, tag = 'scoped memory for _lambda_.1']
    #allocation8 [shape = 's32[2]{0}', space=sflag, size = 0x8, scoped, tag = 'scoped memory for _lambda_.1']
    #allocation9 [shape = 'u8[262144]{0}', space=vmem, size = 0x40000, scoped, tag = 'input window, operand 3, single buffered']
    #allocation10 [shape = 's32[1]{0}', space=sflag, size = 0x4, scoped, tag = 'scoped memory for _lambda_.1']
    #allocation11 [shape = 'u8[262144]{0}', space=vmem, size = 0x40000, scoped, tag = 'input window, operand 4, single buffered']
    #allocation12 [shape = 'u8[1048576]{0}', space=vmem, size = 0x100000, scoped, tag = 'input window, operand 5, single buffered']
    #allocation13 [shape = 's32[1]{0}', space=sflag, size = 0x4, scoped, tag = 'scoped memory for _lambda_.1']
    #allocation14 [shape = 'u8[262144]{0}', space=vmem, size = 0x40000, scoped, tag = 'input window, operand 7, single buffered']
    #allocation15 [shape = 'u8[262144]{0}', space=vmem, size = 0x40000, scoped, tag = 'input window, operand 8, single buffered']
    #allocation16 [shape = 's32[1]{0}', space=sflag, size = 0x4, scoped, tag = 'scoped memory for _lambda_.1']
    #allocation17 [shape = 'u8[131072]{0}', space=vmem, size = 0x20000, scoped, tag = 'input window, operand 9, single buffered']
    #allocation18 [shape = 'u8[16384]{0}', space=vmem, size = 0x4000, scoped, tag = 'output window, operand 0']
    #allocation19 [shape = 'u8[1024]{0}', space=vmem, size = 0x400, scoped, tag = 'output window, operand 1, single buffered']
    %20 = vsyncpa [#allocation7], 0
    %21 = vsyncpa [#allocation10], 0
    %22 = vsyncpa [#allocation13], 0
    %23 = vsyncpa [#allocation16], 0
    %24 = vsyncpa [#allocation8], 0
    loop: start=0, step=1, limit=4
    $region2: #{_lambda_.1} parent=1 // loop_pre_header
      _
    $region3: #{_lambda_.1} parent=1 // loop_header
      %s26 = sphi 0, %s30
      %p27 = scmp.ge.s32.totalorder %s26, 4
      %s36 = sphi 0, %s38
      %s39 = sphi 0, %s36
      %s40 = sphi 0, %s39
      %s56 = sphi 0, %s40
      %s60 = sphi 0, %s60
      %s62 = sphi 0, %s60
      %s63 = sphi 0, %s62
      %s77 = sphi 0, %s63
      %s81 = sphi 0, %s81
      %s83 = sphi 0, %s81
      %s84 = sphi 0, %s83
      %s98 = sphi 0, %s84
      %s102 = sphi 0, %s102
      %s104 = sphi 0, %s102
      %s105 = sphi 0, %s104
      %s119 = sphi 0, %s105
      %s123 = sphi 0, %s123
      %s125 = sphi 0, %s123
      %s126 = sphi 0, %s125
      %s140 = sphi 0, %s126
      %s144 = sphi 0, %s144
      %s146 = sphi 0, %s144
      %s147 = sphi 0, %s146
      %s161 = sphi 0, %s147
      %s165 = sphi 0, %s165
      %s167 = sphi 0, %s165
      %s168 = sphi 0, %s167
      %s182 = sphi 0, %s168
      %s186 = sphi 0, %s186
      %s188 = sphi 0, %s186
      %s189 = sphi 0, %s188
      %s203 = sphi 0, %s189
      %s207 = sphi 0, %s207
      %s209 = sphi 0, %s207
      %s210 = sphi 0, %s209
      %s224 = sphi 0, %s210
      %s228 = sphi 0, %s228
      %s230 = sphi 0, %s228
      %s231 = sphi 0, %s230
      %s245 = sphi 0, %s231
      %s249 = sphi 0, %s249
      %s251 = sphi 0, %s249
      %s252 = sphi 0, %s251
      %s266 = sphi 0, %s252
      %s270 = sphi 0, %s270
      %s272 = sphi 0, %s270
      %s273 = sphi 0, %s272
      %s287 = sphi 0, %s273
      %s291 = sphi 0, %s291
      %s293 = sphi 0, %s291
      %s294 = sphi 0, %s293
      %s308 = sphi 0, %s294
      %s314 = sphi 0, %s316
      %s317 = sphi 0, %s314
      %s318 = sphi 0, %s317
      %s334 = sphi 0, %s318
      %s338 = sphi 0, %s338
      %s340 = sphi 0, %s338
      %s341 = sphi 0, %s340
      %s355 = sphi 0, %s341
    $region4: #{_lambda_.1} parent=1 // loop_header_branch
      %29 = sbr.rel (%p27) target = $region8
    $region5: #{_lambda_.1} parent=1 // loop_body
      %s31 = ssub.s32 %s26, 1
      %s32 = ssub.s32 %s26, 2
      %s33 = sadd.s32 %s26, 1
      %s34 = ssub.s32 %s26, %s33
      %p35 = scmp.eq.s32.totalorder %s34, 0
      %s37 = sadd.s32 %s36, 1
      %s38 = scalar_select %p35, %s36, %s37
      %p41 = pneg %p35
      %p42 = scmp.eq.s32.totalorder %s26, 1
      %p43 = por %p41, %p42
      %p44 = scmp.ne.s32.totalorder %s36, %s39
      %p45 = scmp.eq.s32.totalorder %s26, 0
      %p46 = por %p44, %p45
      %p47 = scmp.ne.s32.totalorder %s36, %s39
      %p48 = scmp.eq.s32.totalorder %s31, 1
      %p49 = por %p47, %p48
      %p50 = scmp.ne.s32.totalorder %s39, %s40
      %p51 = scmp.eq.s32.totalorder %s31, 0
      %p52 = por %p50, %p51
      %p53 = scmp.ne.s32.totalorder %s39, %s40
      %p54 = scmp.eq.s32.totalorder %s32, 1
      %p55 = por %p53, %p54
      %p57 = scmp.ne.s32.totalorder %s40, %s56
      %p58 = scmp.eq.s32.totalorder %s32, 0
      %p59 = por %p57, %p58
      %s61 = sadd.s32 %s60, 1
      %p64 = scmp.eq.s32.totalorder %s26, 1
      %p65 = scmp.ne.s32.totalorder %s60, %s62
      %p66 = scmp.eq.s32.totalorder %s26, 0
      %p67 = por %p65, %p66
      %p68 = scmp.ne.s32.totalorder %s60, %s62
      %p69 = scmp.eq.s32.totalorder %s31, 1
      %p70 = por %p68, %p69
      %p71 = scmp.ne.s32.totalorder %s62, %s63
      %p72 = scmp.eq.s32.totalorder %s31, 0
      %p73 = por %p71, %p72
      %p74 = scmp.ne.s32.totalorder %s62, %s63
      %p75 = scmp.eq.s32.totalorder %s32, 1
      %p76 = por %p74, %p75
      %p78 = scmp.ne.s32.totalorder %s63, %s77
      %p79 = scmp.eq.s32.totalorder %s32, 0
      %p80 = por %p78, %p79
      %s82 = sadd.s32 %s81, 1
      %p85 = scmp.eq.s32.totalorder %s26, 1
      %p86 = scmp.ne.s32.totalorder %s81, %s83
      %p87 = scmp.eq.s32.totalorder %s26, 0
      %p88 = por %p86, %p87
      %p89 = scmp.ne.s32.totalorder %s81, %s83
      %p90 = scmp.eq.s32.totalorder %s31, 1
      %p91 = por %p89, %p90
      %p92 = scmp.ne.s32.totalorder %s83, %s84
      %p93 = scmp.eq.s32.totalorder %s31, 0
      %p94 = por %p92, %p93
      %p95 = scmp.ne.s32.totalorder %s83, %s84
      %p96 = scmp.eq.s32.totalorder %s32, 1
      %p97 = por %p95, %p96
      %p99 = scmp.ne.s32.totalorder %s84, %s98
      %p100 = scmp.eq.s32.totalorder %s32, 0
      %p101 = por %p99, %p100
      %s103 = sadd.s32 %s102, 1
      %p106 = scmp.eq.s32.totalorder %s26, 1
      %p107 = scmp.ne.s32.totalorder %s102, %s104
      %p108 = scmp.eq.s32.totalorder %s26, 0
      %p109 = por %p107, %p108
      %p110 = scmp.ne.s32.totalorder %s102, %s104
      %p111 = scmp.eq.s32.totalorder %s31, 1
      %p112 = por %p110, %p111
      %p113 = scmp.ne.s32.totalorder %s104, %s105
      %p114 = scmp.eq.s32.totalorder %s31, 0
      %p115 = por %p113, %p114
      %p116 = scmp.ne.s32.totalorder %s104, %s105
      %p117 = scmp.eq.s32.totalorder %s32, 1
      %p118 = por %p116, %p117
      %p120 = scmp.ne.s32.totalorder %s105, %s119
      %p121 = scmp.eq.s32.totalorder %s32, 0
      %p122 = por %p120, %p121
      %s124 = sadd.s32 %s123, 1
      %p127 = scmp.eq.s32.totalorder %s26, 1
      %p128 = scmp.ne.s32.totalorder %s123, %s125
      %p129 = scmp.eq.s32.totalorder %s26, 0
      %p130 = por %p128, %p129
      %p131 = scmp.ne.s32.totalorder %s123, %s125
      %p132 = scmp.eq.s32.totalorder %s31, 1
      %p133 = por %p131, %p132
      %p134 = scmp.ne.s32.totalorder %s125, %s126
      %p135 = scmp.eq.s32.totalorder %s31, 0
      %p136 = por %p134, %p135
      %p137 = scmp.ne.s32.totalorder %s125, %s126
      %p138 = scmp.eq.s32.totalorder %s32, 1
      %p139 = por %p137, %p138
      %p141 = scmp.ne.s32.totalorder %s126, %s140
      %p142 = scmp.eq.s32.totalorder %s32, 0
      %p143 = por %p141, %p142
      %s145 = sadd.s32 %s144, 1
      %p148 = scmp.eq.s32.totalorder %s26, 1
      %p149 = scmp.ne.s32.totalorder %s144, %s146
      %p150 = scmp.eq.s32.totalorder %s26, 0
      %p151 = por %p149, %p150
      %p152 = scmp.ne.s32.totalorder %s144, %s146
      %p153 = scmp.eq.s32.totalorder %s31, 1
      %p154 = por %p152, %p153
      %p155 = scmp.ne.s32.totalorder %s146, %s147
      %p156 = scmp.eq.s32.totalorder %s31, 0
      %p157 = por %p155, %p156
      %p158 = scmp.ne.s32.totalorder %s146, %s147
      %p159 = scmp.eq.s32.totalorder %s32, 1
      %p160 = por %p158, %p159
      %p162 = scmp.ne.s32.totalorder %s147, %s161
      %p163 = scmp.eq.s32.totalorder %s32, 0
      %p164 = por %p162, %p163
      %s166 = sadd.s32 %s165, 1
      %p169 = scmp.eq.s32.totalorder %s26, 1
      %p170 = scmp.ne.s32.totalorder %s165, %s167
      %p171 = scmp.eq.s32.totalorder %s26, 0
      %p172 = por %p170, %p171
      %p173 = scmp.ne.s32.totalorder %s165, %s167
      %p174 = scmp.eq.s32.totalorder %s31, 1
      %p175 = por %p173, %p174
      %p176 = scmp.ne.s32.totalorder %s167, %s168
      %p177 = scmp.eq.s32.totalorder %s31, 0
      %p178 = por %p176, %p177
      %p179 = scmp.ne.s32.totalorder %s167, %s168
      %p180 = scmp.eq.s32.totalorder %s32, 1
      %p181 = por %p179, %p180
      %p183 = scmp.ne.s32.totalorder %s168, %s182
      %p184 = scmp.eq.s32.totalorder %s32, 0
      %p185 = por %p183, %p184
      %s187 = sadd.s32 %s186, 1
      %p190 = scmp.eq.s32.totalorder %s26, 1
      %p191 = scmp.ne.s32.totalorder %s186, %s188
      %p192 = scmp.eq.s32.totalorder %s26, 0
      %p193 = por %p191, %p192
      %p194 = scmp.ne.s32.totalorder %s186, %s188
      %p195 = scmp.eq.s32.totalorder %s31, 1
      %p196 = por %p194, %p195
      %p197 = scmp.ne.s32.totalorder %s188, %s189
      %p198 = scmp.eq.s32.totalorder %s31, 0
      %p199 = por %p197, %p198
      %p200 = scmp.ne.s32.totalorder %s188, %s189
      %p201 = scmp.eq.s32.totalorder %s32, 1
      %p202 = por %p200, %p201
      %p204 = scmp.ne.s32.totalorder %s189, %s203
      %p205 = scmp.eq.s32.totalorder %s32, 0
      %p206 = por %p204, %p205
      %s208 = sadd.s32 %s207, 1
      %p211 = scmp.eq.s32.totalorder %s26, 1
      %p212 = scmp.ne.s32.totalorder %s207, %s209
      %p213 = scmp.eq.s32.totalorder %s26, 0
      %p214 = por %p212, %p213
      %p215 = scmp.ne.s32.totalorder %s207, %s209
      %p216 = scmp.eq.s32.totalorder %s31, 1
      %p217 = por %p215, %p216
      %p218 = scmp.ne.s32.totalorder %s209, %s210
      %p219 = scmp.eq.s32.totalorder %s31, 0
      %p220 = por %p218, %p219
      %p221 = scmp.ne.s32.totalorder %s209, %s210
      %p222 = scmp.eq.s32.totalorder %s32, 1
      %p223 = por %p221, %p222
      %p225 = scmp.ne.s32.totalorder %s210, %s224
      %p226 = scmp.eq.s32.totalorder %s32, 0
      %p227 = por %p225, %p226
      %s229 = sadd.s32 %s228, 1
      %p232 = scmp.eq.s32.totalorder %s26, 1
      %p233 = scmp.ne.s32.totalorder %s228, %s230
      %p234 = scmp.eq.s32.totalorder %s26, 0
      %p235 = por %p233, %p234
      %p236 = scmp.ne.s32.totalorder %s228, %s230
      %p237 = scmp.eq.s32.totalorder %s31, 1
      %p238 = por %p236, %p237
      %p239 = scmp.ne.s32.totalorder %s230, %s231
      %p240 = scmp.eq.s32.totalorder %s31, 0
      %p241 = por %p239, %p240
      %p242 = scmp.ne.s32.totalorder %s230, %s231
      %p243 = scmp.eq.s32.totalorder %s32, 1
      %p244 = por %p242, %p243
      %p246 = scmp.ne.s32.totalorder %s231, %s245
      %p247 = scmp.eq.s32.totalorder %s32, 0
      %p248 = por %p246, %p247
      %s250 = sadd.s32 %s249, 1
      %p253 = scmp.eq.s32.totalorder %s26, 1
      %p254 = scmp.ne.s32.totalorder %s249, %s251
      %p255 = scmp.eq.s32.totalorder %s26, 0
      %p256 = por %p254, %p255
      %p257 = scmp.ne.s32.totalorder %s249, %s251
      %p258 = scmp.eq.s32.totalorder %s31, 1
      %p259 = por %p257, %p258
      %p260 = scmp.ne.s32.totalorder %s251, %s252
      %p261 = scmp.eq.s32.totalorder %s31, 0
      %p262 = por %p260, %p261
      %p263 = scmp.ne.s32.totalorder %s251, %s252
      %p264 = scmp.eq.s32.totalorder %s32, 1
      %p265 = por %p263, %p264
      %p267 = scmp.ne.s32.totalorder %s252, %s266
      %p268 = scmp.eq.s32.totalorder %s32, 0
      %p269 = por %p267, %p268
      %s271 = sadd.s32 %s270, 1
      %p274 = scmp.eq.s32.totalorder %s26, 1
      %p275 = scmp.ne.s32.totalorder %s270, %s272
      %p276 = scmp.eq.s32.totalorder %s26, 0
      %p277 = por %p275, %p276
      %p278 = scmp.ne.s32.totalorder %s270, %s272
      %p279 = scmp.eq.s32.totalorder %s31, 1
      %p280 = por %p278, %p279
      %p281 = scmp.ne.s32.totalorder %s272, %s273
      %p282 = scmp.eq.s32.totalorder %s31, 0
      %p283 = por %p281, %p282
      %p284 = scmp.ne.s32.totalorder %s272, %s273
      %p285 = scmp.eq.s32.totalorder %s32, 1
      %p286 = por %p284, %p285
      %p288 = scmp.ne.s32.totalorder %s273, %s287
      %p289 = scmp.eq.s32.totalorder %s32, 0
      %p290 = por %p288, %p289
      %s292 = sadd.s32 %s291, 1
      %p295 = scmp.eq.s32.totalorder %s26, 1
      %p296 = scmp.ne.s32.totalorder %s291, %s293
      %p297 = scmp.eq.s32.totalorder %s26, 0
      %p298 = por %p296, %p297
      %p299 = scmp.ne.s32.totalorder %s291, %s293
      %p300 = scmp.eq.s32.totalorder %s31, 1
      %p301 = por %p299, %p300
      %p302 = scmp.ne.s32.totalorder %s293, %s294
      %p303 = scmp.eq.s32.totalorder %s31, 0
      %p304 = por %p302, %p303
      %p305 = scmp.ne.s32.totalorder %s293, %s294
      %p306 = scmp.eq.s32.totalorder %s32, 1
      %p307 = por %p305, %p306
      %p309 = scmp.ne.s32.totalorder %s294, %s308
      %p310 = scmp.eq.s32.totalorder %s32, 0
      %p311 = por %p309, %p310
      %s312 = ssub.s32 %s26, %s33
      %p313 = scmp.eq.s32.totalorder %s312, 0
      %s315 = sadd.s32 %s314, 1
      %s316 = scalar_select %p313, %s314, %s315
      %p319 = pneg %p313
      %p320 = scmp.eq.s32.totalorder %s26, 1
      %p321 = por %p319, %p320
      %p322 = scmp.ne.s32.totalorder %s314, %s317
      %p323 = scmp.eq.s32.totalorder %s26, 0
      %p324 = por %p322, %p323
      %p325 = scmp.ne.s32.totalorder %s314, %s317
      %p326 = scmp.eq.s32.totalorder %s31, 1
      %p327 = por %p325, %p326
      %p328 = scmp.ne.s32.totalorder %s317, %s318
      %p329 = scmp.eq.s32.totalorder %s31, 0
      %p330 = por %p328, %p329
      %p331 = scmp.ne.s32.totalorder %s317, %s318
      %p332 = scmp.eq.s32.totalorder %s32, 1
      %p333 = por %p331, %p332
      %p335 = scmp.ne.s32.totalorder %s318, %s334
      %p336 = scmp.eq.s32.totalorder %s32, 0
      %p337 = por %p335, %p336
      %s339 = sadd.s32 %s338, 1
      %p342 = scmp.eq.s32.totalorder %s26, 1
      %p343 = scmp.ne.s32.totalorder %s338, %s340
      %p344 = scmp.eq.s32.totalorder %s26, 0
      %p345 = por %p343, %p344
      %p346 = scmp.ne.s32.totalorder %s338, %s340
      %p347 = scmp.eq.s32.totalorder %s31, 1
      %p348 = por %p346, %p347
      %p349 = scmp.ne.s32.totalorder %s340, %s341
      %p350 = scmp.eq.s32.totalorder %s31, 0
      %p351 = por %p349, %p350
      %p352 = scmp.ne.s32.totalorder %s340, %s341
      %p353 = scmp.eq.s32.totalorder %s32, 1
      %p354 = por %p352, %p353
      %p356 = scmp.ne.s32.totalorder %s341, %s355
      %p357 = scmp.eq.s32.totalorder %s32, 0
      %p358 = por %p356, %p357
      %p359 = scmp.le.s32.totalorder 1, %s26
      %p360 = scmp.lt.s32.totalorder %s26, 3
      %p361 = pnand %p359, %p360
      %p362 = pneg %p361
      // Predicated region
      $region9: #{_lambda_.1} parent=5 // pred_check
        _
      $region10: #{_lambda_.1} parent=5 // pred_check_branch
        %364 = sbr.rel (%p361) target = $region12
      $region11: #{_lambda_.1} parent=5 // pred_region
        %s365 = ssub.s32 %s26, 1
        // Predicated region
        $region13: #{_lambda_.1} parent=11 // pred_check
          %p366 = pneg %p73
        $region14: #{_lambda_.1} parent=11 // pred_check_branch
          %368 = sbr.rel (%p366) target = $region16
        $region15: #{_lambda_.1} parent=11 // pred_region
          %s370 = ssub.s32 2048, 2048
          %371 = vsyncadd [#allocation7], %s370
          %s372 = sshll.u32 [#allocation6], 4
          %s373 = int_to_ptr.vmem [resolvable:$true] %s372
          %378 = dma.hbm_to_vmem [thread:$0]  %s1, 2048, %s373, [#allocation7], 1024, 1024, 64
        $region16: #{_lambda_.1} parent=11 // pred_fallthru
          _
        // Predicated region
        $region17: #{_lambda_.1} parent=11 // pred_check
          %p379 = pneg %p94
        $region18: #{_lambda_.1} parent=11 // pred_check_branch
          %381 = sbr.rel (%p379) target = $region20
        $region19: #{_lambda_.1} parent=11 // pred_region
          _
        $region20: #{_lambda_.1} parent=11 // pred_fallthru
          _
        // Predicated region
        $region21: #{_lambda_.1} parent=11 // pred_check
          %p382 = pneg %p115
        $region22: #{_lambda_.1} parent=11 // pred_check_branch
          %384 = sbr.rel (%p382) target = $region24
        $region23: #{_lambda_.1} parent=11 // pred_region
          %s386 = ssub.s32 8192, 8192
          %387 = vsyncadd [#allocation10], %s386
          %s388 = sshll.u32 [#allocation9], 4
          %s389 = int_to_ptr.vmem [resolvable:$true] %s388
          %394 = dma.hbm_to_vmem [thread:$0]  %s3, 8192, %s389, [#allocation10], 512, 512, 32
        $region24: #{_lambda_.1} parent=11 // pred_fallthru
          _
        // Predicated region
        $region25: #{_lambda_.1} parent=11 // pred_check
          %p395 = pneg %p136
        $region26: #{_lambda_.1} parent=11 // pred_check_branch
          %397 = sbr.rel (%p395) target = $region28
        $region27: #{_lambda_.1} parent=11 // pred_region
          %s399 = ssub.s32 8192, 8192
          %400 = vsyncadd [#allocation10], %s399
          %s401 = sshll.u32 [#allocation11], 4
          %s402 = int_to_ptr.vmem [resolvable:$true] %s401
          %407 = dma.hbm_to_vmem [thread:$0]  %s4, 8192, %s402, [#allocation10], 512, 512, 32
        $region28: #{_lambda_.1} parent=11 // pred_fallthru
          _
        // Predicated region
        $region29: #{_lambda_.1} parent=11 // pred_check
          %p408 = pneg %p157
        $region30: #{_lambda_.1} parent=11 // pred_check_branch
          %410 = sbr.rel (%p408) target = $region32
        $region31: #{_lambda_.1} parent=11 // pred_region
          %s412 = ssub.s32 32768, 32768
          %413 = vsyncadd [#allocation13], %s412
          %s414 = sshll.u32 [#allocation12], 4
          %s415 = int_to_ptr.vmem [resolvable:$true] %s414
          %420 = dma.hbm_to_vmem [thread:$0]  %s5, 32768, %s415, [#allocation13], 1024, 1024, 64
        $region32: #{_lambda_.1} parent=11 // pred_fallthru
          _
        // Predicated region
        $region33: #{_lambda_.1} parent=11 // pred_check
          %p421 = pneg %p178
        $region34: #{_lambda_.1} parent=11 // pred_check_branch
          %423 = sbr.rel (%p421) target = $region36
        $region35: #{_lambda_.1} parent=11 // pred_region
          _
        $region36: #{_lambda_.1} parent=11 // pred_fallthru
          _
        // Predicated region
        $region37: #{_lambda_.1} parent=11 // pred_check
          %p424 = pneg %p199
        $region38: #{_lambda_.1} parent=11 // pred_check_branch
          %426 = sbr.rel (%p424) target = $region40
        $region39: #{_lambda_.1} parent=11 // pred_region
          %s428 = ssub.s32 8192, 8192
          %429 = vsyncadd [#allocation13], %s428
          %s430 = sshll.u32 [#allocation14], 4
          %s431 = int_to_ptr.vmem [resolvable:$true] %s430
          %436 = dma.hbm_to_vmem [thread:$0]  %s7, 8192, %s431, [#allocation13], 512, 512, 32
        $region40: #{_lambda_.1} parent=11 // pred_fallthru
          _
        // Predicated region
        $region41: #{_lambda_.1} parent=11 // pred_check
          %p437 = pneg %p220
        $region42: #{_lambda_.1} parent=11 // pred_check_branch
          %439 = sbr.rel (%p437) target = $region44
        $region43: #{_lambda_.1} parent=11 // pred_region
          %s441 = ssub.s32 8192, 8192
          %442 = vsyncadd [#allocation16], %s441
          %s443 = sshll.u32 [#allocation15], 4
          %s444 = int_to_ptr.vmem [resolvable:$true] %s443
          %449 = dma.hbm_to_vmem [thread:$0]  %s8, 8192, %s444, [#allocation16], 512, 512, 32
        $region44: #{_lambda_.1} parent=11 // pred_fallthru
          _
        // Predicated region
        $region45: #{_lambda_.1} parent=11 // pred_check
          %p450 = pneg %p241
        $region46: #{_lambda_.1} parent=11 // pred_check_branch
          %452 = sbr.rel (%p450) target = $region48
        $region47: #{_lambda_.1} parent=11 // pred_region
          %s454 = ssub.s32 4096, 4096
          %455 = vsyncadd [#allocation16], %s454
          %s456 = sshll.u32 [#allocation17], 4
          %s457 = int_to_ptr.vmem [resolvable:$true] %s456
          %462 = dma.hbm_to_vmem [thread:$0]  %s9, 4096, %s457, [#allocation16], 128, 128, 8
        $region48: #{_lambda_.1} parent=11 // pred_fallthru
          _
        // Predicated region
        $region49: #{_lambda_.1} parent=11 // pred_check
          %p463 = pneg %p262
        $region50: #{_lambda_.1} parent=11 // pred_check_branch
          %465 = sbr.rel (%p463) target = $region52
        $region51: #{_lambda_.1} parent=11 // pred_region
          _
        $region52: #{_lambda_.1} parent=11 // pred_fallthru
          _
        // Predicated region
        $region53: #{_lambda_.1} parent=11 // pred_check
          %p466 = pneg %p283
        $region54: #{_lambda_.1} parent=11 // pred_check_branch
          %468 = sbr.rel (%p466) target = $region56
        $region55: #{_lambda_.1} parent=11 // pred_region
          _
        $region56: #{_lambda_.1} parent=11 // pred_fallthru
          _
        // Predicated region
        $region57: #{_lambda_.1} parent=11 // pred_check
          %p469 = pneg %p304
        $region58: #{_lambda_.1} parent=11 // pred_check_branch
          %471 = sbr.rel (%p469) target = $region60
        $region59: #{_lambda_.1} parent=11 // pred_region
          _
        $region60: #{_lambda_.1} parent=11 // pred_fallthru
          _
      $region12: #{_lambda_.1} parent=5 // pred_fallthru
        _
      %p472 = scmp.lt.s32.totalorder %s26, 2
      // Predicated region
      $region61: #{_lambda_.1} parent=5 // pred_check
        %p473 = pneg %p472
      $region62: #{_lambda_.1} parent=5 // pred_check_branch
        %475 = sbr.rel (%p473) target = $region64
      $region63: #{_lambda_.1} parent=5 // pred_region
        // Predicated region
        $region65: #{_lambda_.1} parent=63 // pred_check
          %p476 = pneg %p46
        $region66: #{_lambda_.1} parent=63 // pred_check_branch
          %478 = sbr.rel (%p476) target = $region68
        $region67: #{_lambda_.1} parent=63 // pred_region
          %s479 = sand.u32 %s36, 1
          %s480 = sand.u32 %s36, 1
          %s481 = smul.addr %s480, 16
          %s482 = scalar_lea.vmem [#allocation5], %s481
          %s483 = smul.addr %s26, 8
          %s484 = scalar_lea.vmem %s0, %s483
          // Predicated region
          $region69: #{_lambda_.1} parent=67 // pred_check
            _
          $region70: #{_lambda_.1} parent=67 // pred_check_branch
            %486 = sbr.rel (0) target = $region72
          $region71: #{_lambda_.1} parent=67 // pred_region
            // Predicated region
            $region73: #{_lambda_.1} parent=71 // pred_check
              _
            $region74: #{_lambda_.1} parent=71 // pred_check_branch
              %488 = sbr.rel (0) target = $region76
            $region75: #{_lambda_.1} parent=71 // pred_region
              // Predicated region
              $region88: #{_lambda_.1} parent=75 // pred_check
                _
              $region89: #{_lambda_.1} parent=75 // pred_check_branch
                %506 = sbr.rel (0) target = $region91
              $region90: #{_lambda_.1} parent=75 // pred_region
                loop: start=0, step=1, limit=1
                $region92: #{_lambda_.1} parent=90 // loop_pre_header
                  _
                $region93: #{_lambda_.1} parent=90 // loop_header
                  %s508 = sphi 0, %s512
                  %p509 = scmp.ge.s32.totalorder %s508, 1
                  %s513 = sphi %s484, %s484
                  %s514 = sphi %s482, %s482
                $region94: #{_lambda_.1} parent=90 // loop_header_branch
                  %511 = sbr.rel (%p509) target = $region98
                $region95: #{_lambda_.1} parent=90 // loop_body
                  %v515 = vld [vmem:[%s513] sm:$0xff]
                  %516 = vst [vmem:[%s514] sm:$0xff] %v515
                  %v517 = vld [vmem:[%s513 + $0x10] sm:$0xff]
                  %518 = vst [vmem:[%s514 + $0x8] sm:$0xff] %v517
                $region96: #{_lambda_.1} parent=90 // loop_footer
                  %s512 = sadd.s32 1, %s508
                $region97: #{_lambda_.1} parent=90 // loop_footer_branch
                  %507 = sbr.rel target = $region93
                $region98: #{_lambda_.1} parent=90 // loop_exit
                  _
              $region91: #{_lambda_.1} parent=75 // pred_fallthru
                _
              // Predicated region
              $region99: #{_lambda_.1} parent=75 // pred_check
                _
              $region100: #{_lambda_.1} parent=75 // pred_check_branch
                %520 = sbr.rel target = $region102
              $region101: #{_lambda_.1} parent=75 // pred_region
                _
              $region102: #{_lambda_.1} parent=75 // pred_fallthru
                _
            $region76: #{_lambda_.1} parent=71 // pred_fallthru
              _
            // Predicated region
            $region77: #{_lambda_.1} parent=71 // pred_check
              _
            $region78: #{_lambda_.1} parent=71 // pred_check_branch
              %490 = sbr.rel target = $region80
            $region79: #{_lambda_.1} parent=71 // pred_region
              %s492 = ssub.s32 256, 1
              loop: start=0, step=1, limit=1
              $region81: #{_lambda_.1} parent=79 // loop_pre_header
                _
              $region82: #{_lambda_.1} parent=79 // loop_header
                %s494 = sphi 0, %s498
                %p495 = scmp.ge.s32.totalorder %s494, 1
                %s499 = sphi %s484, %s484
                %s500 = sphi %s482, %s482
              $region83: #{_lambda_.1} parent=79 // loop_header_branch
                %497 = sbr.rel (%p495) target = $region87
              $region84: #{_lambda_.1} parent=79 // loop_body
                %v501 = vld [vmem:[%s499] sm:%s492]
                %502 = vst [vmem:[%s500] sm:%s492] %v501
                %v503 = vld [vmem:[%s499 + $0x10] sm:%s492]
                %504 = vst [vmem:[%s500 + $0x8] sm:%s492] %v503
              $region85: #{_lambda_.1} parent=79 // loop_footer
                %s498 = sadd.s32 1, %s494
              $region86: #{_lambda_.1} parent=79 // loop_footer_branch
                %493 = sbr.rel target = $region82
              $region87: #{_lambda_.1} parent=79 // loop_exit
                _
            $region80: #{_lambda_.1} parent=71 // pred_fallthru
              _
          $region72: #{_lambda_.1} parent=67 // pred_fallthru
            _
          %521 = vnop
        $region68: #{_lambda_.1} parent=63 // pred_fallthru
          _
      $region64: #{_lambda_.1} parent=5 // pred_fallthru
        _
      %p522 = scmp.le.s32.totalorder 1, %s26
      %p523 = scmp.lt.s32.totalorder %s26, 3
      %p524 = pnand %p522, %p523
      %p525 = pneg %p524
      // Predicated region
      $region103: #{_lambda_.1} parent=5 // pred_check
        _
      $region104: #{_lambda_.1} parent=5 // pred_check_branch
        %527 = sbr.rel (%p524) target = $region106
      $region105: #{_lambda_.1} parent=5 // pred_region
        %s528 = ssub.s32 %s26, 1
        %s529 = sand.u32 %s39, 1
        %s530 = sand.u32 %s39, 1
        %s531 = smul.addr %s530, 16
        %s532 = scalar_lea.vmem [#allocation5], %s531
        // Predicated region
        $region107: #{_lambda_.1} parent=105 // pred_check
          %p533 = pneg %p52
        $region108: #{_lambda_.1} parent=105 // pred_check_branch
          %535 = sbr.rel (%p533) target = $region110
        $region109: #{_lambda_.1} parent=105 // pred_region
          _
        $region110: #{_lambda_.1} parent=105 // pred_fallthru
          _
        // Predicated region
        $region111: #{_lambda_.1} parent=105 // pred_check
          %p536 = pneg %p73
        $region112: #{_lambda_.1} parent=105 // pred_check_branch
          %538 = sbr.rel (%p536) target = $region114
        $region113: #{_lambda_.1} parent=105 // pred_region
          %539 = dma.done [#allocation7], 2048
        $region114: #{_lambda_.1} parent=105 // pred_fallthru
          _
        // Predicated region
        $region115: #{_lambda_.1} parent=105 // pred_check
          %p540 = pneg %p115
        $region116: #{_lambda_.1} parent=105 // pred_check_branch
          %542 = sbr.rel (%p540) target = $region118
        $region117: #{_lambda_.1} parent=105 // pred_region
          %543 = dma.done [#allocation10], 8192
        $region118: #{_lambda_.1} parent=105 // pred_fallthru
          _
        // Predicated region
        $region119: #{_lambda_.1} parent=105 // pred_check
          %p544 = pneg %p136
        $region120: #{_lambda_.1} parent=105 // pred_check_branch
          %546 = sbr.rel (%p544) target = $region122
        $region121: #{_lambda_.1} parent=105 // pred_region
          %547 = dma.done [#allocation10], 8192
        $region122: #{_lambda_.1} parent=105 // pred_fallthru
          _
        // Predicated region
        $region123: #{_lambda_.1} parent=105 // pred_check
          %p548 = pneg %p157
        $region124: #{_lambda_.1} parent=105 // pred_check_branch
          %550 = sbr.rel (%p548) target = $region126
        $region125: #{_lambda_.1} parent=105 // pred_region
          %551 = dma.done [#allocation13], 32768
        $region126: #{_lambda_.1} parent=105 // pred_fallthru
          _
        // Predicated region
        $region127: #{_lambda_.1} parent=105 // pred_check
          %p552 = pneg %p199
        $region128: #{_lambda_.1} parent=105 // pred_check_branch
          %554 = sbr.rel (%p552) target = $region130
        $region129: #{_lambda_.1} parent=105 // pred_region
          %555 = dma.done [#allocation13], 8192
        $region130: #{_lambda_.1} parent=105 // pred_fallthru
          _
        // Predicated region
        $region131: #{_lambda_.1} parent=105 // pred_check
          %p556 = pneg %p220
        $region132: #{_lambda_.1} parent=105 // pred_check_branch
          %558 = sbr.rel (%p556) target = $region134
        $region133: #{_lambda_.1} parent=105 // pred_region
          %559 = dma.done [#allocation16], 8192
        $region134: #{_lambda_.1} parent=105 // pred_fallthru
          _
        // Predicated region
        $region135: #{_lambda_.1} parent=105 // pred_check
          %p560 = pneg %p241
        $region136: #{_lambda_.1} parent=105 // pred_check_branch
          %562 = sbr.rel (%p560) target = $region138
        $region137: #{_lambda_.1} parent=105 // pred_region
          %563 = dma.done [#allocation16], 4096
        $region138: #{_lambda_.1} parent=105 // pred_fallthru
          _
        %s564 = sand.u32 %s39, 1
        %s565 = sand.u32 %s39, 1
        %s566 = smul.addr %s565, 16
        %s567 = scalar_lea.vmem [#allocation5], %s566
        %p568 = pneg %p52
        %p569 = pneg %p49
        %p570 = pneg %p73
        %p571 = pneg %p70
        %p572 = pneg %p94
        %p573 = pneg %p91
        %p574 = pneg %p115
        %p575 = pneg %p112
        %p576 = pneg %p136
        %p577 = pneg %p133
        %p578 = pneg %p157
        %p579 = pneg %p154
        %p580 = pneg %p178
        %p581 = pneg %p175
        %p582 = pneg %p199
        %p583 = pneg %p196
        %p584 = pneg %p220
        %p585 = pneg %p217
        %p586 = pneg %p241
        %p587 = pneg %p238
        %p588 = pneg %p262
        %p589 = pneg %p259
        %p590 = pneg %p283
        %p591 = pneg %p280
        %p592 = pneg %p304
        %p593 = pneg %p301
        %p594 = pneg %p330
        %p595 = pneg %p327
        %s596 = sand.u32 %s317, 1
        %s597 = sand.u32 %s317, 1
        %s598 = smul.addr %s597, 16
        %s599 = scalar_lea.vmem [#allocation18], %s598
        %p600 = pneg %p351
        %p601 = pneg %p348
        %p602 = scmp.eq.s32.totalorder %s31, 0
        // Predicated region
        $region139: #{_lambda_.1} parent=105 // pred_check
          %p603 = pneg %p602
        $region140: #{_lambda_.1} parent=105 // pred_check_branch
          %605 = sbr.rel (%p603) target = $region142
        $region141: #{_lambda_.1} parent=105 // pred_region
          %606 = vst [vmem:[#allocation4] sm:$0xf] 0.0
        $region142: #{_lambda_.1} parent=105 // pred_fallthru
          _
        %v607 = vld [vmem:[#allocation6] sm:$0xff]
        %v608 = vld [vmem:[#allocation6 + $0x8] sm:$0xff]
        %v609 = vld [vmem:[#allocation6 + $0x10] sm:$0xff]
        %v610 = vld [vmem:[#allocation6 + $0x18] sm:$0xff]
        %v611 = vld [vmem:[#allocation6 + $0x20] sm:$0xff]
        %v612 = vld [vmem:[#allocation6 + $0x28] sm:$0xff]
        %v613 = vld [vmem:[#allocation6 + $0x30] sm:$0xff]
        %v614 = vld [vmem:[#allocation6 + $0x38] sm:$0xff]
        %v615 = vld [vmem:[#allocation6 + $0x40] sm:$0xff]
        %v616 = vld [vmem:[#allocation6 + $0x48] sm:$0xff]
        %v617 = vld [vmem:[#allocation6 + $0x50] sm:$0xff]
        %v618 = vld [vmem:[#allocation6 + $0x58] sm:$0xff]
        %v619 = vld [vmem:[#allocation6 + $0x60] sm:$0xff]
        %v620 = vld [vmem:[#allocation6 + $0x68] sm:$0xff]
        %v621 = vld [vmem:[#allocation6 + $0x70] sm:$0xff]
        %v622 = vld [vmem:[#allocation6 + $0x78] sm:$0xff]
        %v623 = vld [vmem:[%s2] sm:$0xff]
        %v624 = vld [vmem:[#allocation9] sm:$0xff]
        %v625 = vld [vmem:[#allocation9 + $0x8] sm:$0xff]
        %v626 = vld [vmem:[#allocation9 + $0x10] sm:$0xff]
        %v627 = vld [vmem:[#allocation9 + $0x18] sm:$0xff]
        %v628 = vld [vmem:[#allocation9 + $0x20] sm:$0xff]
        %v629 = vld [vmem:[#allocation9 + $0x28] sm:$0xff]
        %v630 = vld [vmem:[#allocation9 + $0x30] sm:$0xff]
        %v631 = vld [vmem:[#allocation9 + $0x38] sm:$0xff]
        %v632 = vld [vmem:[#allocation9 + $0x40] sm:$0xff]
        %v633 = vld [vmem:[#allocation9 + $0x48] sm:$0xff]
        %v634 = vld [vmem:[#allocation9 + $0x50] sm:$0xff]
        %v635 = vld [vmem:[#allocation9 + $0x58] sm:$0xff]
        %v636 = vld [vmem:[#allocation9 + $0x60] sm:$0xff]
        %v637 = vld [vmem:[#allocation9 + $0x68] sm:$0xff]
        %v638 = vld [vmem:[#allocation9 + $0x70] sm:$0xff]
        %v639 = vld [vmem:[#allocation9 + $0x78] sm:$0xff]
        %v640 = vld [vmem:[#allocation9 + $0x80] sm:$0xff]
        %v641 = vld [vmem:[#allocation9 + $0x88] sm:$0xff]
        %v642 = vld [vmem:[#allocation9 + $0x90] sm:$0xff]
        %v643 = vld [vmem:[#allocation9 + $0x98] sm:$0xff]
        %v644 = vld [vmem:[#allocation9 + $0xa0] sm:$0xff]
        %v645 = vld [vmem:[#allocation9 + $0xa8] sm:$0xff]
        %v646 = vld [vmem:[#allocation9 + $0xb0] sm:$0xff]
        %v647 = vld [vmem:[#allocation9 + $0xb8] sm:$0xff]
        %v648 = vld [vmem:[#allocation9 + $0xc0] sm:$0xff]
        %v649 = vld [vmem:[#allocation9 + $0xc8] sm:$0xff]
        %v650 = vld [vmem:[#allocation9 + $0xd0] sm:$0xff]
        %v651 = vld [vmem:[#allocation9 + $0xd8] sm:$0xff]
        %v652 = vld [vmem:[#allocation9 + $0xe0] sm:$0xff]
        %v653 = vld [vmem:[#allocation9 + $0xe8] sm:$0xff]
        %v654 = vld [vmem:[#allocation9 + $0xf0] sm:$0xff]
        %v655 = vld [vmem:[#allocation9 + $0xf8] sm:$0xff]
        %v656 = vld [vmem:[#allocation9 + $0x100] sm:$0xff]
        %v657 = vld [vmem:[#allocation9 + $0x108] sm:$0xff]
        %v658 = vld [vmem:[#allocation9 + $0x110] sm:$0xff]
        %v659 = vld [vmem:[#allocation9 + $0x118] sm:$0xff]
        %v660 = vld [vmem:[#allocation9 + $0x120] sm:$0xff]
        %v661 = vld [vmem:[#allocation9 + $0x128] sm:$0xff]
        %v662 = vld [vmem:[#allocation9 + $0x130] sm:$0xff]
        %v663 = vld [vmem:[#allocation9 + $0x138] sm:$0xff]
        %v664 = vld [vmem:[#allocation9 + $0x140] sm:$0xff]
        %v665 = vld [vmem:[#allocation9 + $0x148] sm:$0xff]
        %v666 = vld [vmem:[#allocation9 + $0x150] sm:$0xff]
        %v667 = vld [vmem:[#allocation9 + $0x158] sm:$0xff]
        %v668 = vld [vmem:[#allocation9 + $0x160] sm:$0xff]
        %v669 = vld [vmem:[#allocation9 + $0x168] sm:$0xff]
        %v670 = vld [vmem:[#allocation9 + $0x170] sm:$0xff]
        %v671 = vld [vmem:[#allocation9 + $0x178] sm:$0xff]
        %v672 = vld [vmem:[#allocation9 + $0x180] sm:$0xff]
        %v673 = vld [vmem:[#allocation9 + $0x188] sm:$0xff]
        %v674 = vld [vmem:[#allocation9 + $0x190] sm:$0xff]
        %v675 = vld [vmem:[#allocation9 + $0x198] sm:$0xff]
        %v676 = vld [vmem:[#allocation9 + $0x1a0] sm:$0xff]
        %v677 = vld [vmem:[#allocation9 + $0x1a8] sm:$0xff]
        %v678 = vld [vmem:[#allocation9 + $0x1b0] sm:$0xff]
        %v679 = vld [vmem:[#allocation9 + $0x1b8] sm:$0xff]
        %v680 = vld [vmem:[#allocation9 + $0x1c0] sm:$0xff]
        %v681 = vld [vmem:[#allocation9 + $0x1c8] sm:$0xff]
        %v682 = vld [vmem:[#allocation9 + $0x1d0] sm:$0xff]
        %v683 = vld [vmem:[#allocation9 + $0x1d8] sm:$0xff]
        %v684 = vld [vmem:[#allocation9 + $0x1e0] sm:$0xff]
        %v685 = vld [vmem:[#allocation9 + $0x1e8] sm:$0xff]
        %v686 = vld [vmem:[#allocation9 + $0x1f0] sm:$0xff]
        %v687 = vld [vmem:[#allocation9 + $0x1f8] sm:$0xff]
        %v688 = vld [vmem:[#allocation11] sm:$0xff]
        %v689 = vld [vmem:[#allocation11 + $0x8] sm:$0xff]
        %v690 = vld [vmem:[#allocation11 + $0x10] sm:$0xff]
        %v691 = vld [vmem:[#allocation11 + $0x18] sm:$0xff]
        %v692 = vld [vmem:[#allocation11 + $0x20] sm:$0xff]
        %v693 = vld [vmem:[#allocation11 + $0x28] sm:$0xff]
        %v694 = vld [vmem:[#allocation11 + $0x30] sm:$0xff]
        %v695 = vld [vmem:[#allocation11 + $0x38] sm:$0xff]
        %v696 = vld [vmem:[#allocation11 + $0x40] sm:$0xff]
        %v697 = vld [vmem:[#allocation11 + $0x48] sm:$0xff]
        %v698 = vld [vmem:[#allocation11 + $0x50] sm:$0xff]
        %v699 = vld [vmem:[#allocation11 + $0x58] sm:$0xff]
        %v700 = vld [vmem:[#allocation11 + $0x60] sm:$0xff]
        %v701 = vld [vmem:[#allocation11 + $0x68] sm:$0xff]
        %v702 = vld [vmem:[#allocation11 + $0x70] sm:$0xff]
        %v703 = vld [vmem:[#allocation11 + $0x78] sm:$0xff]
        %v704 = vld [vmem:[#allocation11 + $0x80] sm:$0xff]
        %v705 = vld [vmem:[#allocation11 + $0x88] sm:$0xff]
        %v706 = vld [vmem:[#allocation11 + $0x90] sm:$0xff]
        %v707 = vld [vmem:[#allocation11 + $0x98] sm:$0xff]
        %v708 = vld [vmem:[#allocation11 + $0xa0] sm:$0xff]
        %v709 = vld [vmem:[#allocation11 + $0xa8] sm:$0xff]
        %v710 = vld [vmem:[#allocation11 + $0xb0] sm:$0xff]
        %v711 = vld [vmem:[#allocation11 + $0xb8] sm:$0xff]
        %v712 = vld [vmem:[#allocation11 + $0xc0] sm:$0xff]
        %v713 = vld [vmem:[#allocation11 + $0xc8] sm:$0xff]
        %v714 = vld [vmem:[#allocation11 + $0xd0] sm:$0xff]
        %v715 = vld [vmem:[#allocation11 + $0xd8] sm:$0xff]
        %v716 = vld [vmem:[#allocation11 + $0xe0] sm:$0xff]
        %v717 = vld [vmem:[#allocation11 + $0xe8] sm:$0xff]
        %v718 = vld [vmem:[#allocation11 + $0xf0] sm:$0xff]
        %v719 = vld [vmem:[#allocation11 + $0xf8] sm:$0xff]
        %v720 = vld [vmem:[#allocation11 + $0x100] sm:$0xff]
        %v721 = vld [vmem:[#allocation11 + $0x108] sm:$0xff]
        %v722 = vld [vmem:[#allocation11 + $0x110] sm:$0xff]
        %v723 = vld [vmem:[#allocation11 + $0x118] sm:$0xff]
        %v724 = vld [vmem:[#allocation11 + $0x120] sm:$0xff]
        %v725 = vld [vmem:[#allocation11 + $0x128] sm:$0xff]
        %v726 = vld [vmem:[#allocation11 + $0x130] sm:$0xff]
        %v727 = vld [vmem:[#allocation11 + $0x138] sm:$0xff]
        %v728 = vld [vmem:[#allocation11 + $0x140] sm:$0xff]
        %v729 = vld [vmem:[#allocation11 + $0x148] sm:$0xff]
        %v730 = vld [vmem:[#allocation11 + $0x150] sm:$0xff]
        %v731 = vld [vmem:[#allocation11 + $0x158] sm:$0xff]
        %v732 = vld [vmem:[#allocation11 + $0x160] sm:$0xff]
        %v733 = vld [vmem:[#allocation11 + $0x168] sm:$0xff]
        %v734 = vld [vmem:[#allocation11 + $0x170] sm:$0xff]
        %v735 = vld [vmem:[#allocation11 + $0x178] sm:$0xff]
        %v736 = vld [vmem:[#allocation11 + $0x180] sm:$0xff]
        %v737 = vld [vmem:[#allocation11 + $0x188] sm:$0xff]
        %v738 = vld [vmem:[#allocation11 + $0x190] sm:$0xff]
        %v739 = vld [vmem:[#allocation11 + $0x198] sm:$0xff]
        %v740 = vld [vmem:[#allocation11 + $0x1a0] sm:$0xff]
        %v741 = vld [vmem:[#allocation11 + $0x1a8] sm:$0xff]
        %v742 = vld [vmem:[#allocation11 + $0x1b0] sm:$0xff]
        %v743 = vld [vmem:[#allocation11 + $0x1b8] sm:$0xff]
        %v744 = vld [vmem:[#allocation11 + $0x1c0] sm:$0xff]
        %v745 = vld [vmem:[#allocation11 + $0x1c8] sm:$0xff]
        %v746 = vld [vmem:[#allocation11 + $0x1d0] sm:$0xff]
        %v747 = vld [vmem:[#allocation11 + $0x1d8] sm:$0xff]
        %v748 = vld [vmem:[#allocation11 + $0x1e0] sm:$0xff]
        %v749 = vld [vmem:[#allocation11 + $0x1e8] sm:$0xff]
        %v750 = vld [vmem:[#allocation11 + $0x1f0] sm:$0xff]
        %v751 = vld [vmem:[#allocation11 + $0x1f8] sm:$0xff]
        %v752 = vld [vmem:[%s532] sm:$0xff]
        %v753 = vld [vmem:[%s532 + $0x8] sm:$0xff]
        %v755 = vlaneseq
        %v756 = vshrl.u32 %v755, 7
        %v757 = vsub.s32 0, %v756
        %v758 = vrot.slane %v623, %v757
        %v759 = vlaneseq
        %v760 = vshrl.u32 %v759, 7
        %v761 = vsub.s32 1, %v760
        %v762 = vrot.slane %v623, %v761
        %v763 = vlaneseq
        %v764 = vshrl.u32 %v763, 7
        %v765 = vsub.s32 2, %v764
        %v766 = vrot.slane %v623, %v765
        %v767 = vlaneseq
        %v768 = vshrl.u32 %v767, 7
        %v769 = vsub.s32 3, %v768
        %v770 = vrot.slane %v623, %v769
        %v771 = vlaneseq
        %v772 = vshrl.u32 %v771, 7
        %v773 = vsub.s32 4, %v772
        %v774 = vrot.slane %v623, %v773
        %v775 = vlaneseq
        %v776 = vshrl.u32 %v775, 7
        %v777 = vsub.s32 5, %v776
        %v778 = vrot.slane %v623, %v777
        %v779 = vlaneseq
        %v780 = vshrl.u32 %v779, 7
        %v781 = vsub.s32 6, %v780
        %v782 = vrot.slane %v623, %v781
        %v783 = vlaneseq
        %v784 = vshrl.u32 %v783, 7
        %v785 = vsub.s32 7, %v784
        %v786 = vrot.slane %v623, %v785
        %vm795 = vcmask 130048
        %v797 = vsel %vm795, %v752, 0
        %v800 = vsel %vm795, %v753, 0
        %802 = vmatprep.subr.mxu0 0.0
        %803 = vmatpush1.msra.mxu0 0.0
        %804 = vmatprep.subr.mxu0 0.0
        %805 = vmatpush1.msra.mxu0 0.0
        %806 = vmatprep.subr.mxu0 0.0
        %807 = vmatpush1.msra.mxu0 0.0
        %808 = vmatprep.subr.mxu0 0.0
        %809 = vmatpush1.msra.mxu0 0.0
        %810 = vmatprep.subr.mxu0 0.0
        %811 = vmatpush1.msra.mxu0 0.0
        %812 = vmatprep.subr.mxu0 0.0
        %813 = vmatpush1.msra.mxu0 0.0
        %814 = vmatprep.subr.mxu0 0.0
        %815 = vmatpush1.msra.mxu0 0.0
        %816 = vmatprep.subr.mxu0 0.0
        %817 = vmatpush1.msra.mxu0 0.0
        %818 = vmatprep.subr.mxu0 0.0
        %819 = vmatpush1.msra.mxu0 0.0
        %820 = vmatprep.subr.mxu0 0.0
        %821 = vmatpush1.msra.mxu0 0.0
        %822 = vmatprep.subr.mxu0 0.0
        %823 = vmatpush1.msra.mxu0 0.0
        %824 = vmatprep.subr.mxu0 0.0
        %825 = vmatpush1.msra.mxu0 0.0
        %826 = vmatprep.subr.mxu0 0.0
        %827 = vmatpush1.msra.mxu0 0.0
        %828 = vmatprep.subr.mxu0 0.0
        %829 = vmatpush1.msra.mxu0 0.0
        %830 = vmatprep.subr.mxu0 %v616
        %831 = vmatpush1.msra.mxu0 %v615
        %832 = vmatprep.subr.mxu0 %v608
        %833 = vmatpush1.msra.mxu0 %v607
        %834 = vmatprep.subr.mxu0 0.0
        %835 = vmatpush2.msra.mxu0 0.0
        %836 = vmatprep.subr.mxu0 0.0
        %837 = vmatpush2.msra.mxu0 0.0
        %838 = vmatprep.subr.mxu0 0.0
        %839 = vmatpush2.msra.mxu0 0.0
        %840 = vmatprep.subr.mxu0 0.0
        %841 = vmatpush2.msra.mxu0 0.0
        %842 = vmatprep.subr.mxu0 0.0
        %843 = vmatpush2.msra.mxu0 0.0
        %844 = vmatprep.subr.mxu0 0.0
        %845 = vmatpush2.msra.mxu0 0.0
        %846 = vmatprep.subr.mxu0 0.0
        %847 = vmatpush2.msra.mxu0 0.0
        %848 = vmatprep.subr.mxu0 0.0
        %849 = vmatpush2.msra.mxu0 0.0
        %850 = vmatprep.subr.mxu0 0.0
        %851 = vmatpush2.msra.mxu0 0.0
        %852 = vmatprep.subr.mxu0 0.0
        %853 = vmatpush2.msra.mxu0 0.0
        %854 = vmatprep.subr.mxu0 0.0
        %855 = vmatpush2.msra.mxu0 0.0
        %856 = vmatprep.subr.mxu0 0.0
        %857 = vmatpush2.msra.mxu0 0.0
        %858 = vmatprep.subr.mxu0 0.0
        %859 = vmatpush2.msra.mxu0 0.0
        %860 = vmatprep.subr.mxu0 0.0
        %861 = vmatpush2.msra.mxu0 0.0
        %862 = vmatprep.subr.mxu0 0.0
        %863 = vmatpush2.msra.mxu0 0.0
        %864 = vmatprep.subr.mxu0 0.0
        %865 = vmatpush2.msra.mxu0 0.0
        %866 = vmatprep.mubr.f32.mxu0 0.0
        %867 = vmatmul.mubr.f32.gmra.mxu0 %v797
        %v868 = vpop.f32.mrf.mxu0
        %v869 = vadd.f32 %v758, %v868
        %v870 = vpop.f32.mrf.mxu0
        %v871 = vadd.f32 %v762, %v870
        %872 = vmatprep.mubr.f32.mxu0 0.0
        %873 = vmatmul.mubr.f32.gmra.mxu0 %v800
        %v874 = vpop.f32.mrf.mxu0
        %v875 = vadd.f32 %v758, %v874
        %v876 = vpop.f32.mrf.mxu0
        %v877 = vadd.f32 %v762, %v876
        %878 = vdwg.mxu0
        %879 = vmatprep.subr.mxu0 0.0
        %880 = vmatpush1.msra.mxu0 0.0
        %881 = vmatprep.subr.mxu0 0.0
        %882 = vmatpush1.msra.mxu0 0.0
        %883 = vmatprep.subr.mxu0 0.0
        %884 = vmatpush1.msra.mxu0 0.0
        %885 = vmatprep.subr.mxu0 0.0
        %886 = vmatpush1.msra.mxu0 0.0
        %887 = vmatprep.subr.mxu0 0.0
        %888 = vmatpush1.msra.mxu0 0.0
        %889 = vmatprep.subr.mxu0 0.0
        %890 = vmatpush1.msra.mxu0 0.0
        %891 = vmatprep.subr.mxu0 0.0
        %892 = vmatpush1.msra.mxu0 0.0
        %893 = vmatprep.subr.mxu0 0.0
        %894 = vmatpush1.msra.mxu0 0.0
        %895 = vmatprep.subr.mxu0 0.0
        %896 = vmatpush1.msra.mxu0 0.0
        %897 = vmatprep.subr.mxu0 0.0
        %898 = vmatpush1.msra.mxu0 0.0
        %899 = vmatprep.subr.mxu0 0.0
        %900 = vmatpush1.msra.mxu0 0.0
        %901 = vmatprep.subr.mxu0 0.0
        %902 = vmatpush1.msra.mxu0 0.0
        %903 = vmatprep.subr.mxu0 0.0
        %904 = vmatpush1.msra.mxu0 0.0
        %905 = vmatprep.subr.mxu0 0.0
        %906 = vmatpush1.msra.mxu0 0.0
        %907 = vmatprep.subr.mxu0 %v618
        %908 = vmatpush1.msra.mxu0 %v617
        %909 = vmatprep.subr.mxu0 %v610
        %910 = vmatpush1.msra.mxu0 %v609
        %911 = vmatprep.subr.mxu0 0.0
        %912 = vmatpush2.msra.mxu0 0.0
        %913 = vmatprep.subr.mxu0 0.0
        %914 = vmatpush2.msra.mxu0 0.0
        %915 = vmatprep.subr.mxu0 0.0
        %916 = vmatpush2.msra.mxu0 0.0
        %917 = vmatprep.subr.mxu0 0.0
        %918 = vmatpush2.msra.mxu0 0.0
        %919 = vmatprep.subr.mxu0 0.0
        %920 = vmatpush2.msra.mxu0 0.0
        %921 = vmatprep.subr.mxu0 0.0
        %922 = vmatpush2.msra.mxu0 0.0
        %923 = vmatprep.subr.mxu0 0.0
        %924 = vmatpush2.msra.mxu0 0.0
        %925 = vmatprep.subr.mxu0 0.0
        %926 = vmatpush2.msra.mxu0 0.0
        %927 = vmatprep.subr.mxu0 0.0
        %928 = vmatpush2.msra.mxu0 0.0
        %929 = vmatprep.subr.mxu0 0.0
        %930 = vmatpush2.msra.mxu0 0.0
        %931 = vmatprep.subr.mxu0 0.0
        %932 = vmatpush2.msra.mxu0 0.0
        %933 = vmatprep.subr.mxu0 0.0
        %934 = vmatpush2.msra.mxu0 0.0
        %935 = vmatprep.subr.mxu0 0.0
        %936 = vmatpush2.msra.mxu0 0.0
        %937 = vmatprep.subr.mxu0 0.0
        %938 = vmatpush2.msra.mxu0 0.0
        %939 = vmatprep.subr.mxu0 0.0
        %940 = vmatpush2.msra.mxu0 0.0
        %941 = vmatprep.subr.mxu0 0.0
        %942 = vmatpush2.msra.mxu0 0.0
        %943 = vmatprep.mubr.f32.mxu0 0.0
        %944 = vmatmul.mubr.f32.gmra.mxu0 %v797
        %v945 = vpop.f32.mrf.mxu0
        %v946 = vadd.f32 %v766, %v945
        %v947 = vpop.f32.mrf.mxu0
        %v948 = vadd.f32 %v770, %v947
        %949 = vmatprep.mubr.f32.mxu0 0.0
        %950 = vmatmul.mubr.f32.gmra.mxu0 %v800
        %v951 = vpop.f32.mrf.mxu0
        %v952 = vadd.f32 %v766, %v951
        %v953 = vpop.f32.mrf.mxu0
        %v954 = vadd.f32 %v770, %v953
        %955 = vdwg.mxu0
        %956 = vmatprep.subr.mxu0 0.0
        %957 = vmatpush1.msra.mxu0 0.0
        %958 = vmatprep.subr.mxu0 0.0
        %959 = vmatpush1.msra.mxu0 0.0
        %960 = vmatprep.subr.mxu0 0.0
        %961 = vmatpush1.msra.mxu0 0.0
        %962 = vmatprep.subr.mxu0 0.0
        %963 = vmatpush1.msra.mxu0 0.0
        %964 = vmatprep.subr.mxu0 0.0
        %965 = vmatpush1.msra.mxu0 0.0
        %966 = vmatprep.subr.mxu0 0.0
        %967 = vmatpush1.msra.mxu0 0.0
        %968 = vmatprep.subr.mxu0 0.0
        %969 = vmatpush1.msra.mxu0 0.0
        %970 = vmatprep.subr.mxu0 0.0
        %971 = vmatpush1.msra.mxu0 0.0
        %972 = vmatprep.subr.mxu0 0.0
        %973 = vmatpush1.msra.mxu0 0.0
        %974 = vmatprep.subr.mxu0 0.0
        %975 = vmatpush1.msra.mxu0 0.0
        %976 = vmatprep.subr.mxu0 0.0
        %977 = vmatpush1.msra.mxu0 0.0
        %978 = vmatprep.subr.mxu0 0.0
        %979 = vmatpush1.msra.mxu0 0.0
        %980 = vmatprep.subr.mxu0 0.0
        %981 = vmatpush1.msra.mxu0 0.0
        %982 = vmatprep.subr.mxu0 0.0
        %983 = vmatpush1.msra.mxu0 0.0
        %984 = vmatprep.subr.mxu0 %v620
        %985 = vmatpush1.msra.mxu0 %v619
        %986 = vmatprep.subr.mxu0 %v612
        %987 = vmatpush1.msra.mxu0 %v611
        %988 = vmatprep.subr.mxu0 0.0
        %989 = vmatpush2.msra.mxu0 0.0
        %990 = vmatprep.subr.mxu0 0.0
        %991 = vmatpush2.msra.mxu0 0.0
        %992 = vmatprep.subr.mxu0 0.0
        %993 = vmatpush2.msra.mxu0 0.0
        %994 = vmatprep.subr.mxu0 0.0
        %995 = vmatpush2.msra.mxu0 0.0
        %996 = vmatprep.subr.mxu0 0.0
        %997 = vmatpush2.msra.mxu0 0.0
        %998 = vmatprep.subr.mxu0 0.0
        %999 = vmatpush2.msra.mxu0 0.0
        %1000 = vmatprep.subr.mxu0 0.0
        %1001 = vmatpush2.msra.mxu0 0.0
        %1002 = vmatprep.subr.mxu0 0.0
        %1003 = vmatpush2.msra.mxu0 0.0
        %1004 = vmatprep.subr.mxu0 0.0
        %1005 = vmatpush2.msra.mxu0 0.0
        %1006 = vmatprep.subr.mxu0 0.0
        %1007 = vmatpush2.msra.mxu0 0.0
        %1008 = vmatprep.subr.mxu0 0.0
        %1009 = vmatpush2.msra.mxu0 0.0
        %1010 = vmatprep.subr.mxu0 0.0
        %1011 = vmatpush2.msra.mxu0 0.0
        %1012 = vmatprep.subr.mxu0 0.0
        %1013 = vmatpush2.msra.mxu0 0.0
        %1014 = vmatprep.subr.mxu0 0.0
        %1015 = vmatpush2.msra.mxu0 0.0
        %1016 = vmatprep.subr.mxu0 0.0
        %1017 = vmatpush2.msra.mxu0 0.0
        %1018 = vmatprep.subr.mxu0 0.0
        %1019 = vmatpush2.msra.mxu0 0.0
        %1020 = vmatprep.mubr.f32.mxu0 0.0
        %1021 = vmatmul.mubr.f32.gmra.mxu0 %v797
        %v1022 = vpop.f32.mrf.mxu0
        %v1023 = vadd.f32 %v774, %v1022
        %v1024 = vpop.f32.mrf.mxu0
        %v1025 = vadd.f32 %v778, %v1024
        %1026 = vmatprep.mubr.f32.mxu0 0.0
        %1027 = vmatmul.mubr.f32.gmra.mxu0 %v800
        %v1028 = vpop.f32.mrf.mxu0
        %v1029 = vadd.f32 %v774, %v1028
        %v1030 = vpop.f32.mrf.mxu0
        %v1031 = vadd.f32 %v778, %v1030
        %1032 = vdwg.mxu0
        %1033 = vmatprep.subr.mxu0 0.0
        %1034 = vmatpush1.msra.mxu0 0.0
        %1035 = vmatprep.subr.mxu0 0.0
        %1036 = vmatpush1.msra.mxu0 0.0
        %1037 = vmatprep.subr.mxu0 0.0
        %1038 = vmatpush1.msra.mxu0 0.0
        %1039 = vmatprep.subr.mxu0 0.0
        %1040 = vmatpush1.msra.mxu0 0.0
        %1041 = vmatprep.subr.mxu0 0.0
        %1042 = vmatpush1.msra.mxu0 0.0
        %1043 = vmatprep.subr.mxu0 0.0
        %1044 = vmatpush1.msra.mxu0 0.0
        %1045 = vmatprep.subr.mxu0 0.0
        %1046 = vmatpush1.msra.mxu0 0.0
        %1047 = vmatprep.subr.mxu0 0.0
        %1048 = vmatpush1.msra.mxu0 0.0
        %1049 = vmatprep.subr.mxu0 0.0
        %1050 = vmatpush1.msra.mxu0 0.0
        %1051 = vmatprep.subr.mxu0 0.0
        %1052 = vmatpush1.msra.mxu0 0.0
        %1053 = vmatprep.subr.mxu0 0.0
        %1054 = vmatpush1.msra.mxu0 0.0
        %1055 = vmatprep.subr.mxu0 0.0
        %1056 = vmatpush1.msra.mxu0 0.0
        %1057 = vmatprep.subr.mxu0 0.0
        %1058 = vmatpush1.msra.mxu0 0.0
        %1059 = vmatprep.subr.mxu0 0.0
        %1060 = vmatpush1.msra.mxu0 0.0
        %1061 = vmatprep.subr.mxu0 %v622
        %1062 = vmatpush1.msra.mxu0 %v621
        %1063 = vmatprep.subr.mxu0 %v614
        %1064 = vmatpush1.msra.mxu0 %v613
        %1065 = vmatprep.subr.mxu0 0.0
        %1066 = vmatpush2.msra.mxu0 0.0
        %1067 = vmatprep.subr.mxu0 0.0
        %1068 = vmatpush2.msra.mxu0 0.0
        %1069 = vmatprep.subr.mxu0 0.0
        %1070 = vmatpush2.msra.mxu0 0.0
        %1071 = vmatprep.subr.mxu0 0.0
        %1072 = vmatpush2.msra.mxu0 0.0
        %1073 = vmatprep.subr.mxu0 0.0
        %1074 = vmatpush2.msra.mxu0 0.0
        %1075 = vmatprep.subr.mxu0 0.0
        %1076 = vmatpush2.msra.mxu0 0.0
        %1077 = vmatprep.subr.mxu0 0.0
        %1078 = vmatpush2.msra.mxu0 0.0
        %1079 = vmatprep.subr.mxu0 0.0
        %1080 = vmatpush2.msra.mxu0 0.0
        %1081 = vmatprep.subr.mxu0 0.0
        %1082 = vmatpush2.msra.mxu0 0.0
        %1083 = vmatprep.subr.mxu0 0.0
        %1084 = vmatpush2.msra.mxu0 0.0
        %1085 = vmatprep.subr.mxu0 0.0
        %1086 = vmatpush2.msra.mxu0 0.0
        %1087 = vmatprep.subr.mxu0 0.0
        %1088 = vmatpush2.msra.mxu0 0.0
        %1089 = vmatprep.subr.mxu0 0.0
        %1090 = vmatpush2.msra.mxu0 0.0
        %1091 = vmatprep.subr.mxu0 0.0
        %1092 = vmatpush2.msra.mxu0 0.0
        %1093 = vmatprep.subr.mxu0 0.0
        %1094 = vmatpush2.msra.mxu0 0.0
        %1095 = vmatprep.subr.mxu0 0.0
        %1096 = vmatpush2.msra.mxu0 0.0
        %1097 = vmatprep.mubr.f32.mxu0 0.0
        %1098 = vmatmul.mubr.f32.gmra.mxu0 %v797
        %v1099 = vpop.f32.mrf.mxu0
        %v1100 = vadd.f32 %v782, %v1099
        %v1101 = vpop.f32.mrf.mxu0
        %v1102 = vadd.f32 %v786, %v1101
        %1103 = vmatprep.mubr.f32.mxu0 0.0
        %1104 = vmatmul.mubr.f32.gmra.mxu0 %v800
        %v1105 = vpop.f32.mrf.mxu0
        %v1106 = vadd.f32 %v782, %v1105
        %v1107 = vpop.f32.mrf.mxu0
        %v1108 = vadd.f32 %v786, %v1107
        %1109 = vdwg.mxu0
        %1110 = vst [vmem:[#allocation3] sm:$0xff] %v869
        %1111 = vst [vmem:[#allocation3 + $0x8] sm:$0xff] %v871
        %1112 = vst [vmem:[#allocation3 + $0x10] sm:$0xff] %v946
        %1113 = vst [vmem:[#allocation3 + $0x18] sm:$0xff] %v948
        %1114 = vst [vmem:[#allocation3 + $0x20] sm:$0xff] %v1023
        %1115 = vst [vmem:[#allocation3 + $0x28] sm:$0xff] %v1025
        %1116 = vst [vmem:[#allocation3 + $0x30] sm:$0xff] %v1100
        %1117 = vst [vmem:[#allocation3 + $0x38] sm:$0xff] %v1102
        %1118 = vst [vmem:[#allocation3 + $0x40] sm:$0xff] %v875
        %1119 = vst [vmem:[#allocation3 + $0x48] sm:$0xff] %v877
        %1120 = vst [vmem:[#allocation3 + $0x50] sm:$0xff] %v952
        %1121 = vst [vmem:[#allocation3 + $0x58] sm:$0xff] %v954
        %1122 = vst [vmem:[#allocation3 + $0x60] sm:$0xff] %v1029
        %1123 = vst [vmem:[#allocation3 + $0x68] sm:$0xff] %v1031
        %1124 = vst [vmem:[#allocation3 + $0x70] sm:$0xff] %v1106
        %1125 = vst [vmem:[#allocation3 + $0x78] sm:$0xff] %v1108
        %v1126 = vld [vmem:[#allocation3] sm:$0xff]
        %v1127 = vld [vmem:[#allocation3 + $0x8] sm:$0xff]
        %v1128 = vld [vmem:[#allocation3 + $0x10] sm:$0xff]
        %v1129 = vld [vmem:[#allocation3 + $0x18] sm:$0xff]
        %1130 = vmatprep.subr.mxu0 %v685
        %1131 = vmatpush1.msra.mxu0 %v684
        %1132 = vmatprep.subr.mxu0 %v681
        %1133 = vmatpush1.msra.mxu0 %v680
        %1134 = vmatprep.subr.mxu0 %v677
        %1135 = vmatpush1.msra.mxu0 %v676
        %1136 = vmatprep.subr.mxu0 %v673
        %1137 = vmatpush1.msra.mxu0 %v672
        %1138 = vmatprep.subr.mxu0 %v669
        %1139 = vmatpush1.msra.mxu0 %v668
        %1140 = vmatprep.subr.mxu0 %v665
        %1141 = vmatpush1.msra.mxu0 %v664
        %1142 = vmatprep.subr.mxu0 %v661
        %1143 = vmatpush1.msra.mxu0 %v660
        %1144 = vmatprep.subr.mxu0 %v657
        %1145 = vmatpush1.msra.mxu0 %v656
        %1146 = vmatprep.subr.mxu0 %v653
        %1147 = vmatpush1.msra.mxu0 %v652
        %1148 = vmatprep.subr.mxu0 %v649
        %1149 = vmatpush1.msra.mxu0 %v648
        %1150 = vmatprep.subr.mxu0 %v645
        %1151 = vmatpush1.msra.mxu0 %v644
        %1152 = vmatprep.subr.mxu0 %v641
        %1153 = vmatpush1.msra.mxu0 %v640
        %1154 = vmatprep.subr.mxu0 %v637
        %1155 = vmatpush1.msra.mxu0 %v636
        %1156 = vmatprep.subr.mxu0 %v633
        %1157 = vmatpush1.msra.mxu0 %v632
        %1158 = vmatprep.subr.mxu0 %v629
        %1159 = vmatpush1.msra.mxu0 %v628
        %1160 = vmatprep.subr.mxu0 %v625
        %1161 = vmatpush1.msra.mxu0 %v624
        %1162 = vmatprep.subr.mxu0 0.0
        %1163 = vmatpush2.msra.mxu0 0.0
        %1164 = vmatprep.subr.mxu0 0.0
        %1165 = vmatpush2.msra.mxu0 0.0
        %1166 = vmatprep.subr.mxu0 0.0
        %1167 = vmatpush2.msra.mxu0 0.0
        %1168 = vmatprep.subr.mxu0 0.0
        %1169 = vmatpush2.msra.mxu0 0.0
        %1170 = vmatprep.subr.mxu0 0.0
        %1171 = vmatpush2.msra.mxu0 0.0
        %1172 = vmatprep.subr.mxu0 0.0
        %1173 = vmatpush2.msra.mxu0 0.0
        %1174 = vmatprep.subr.mxu0 0.0
        %1175 = vmatpush2.msra.mxu0 0.0
        %1176 = vmatprep.subr.mxu0 0.0
        %1177 = vmatpush2.msra.mxu0 0.0
        %1178 = vmatprep.subr.mxu0 0.0
        %1179 = vmatpush2.msra.mxu0 0.0
        %1180 = vmatprep.subr.mxu0 0.0
        %1181 = vmatpush2.msra.mxu0 0.0
        %1182 = vmatprep.subr.mxu0 0.0
        %1183 = vmatpush2.msra.mxu0 0.0
        %1184 = vmatprep.subr.mxu0 0.0
        %1185 = vmatpush2.msra.mxu0 0.0
        %1186 = vmatprep.subr.mxu0 0.0
        %1187 = vmatpush2.msra.mxu0 0.0
        %1188 = vmatprep.subr.mxu0 0.0
        %1189 = vmatpush2.msra.mxu0 0.0
        %1190 = vmatprep.subr.mxu0 0.0
        %1191 = vmatpush2.msra.mxu0 0.0
        %1192 = vmatprep.subr.mxu0 0.0
        %1193 = vmatpush2.msra.mxu0 0.0
        %1194 = vmatprep.mubr.f32.mxu0 0.0
        %1195 = vmatmul.mubr.f32.gmra.mxu0 0.0
        %v1196 = vpop.f32.mrf.mxu0
        %v1197 = vadd.f32 0.0, %v1196
        %v1198 = vpop.f32.mrf.mxu0
        %v1199 = vadd.f32 0.0, %v1198
        %1200 = vdwg.mxu0
        %1201 = vmatprep.subr.mxu0 %v687
        %1202 = vmatpush1.msra.mxu0 %v686
        %1203 = vmatprep.subr.mxu0 %v683
        %1204 = vmatpush1.msra.mxu0 %v682
        %1205 = vmatprep.subr.mxu0 %v679
        %1206 = vmatpush1.msra.mxu0 %v678
        %1207 = vmatprep.subr.mxu0 %v675
        %1208 = vmatpush1.msra.mxu0 %v674
        %1209 = vmatprep.subr.mxu0 %v671
        %1210 = vmatpush1.msra.mxu0 %v670
        %1211 = vmatprep.subr.mxu0 %v667
        %1212 = vmatpush1.msra.mxu0 %v666
        %1213 = vmatprep.subr.mxu0 %v663
        %1214 = vmatpush1.msra.mxu0 %v662
        %1215 = vmatprep.subr.mxu0 %v659
        %1216 = vmatpush1.msra.mxu0 %v658
        %1217 = vmatprep.subr.mxu0 %v655
        %1218 = vmatpush1.msra.mxu0 %v654
        %1219 = vmatprep.subr.mxu0 %v651
        %1220 = vmatpush1.msra.mxu0 %v650
        %1221 = vmatprep.subr.mxu0 %v647
        %1222 = vmatpush1.msra.mxu0 %v646
        %1223 = vmatprep.subr.mxu0 %v643
        %1224 = vmatpush1.msra.mxu0 %v642
        %1225 = vmatprep.subr.mxu0 %v639
        %1226 = vmatpush1.msra.mxu0 %v638
        %1227 = vmatprep.subr.mxu0 %v635
        %1228 = vmatpush1.msra.mxu0 %v634
        %1229 = vmatprep.subr.mxu0 %v631
        %1230 = vmatpush1.msra.mxu0 %v630
        %1231 = vmatprep.subr.mxu0 %v627
        %1232 = vmatpush1.msra.mxu0 %v626
        %1233 = vmatprep.subr.mxu0 0.0
        %1234 = vmatpush2.msra.mxu0 0.0
        %1235 = vmatprep.subr.mxu0 0.0
        %1236 = vmatpush2.msra.mxu0 0.0
        %1237 = vmatprep.subr.mxu0 0.0
        %1238 = vmatpush2.msra.mxu0 0.0
        %1239 = vmatprep.subr.mxu0 0.0
        %1240 = vmatpush2.msra.mxu0 0.0
        %1241 = vmatprep.subr.mxu0 0.0
        %1242 = vmatpush2.msra.mxu0 0.0
        %1243 = vmatprep.subr.mxu0 0.0
        %1244 = vmatpush2.msra.mxu0 0.0
        %1245 = vmatprep.subr.mxu0 0.0
        %1246 = vmatpush2.msra.mxu0 0.0
        %1247 = vmatprep.subr.mxu0 0.0
        %1248 = vmatpush2.msra.mxu0 0.0
        %1249 = vmatprep.subr.mxu0 0.0
        %1250 = vmatpush2.msra.mxu0 0.0
        %1251 = vmatprep.subr.mxu0 0.0
        %1252 = vmatpush2.msra.mxu0 0.0
        %1253 = vmatprep.subr.mxu0 0.0
        %1254 = vmatpush2.msra.mxu0 0.0
        %1255 = vmatprep.subr.mxu0 0.0
        %1256 = vmatpush2.msra.mxu0 0.0
        %1257 = vmatprep.subr.mxu0 0.0
        %1258 = vmatpush2.msra.mxu0 0.0
        %1259 = vmatprep.subr.mxu0 0.0
        %1260 = vmatpush2.msra.mxu0 0.0
        %1261 = vmatprep.subr.mxu0 0.0
        %1262 = vmatpush2.msra.mxu0 0.0
        %1263 = vmatprep.subr.mxu0 0.0
        %1264 = vmatpush2.msra.mxu0 0.0
        %1265 = vmatprep.mubr.f32.mxu0 0.0
        %1266 = vmatmul.mubr.f32.gmra.mxu0 0.0
        %v1267 = vpop.f32.mrf.mxu0
        %v1268 = vadd.f32 0.0, %v1267
        %v1269 = vpop.f32.mrf.mxu0
        %v1270 = vadd.f32 0.0, %v1269
        %1271 = vdwg.mxu0
        %v1272 = vadd.f32 %v1126, %v1197
        %v1273 = vadd.f32 %v1127, %v1199
        %v1274 = vadd.f32 %v1128, %v1268
        %v1275 = vadd.f32 %v1129, %v1270
        %s1276 = scalar_lea.vmem [#allocation3], 64
        %v1277 = vld [vmem:[%s1276 + $0x20] sm:$0xff]
        %v1278 = vld [vmem:[%s1276 + $0x28] sm:$0xff]
        %v1279 = vld [vmem:[%s1276 + $0x30] sm:$0xff]
        %v1280 = vld [vmem:[%s1276 + $0x38] sm:$0xff]
        %1281 = vmatprep.subr.mxu0 %v749
        %1282 = vmatpush1.msra.mxu0 %v748
        %1283 = vmatprep.subr.mxu0 %v745
        %1284 = vmatpush1.msra.mxu0 %v744
        %1285 = vmatprep.subr.mxu0 %v741
        %1286 = vmatpush1.msra.mxu0 %v740
        %1287 = vmatprep.subr.mxu0 %v737
        %1288 = vmatpush1.msra.mxu0 %v736
        %1289 = vmatprep.subr.mxu0 %v733
        %1290 = vmatpush1.msra.mxu0 %v732
        %1291 = vmatprep.subr.mxu0 %v729
        %1292 = vmatpush1.msra.mxu0 %v728
        %1293 = vmatprep.subr.mxu0 %v725
        %1294 = vmatpush1.msra.mxu0 %v724
        %1295 = vmatprep.subr.mxu0 %v721
        %1296 = vmatpush1.msra.mxu0 %v720
        %1297 = vmatprep.subr.mxu0 %v717
        %1298 = vmatpush1.msra.mxu0 %v716
        %1299 = vmatprep.subr.mxu0 %v713
        %1300 = vmatpush1.msra.mxu0 %v712
        %1301 = vmatprep.subr.mxu0 %v709
        %1302 = vmatpush1.msra.mxu0 %v708
        %1303 = vmatprep.subr.mxu0 %v705
        %1304 = vmatpush1.msra.mxu0 %v704
        %1305 = vmatprep.subr.mxu0 %v701
        %1306 = vmatpush1.msra.mxu0 %v700
        %1307 = vmatprep.subr.mxu0 %v697
        %1308 = vmatpush1.msra.mxu0 %v696
        %1309 = vmatprep.subr.mxu0 %v693
        %1310 = vmatpush1.msra.mxu0 %v692
        %1311 = vmatprep.subr.mxu0 %v689
        %1312 = vmatpush1.msra.mxu0 %v688
        %1313 = vmatprep.subr.mxu0 0.0
        %1314 = vmatpush2.msra.mxu0 0.0
        %1315 = vmatprep.subr.mxu0 0.0
        %1316 = vmatpush2.msra.mxu0 0.0
        %1317 = vmatprep.subr.mxu0 0.0
        %1318 = vmatpush2.msra.mxu0 0.0
        %1319 = vmatprep.subr.mxu0 0.0
        %1320 = vmatpush2.msra.mxu0 0.0
        %1321 = vmatprep.subr.mxu0 0.0
        %1322 = vmatpush2.msra.mxu0 0.0
        %1323 = vmatprep.subr.mxu0 0.0
        %1324 = vmatpush2.msra.mxu0 0.0
        %1325 = vmatprep.subr.mxu0 0.0
        %1326 = vmatpush2.msra.mxu0 0.0
        %1327 = vmatprep.subr.mxu0 0.0
        %1328 = vmatpush2.msra.mxu0 0.0
        %1329 = vmatprep.subr.mxu0 0.0
        %1330 = vmatpush2.msra.mxu0 0.0
        %1331 = vmatprep.subr.mxu0 0.0
        %1332 = vmatpush2.msra.mxu0 0.0
        %1333 = vmatprep.subr.mxu0 0.0
        %1334 = vmatpush2.msra.mxu0 0.0
        %1335 = vmatprep.subr.mxu0 0.0
        %1336 = vmatpush2.msra.mxu0 0.0
        %1337 = vmatprep.subr.mxu0 0.0
        %1338 = vmatpush2.msra.mxu0 0.0
        %1339 = vmatprep.subr.mxu0 0.0
        %1340 = vmatpush2.msra.mxu0 0.0
        %1341 = vmatprep.subr.mxu0 0.0
        %1342 = vmatpush2.msra.mxu0 0.0
        %1343 = vmatprep.subr.mxu0 0.0
        %1344 = vmatpush2.msra.mxu0 0.0
        %1345 = vmatprep.mubr.f32.mxu0 0.0
        %1346 = vmatmul.mubr.f32.gmra.mxu0 0.0
        %v1347 = vpop.f32.mrf.mxu0
        %v1348 = vadd.f32 0.0, %v1347
        %v1349 = vpop.f32.mrf.mxu0
        %v1350 = vadd.f32 0.0, %v1349
        %1351 = vdwg.mxu0
        %1352 = vmatprep.subr.mxu0 %v751
        %1353 = vmatpush1.msra.mxu0 %v750
        %1354 = vmatprep.subr.mxu0 %v747
        %1355 = vmatpush1.msra.mxu0 %v746
        %1356 = vmatprep.subr.mxu0 %v743
        %1357 = vmatpush1.msra.mxu0 %v742
        %1358 = vmatprep.subr.mxu0 %v739
        %1359 = vmatpush1.msra.mxu0 %v738
        %1360 = vmatprep.subr.mxu0 %v735
        %1361 = vmatpush1.msra.mxu0 %v734
        %1362 = vmatprep.subr.mxu0 %v731
        %1363 = vmatpush1.msra.mxu0 %v730
        %1364 = vmatprep.subr.mxu0 %v727
        %1365 = vmatpush1.msra.mxu0 %v726
        %1366 = vmatprep.subr.mxu0 %v723
        %1367 = vmatpush1.msra.mxu0 %v722
        %1368 = vmatprep.subr.mxu0 %v719
        %1369 = vmatpush1.msra.mxu0 %v718
        %1370 = vmatprep.subr.mxu0 %v715
        %1371 = vmatpush1.msra.mxu0 %v714
        %1372 = vmatprep.subr.mxu0 %v711
        %1373 = vmatpush1.msra.mxu0 %v710
        %1374 = vmatprep.subr.mxu0 %v707
        %1375 = vmatpush1.msra.mxu0 %v706
        %1376 = vmatprep.subr.mxu0 %v703
        %1377 = vmatpush1.msra.mxu0 %v702
        %1378 = vmatprep.subr.mxu0 %v699
        %1379 = vmatpush1.msra.mxu0 %v698
        %1380 = vmatprep.subr.mxu0 %v695
        %1381 = vmatpush1.msra.mxu0 %v694
        %1382 = vmatprep.subr.mxu0 %v691
        %1383 = vmatpush1.msra.mxu0 %v690
        %1384 = vmatprep.subr.mxu0 0.0
        %1385 = vmatpush2.msra.mxu0 0.0
        %1386 = vmatprep.subr.mxu0 0.0
        %1387 = vmatpush2.msra.mxu0 0.0
        %1388 = vmatprep.subr.mxu0 0.0
        %1389 = vmatpush2.msra.mxu0 0.0
        %1390 = vmatprep.subr.mxu0 0.0
        %1391 = vmatpush2.msra.mxu0 0.0
        %1392 = vmatprep.subr.mxu0 0.0
        %1393 = vmatpush2.msra.mxu0 0.0
        %1394 = vmatprep.subr.mxu0 0.0
        %1395 = vmatpush2.msra.mxu0 0.0
        %1396 = vmatprep.subr.mxu0 0.0
        %1397 = vmatpush2.msra.mxu0 0.0
        %1398 = vmatprep.subr.mxu0 0.0
        %1399 = vmatpush2.msra.mxu0 0.0
        %1400 = vmatprep.subr.mxu0 0.0
        %1401 = vmatpush2.msra.mxu0 0.0
        %1402 = vmatprep.subr.mxu0 0.0
        %1403 = vmatpush2.msra.mxu0 0.0
        %1404 = vmatprep.subr.mxu0 0.0
        %1405 = vmatpush2.msra.mxu0 0.0
        %1406 = vmatprep.subr.mxu0 0.0
        %1407 = vmatpush2.msra.mxu0 0.0
        %1408 = vmatprep.subr.mxu0 0.0
        %1409 = vmatpush2.msra.mxu0 0.0
        %1410 = vmatprep.subr.mxu0 0.0
        %1411 = vmatpush2.msra.mxu0 0.0
        %1412 = vmatprep.subr.mxu0 0.0
        %1413 = vmatpush2.msra.mxu0 0.0
        %1414 = vmatprep.subr.mxu0 0.0
        %1415 = vmatpush2.msra.mxu0 0.0
        %1416 = vmatprep.mubr.f32.mxu0 0.0
        %1417 = vmatmul.mubr.f32.gmra.mxu0 0.0
        %v1418 = vpop.f32.mrf.mxu0
        %v1419 = vadd.f32 0.0, %v1418
        %v1420 = vpop.f32.mrf.mxu0
        %v1421 = vadd.f32 0.0, %v1420
        %1422 = vdwg.mxu0
        %v1423 = vadd.f32 %v1277, %v1348
        %v1424 = vadd.f32 %v1278, %v1350
        %v1425 = vadd.f32 %v1279, %v1419
        %v1426 = vadd.f32 %v1280, %v1421
        %v1427 = vxor.u32 %v1272, 2147483648
        %v1428 = vmul.f32 %v1427, 1.442695
        %v1429 = vpow.pop %v1428
        %v1430 = vadd.f32 %v1429, 1.0
        %v1431 = vrcp.pop %v1430
        %v1432 = vmul.f32 1.0, %v1431
        %v1433 = vxor.u32 %v1273, 2147483648
        %v1434 = vmul.f32 %v1433, 1.442695
        %v1435 = vpow.pop %v1434
        %v1436 = vadd.f32 %v1435, 1.0
        %v1437 = vrcp.pop %v1436
        %v1438 = vmul.f32 1.0, %v1437
        %v1439 = vtanh.pop %v1274
        %v1440 = vxor.u32 %v1275, 2147483648
        %v1441 = vmul.f32 %v1440, 1.442695
        %v1442 = vpow.pop %v1441
        %v1443 = vadd.f32 %v1442, 1.0
        %v1444 = vrcp.pop %v1443
        %v1445 = vmul.f32 1.0, %v1444
        %v1446 = vmul.f32 %v1438, 0.0
        %v1447 = vmul.f32 %v1432, %v1439
        %v1448 = vadd.f32 %v1446, %v1447
        %v1449 = vtanh.pop %v1448
        %v1450 = vmul.f32 %v1445, %v1449
        %v1451 = vxor.u32 %v1423, 2147483648
        %v1452 = vmul.f32 %v1451, 1.442695
        %v1453 = vpow.pop %v1452
        %v1454 = vadd.f32 %v1453, 1.0
        %v1455 = vrcp.pop %v1454
        %v1456 = vmul.f32 1.0, %v1455
        %v1457 = vxor.u32 %v1424, 2147483648
        %v1458 = vmul.f32 %v1457, 1.442695
        %v1459 = vpow.pop %v1458
        %v1460 = vadd.f32 %v1459, 1.0
        %v1461 = vrcp.pop %v1460
        %v1462 = vmul.f32 1.0, %v1461
        %v1463 = vtanh.pop %v1425
        %v1464 = vxor.u32 %v1426, 2147483648
        %v1465 = vmul.f32 %v1464, 1.442695
        %v1466 = vpow.pop %v1465
        %v1467 = vadd.f32 %v1466, 1.0
        %v1468 = vrcp.pop %v1467
        %v1469 = vmul.f32 1.0, %v1468
        %v1470 = vmul.f32 %v1462, 0.0
        %v1471 = vmul.f32 %v1456, %v1463
        %v1472 = vadd.f32 %v1470, %v1471
        %v1473 = vtanh.pop %v1472
        %v1474 = vmul.f32 %v1469, %v1473
        %1475 = vst [vmem:[#allocation2] sm:$0xff] %v1450
        %s1476 = scalar_lea.vmem [#allocation2], 16
        %1477 = vst [vmem:[%s1476 + $0x8] sm:$0xff] %v1474
        %v1478 = vld [vmem:[%s1276] sm:$0xff]
        %v1479 = vld [vmem:[%s1276 + $0x8] sm:$0xff]
        %v1480 = vld [vmem:[%s1276 + $0x10] sm:$0xff]
        %v1481 = vld [vmem:[%s1276 + $0x18] sm:$0xff]
        %1482 = vmatprep.subr.mxu0 %v685
        %1483 = vmatpush1.msra.mxu0 %v684
        %1484 = vmatprep.subr.mxu0 %v681
        %1485 = vmatpush1.msra.mxu0 %v680
        %1486 = vmatprep.subr.mxu0 %v677
        %1487 = vmatpush1.msra.mxu0 %v676
        %1488 = vmatprep.subr.mxu0 %v673
        %1489 = vmatpush1.msra.mxu0 %v672
        %1490 = vmatprep.subr.mxu0 %v669
        %1491 = vmatpush1.msra.mxu0 %v668
        %1492 = vmatprep.subr.mxu0 %v665
        %1493 = vmatpush1.msra.mxu0 %v664
        %1494 = vmatprep.subr.mxu0 %v661
        %1495 = vmatpush1.msra.mxu0 %v660
        %1496 = vmatprep.subr.mxu0 %v657
        %1497 = vmatpush1.msra.mxu0 %v656
        %1498 = vmatprep.subr.mxu0 %v653
        %1499 = vmatpush1.msra.mxu0 %v652
        %1500 = vmatprep.subr.mxu0 %v649
        %1501 = vmatpush1.msra.mxu0 %v648
        %1502 = vmatprep.subr.mxu0 %v645
        %1503 = vmatpush1.msra.mxu0 %v644
        %1504 = vmatprep.subr.mxu0 %v641
        %1505 = vmatpush1.msra.mxu0 %v640
        %1506 = vmatprep.subr.mxu0 %v637
        %1507 = vmatpush1.msra.mxu0 %v636
        %1508 = vmatprep.subr.mxu0 %v633
        %1509 = vmatpush1.msra.mxu0 %v632
        %1510 = vmatprep.subr.mxu0 %v629
        %1511 = vmatpush1.msra.mxu0 %v628
        %1512 = vmatprep.subr.mxu0 %v625
        %1513 = vmatpush1.msra.mxu0 %v624
        %1514 = vmatprep.subr.mxu0 0.0
        %1515 = vmatpush2.msra.mxu0 0.0
        %1516 = vmatprep.subr.mxu0 0.0
        %1517 = vmatpush2.msra.mxu0 0.0
        %1518 = vmatprep.subr.mxu0 0.0
        %1519 = vmatpush2.msra.mxu0 0.0
        %1520 = vmatprep.subr.mxu0 0.0
        %1521 = vmatpush2.msra.mxu0 0.0
        %1522 = vmatprep.subr.mxu0 0.0
        %1523 = vmatpush2.msra.mxu0 0.0
        %1524 = vmatprep.subr.mxu0 0.0
        %1525 = vmatpush2.msra.mxu0 0.0
        %1526 = vmatprep.subr.mxu0 0.0
        %1527 = vmatpush2.msra.mxu0 0.0
        %1528 = vmatprep.subr.mxu0 0.0
        %1529 = vmatpush2.msra.mxu0 0.0
        %1530 = vmatprep.subr.mxu0 0.0
        %1531 = vmatpush2.msra.mxu0 0.0
        %1532 = vmatprep.subr.mxu0 0.0
        %1533 = vmatpush2.msra.mxu0 0.0
        %1534 = vmatprep.subr.mxu0 0.0
        %1535 = vmatpush2.msra.mxu0 0.0
        %1536 = vmatprep.subr.mxu0 0.0
        %1537 = vmatpush2.msra.mxu0 0.0
        %1538 = vmatprep.subr.mxu0 0.0
        %1539 = vmatpush2.msra.mxu0 0.0
        %1540 = vmatprep.subr.mxu0 0.0
        %1541 = vmatpush2.msra.mxu0 0.0
        %1542 = vmatprep.subr.mxu0 0.0
        %1543 = vmatpush2.msra.mxu0 0.0
        %1544 = vmatprep.subr.mxu0 0.0
        %1545 = vmatpush2.msra.mxu0 0.0
        %1546 = vmatprep.mubr.f32.mxu0 0.0
        %1547 = vmatmul.mubr.f32.gmra.mxu0 %v1450
        %v1548 = vpop.f32.mrf.mxu0
        %v1549 = vadd.f32 0.0, %v1548
        %v1550 = vpop.f32.mrf.mxu0
        %v1551 = vadd.f32 0.0, %v1550
        %1552 = vdwg.mxu0
        %1553 = vmatprep.subr.mxu0 %v687
        %1554 = vmatpush1.msra.mxu0 %v686
        %1555 = vmatprep.subr.mxu0 %v683
        %1556 = vmatpush1.msra.mxu0 %v682
        %1557 = vmatprep.subr.mxu0 %v679
        %1558 = vmatpush1.msra.mxu0 %v678
        %1559 = vmatprep.subr.mxu0 %v675
        %1560 = vmatpush1.msra.mxu0 %v674
        %1561 = vmatprep.subr.mxu0 %v671
        %1562 = vmatpush1.msra.mxu0 %v670
        %1563 = vmatprep.subr.mxu0 %v667
        %1564 = vmatpush1.msra.mxu0 %v666
        %1565 = vmatprep.subr.mxu0 %v663
        %1566 = vmatpush1.msra.mxu0 %v662
        %1567 = vmatprep.subr.mxu0 %v659
        %1568 = vmatpush1.msra.mxu0 %v658
        %1569 = vmatprep.subr.mxu0 %v655
        %1570 = vmatpush1.msra.mxu0 %v654
        %1571 = vmatprep.subr.mxu0 %v651
        %1572 = vmatpush1.msra.mxu0 %v650
        %1573 = vmatprep.subr.mxu0 %v647
        %1574 = vmatpush1.msra.mxu0 %v646
        %1575 = vmatprep.subr.mxu0 %v643
        %1576 = vmatpush1.msra.mxu0 %v642
        %1577 = vmatprep.subr.mxu0 %v639
        %1578 = vmatpush1.msra.mxu0 %v638
        %1579 = vmatprep.subr.mxu0 %v635
        %1580 = vmatpush1.msra.mxu0 %v634
        %1581 = vmatprep.subr.mxu0 %v631
        %1582 = vmatpush1.msra.mxu0 %v630
        %1583 = vmatprep.subr.mxu0 %v627
        %1584 = vmatpush1.msra.mxu0 %v626
        %1585 = vmatprep.subr.mxu0 0.0
        %1586 = vmatpush2.msra.mxu0 0.0
        %1587 = vmatprep.subr.mxu0 0.0
        %1588 = vmatpush2.msra.mxu0 0.0
        %1589 = vmatprep.subr.mxu0 0.0
        %1590 = vmatpush2.msra.mxu0 0.0
        %1591 = vmatprep.subr.mxu0 0.0
        %1592 = vmatpush2.msra.mxu0 0.0
        %1593 = vmatprep.subr.mxu0 0.0
        %1594 = vmatpush2.msra.mxu0 0.0
        %1595 = vmatprep.subr.mxu0 0.0
        %1596 = vmatpush2.msra.mxu0 0.0
        %1597 = vmatprep.subr.mxu0 0.0
        %1598 = vmatpush2.msra.mxu0 0.0
        %1599 = vmatprep.subr.mxu0 0.0
        %1600 = vmatpush2.msra.mxu0 0.0
        %1601 = vmatprep.subr.mxu0 0.0
        %1602 = vmatpush2.msra.mxu0 0.0
        %1603 = vmatprep.subr.mxu0 0.0
        %1604 = vmatpush2.msra.mxu0 0.0
        %1605 = vmatprep.subr.mxu0 0.0
        %1606 = vmatpush2.msra.mxu0 0.0
        %1607 = vmatprep.subr.mxu0 0.0
        %1608 = vmatpush2.msra.mxu0 0.0
        %1609 = vmatprep.subr.mxu0 0.0
        %1610 = vmatpush2.msra.mxu0 0.0
        %1611 = vmatprep.subr.mxu0 0.0
        %1612 = vmatpush2.msra.mxu0 0.0
        %1613 = vmatprep.subr.mxu0 0.0
        %1614 = vmatpush2.msra.mxu0 0.0
        %1615 = vmatprep.subr.mxu0 0.0
        %1616 = vmatpush2.msra.mxu0 0.0
        %1617 = vmatprep.mubr.f32.mxu0 0.0
        %1618 = vmatmul.mubr.f32.gmra.mxu0 %v1450
        %v1619 = vpop.f32.mrf.mxu0
        %v1620 = vadd.f32 0.0, %v1619
        %v1621 = vpop.f32.mrf.mxu0
        %v1622 = vadd.f32 0.0, %v1621
        %1623 = vdwg.mxu0
        %v1624 = vadd.f32 %v1478, %v1549
        %v1625 = vadd.f32 %v1479, %v1551
        %v1626 = vadd.f32 %v1480, %v1620
        %v1627 = vadd.f32 %v1481, %v1622
        %v1628 = vld [vmem:[#allocation3 + $0x20] sm:$0xff]
        %v1629 = vld [vmem:[#allocation3 + $0x28] sm:$0xff]
        %v1630 = vld [vmem:[#allocation3 + $0x30] sm:$0xff]
        %v1631 = vld [vmem:[#allocation3 + $0x38] sm:$0xff]
        %1632 = vmatprep.subr.mxu0 %v749
        %1633 = vmatpush1.msra.mxu0 %v748
        %1634 = vmatprep.subr.mxu0 %v745
        %1635 = vmatpush1.msra.mxu0 %v744
        %1636 = vmatprep.subr.mxu0 %v741
        %1637 = vmatpush1.msra.mxu0 %v740
        %1638 = vmatprep.subr.mxu0 %v737
        %1639 = vmatpush1.msra.mxu0 %v736
        %1640 = vmatprep.subr.mxu0 %v733
        %1641 = vmatpush1.msra.mxu0 %v732
        %1642 = vmatprep.subr.mxu0 %v729
        %1643 = vmatpush1.msra.mxu0 %v728
        %1644 = vmatprep.subr.mxu0 %v725
        %1645 = vmatpush1.msra.mxu0 %v724
        %1646 = vmatprep.subr.mxu0 %v721
        %1647 = vmatpush1.msra.mxu0 %v720
        %1648 = vmatprep.subr.mxu0 %v717
        %1649 = vmatpush1.msra.mxu0 %v716
        %1650 = vmatprep.subr.mxu0 %v713
        %1651 = vmatpush1.msra.mxu0 %v712
        %1652 = vmatprep.subr.mxu0 %v709
        %1653 = vmatpush1.msra.mxu0 %v708
        %1654 = vmatprep.subr.mxu0 %v705
        %1655 = vmatpush1.msra.mxu0 %v704
        %1656 = vmatprep.subr.mxu0 %v701
        %1657 = vmatpush1.msra.mxu0 %v700
        %1658 = vmatprep.subr.mxu0 %v697
        %1659 = vmatpush1.msra.mxu0 %v696
        %1660 = vmatprep.subr.mxu0 %v693
        %1661 = vmatpush1.msra.mxu0 %v692
        %1662 = vmatprep.subr.mxu0 %v689
        %1663 = vmatpush1.msra.mxu0 %v688
        %1664 = vmatprep.subr.mxu0 0.0
        %1665 = vmatpush2.msra.mxu0 0.0
        %1666 = vmatprep.subr.mxu0 0.0
        %1667 = vmatpush2.msra.mxu0 0.0
        %1668 = vmatprep.subr.mxu0 0.0
        %1669 = vmatpush2.msra.mxu0 0.0
        %1670 = vmatprep.subr.mxu0 0.0
        %1671 = vmatpush2.msra.mxu0 0.0
        %1672 = vmatprep.subr.mxu0 0.0
        %1673 = vmatpush2.msra.mxu0 0.0
        %1674 = vmatprep.subr.mxu0 0.0
        %1675 = vmatpush2.msra.mxu0 0.0
        %1676 = vmatprep.subr.mxu0 0.0
        %1677 = vmatpush2.msra.mxu0 0.0
        %1678 = vmatprep.subr.mxu0 0.0
        %1679 = vmatpush2.msra.mxu0 0.0
        %1680 = vmatprep.subr.mxu0 0.0
        %1681 = vmatpush2.msra.mxu0 0.0
        %1682 = vmatprep.subr.mxu0 0.0
        %1683 = vmatpush2.msra.mxu0 0.0
        %1684 = vmatprep.subr.mxu0 0.0
        %1685 = vmatpush2.msra.mxu0 0.0
        %1686 = vmatprep.subr.mxu0 0.0
        %1687 = vmatpush2.msra.mxu0 0.0
        %1688 = vmatprep.subr.mxu0 0.0
        %1689 = vmatpush2.msra.mxu0 0.0
        %1690 = vmatprep.subr.mxu0 0.0
        %1691 = vmatpush2.msra.mxu0 0.0
        %1692 = vmatprep.subr.mxu0 0.0
        %1693 = vmatpush2.msra.mxu0 0.0
        %1694 = vmatprep.subr.mxu0 0.0
        %1695 = vmatpush2.msra.mxu0 0.0
        %1696 = vmatprep.mubr.f32.mxu0 0.0
        %1697 = vmatmul.mubr.f32.gmra.mxu0 %v1474
        %v1698 = vpop.f32.mrf.mxu0
        %v1699 = vadd.f32 0.0, %v1698
        %v1700 = vpop.f32.mrf.mxu0
        %v1701 = vadd.f32 0.0, %v1700
        %1702 = vdwg.mxu0
        %1703 = vmatprep.subr.mxu0 %v751
        %1704 = vmatpush1.msra.mxu0 %v750
        %1705 = vmatprep.subr.mxu0 %v747
        %1706 = vmatpush1.msra.mxu0 %v746
        %1707 = vmatprep.subr.mxu0 %v743
        %1708 = vmatpush1.msra.mxu0 %v742
        %1709 = vmatprep.subr.mxu0 %v739
        %1710 = vmatpush1.msra.mxu0 %v738
        %1711 = vmatprep.subr.mxu0 %v735
        %1712 = vmatpush1.msra.mxu0 %v734
        %1713 = vmatprep.subr.mxu0 %v731
        %1714 = vmatpush1.msra.mxu0 %v730
        %1715 = vmatprep.subr.mxu0 %v727
        %1716 = vmatpush1.msra.mxu0 %v726
        %1717 = vmatprep.subr.mxu0 %v723
        %1718 = vmatpush1.msra.mxu0 %v722
        %1719 = vmatprep.subr.mxu0 %v719
        %1720 = vmatpush1.msra.mxu0 %v718
        %1721 = vmatprep.subr.mxu0 %v715
        %1722 = vmatpush1.msra.mxu0 %v714
        %1723 = vmatprep.subr.mxu0 %v711
        %1724 = vmatpush1.msra.mxu0 %v710
        %1725 = vmatprep.subr.mxu0 %v707
        %1726 = vmatpush1.msra.mxu0 %v706
        %1727 = vmatprep.subr.mxu0 %v703
        %1728 = vmatpush1.msra.mxu0 %v702
        %1729 = vmatprep.subr.mxu0 %v699
        %1730 = vmatpush1.msra.mxu0 %v698
        %1731 = vmatprep.subr.mxu0 %v695
        %1732 = vmatpush1.msra.mxu0 %v694
        %1733 = vmatprep.subr.mxu0 %v691
        %1734 = vmatpush1.msra.mxu0 %v690
        %1735 = vmatprep.subr.mxu0 0.0
        %1736 = vmatpush2.msra.mxu0 0.0
        %1737 = vmatprep.subr.mxu0 0.0
        %1738 = vmatpush2.msra.mxu0 0.0
        %1739 = vmatprep.subr.mxu0 0.0
        %1740 = vmatpush2.msra.mxu0 0.0
        %1741 = vmatprep.subr.mxu0 0.0
        %1742 = vmatpush2.msra.mxu0 0.0
        %1743 = vmatprep.subr.mxu0 0.0
        %1744 = vmatpush2.msra.mxu0 0.0
        %1745 = vmatprep.subr.mxu0 0.0
        %1746 = vmatpush2.msra.mxu0 0.0
        %1747 = vmatprep.subr.mxu0 0.0
        %1748 = vmatpush2.msra.mxu0 0.0
        %1749 = vmatprep.subr.mxu0 0.0
        %1750 = vmatpush2.msra.mxu0 0.0
        %1751 = vmatprep.subr.mxu0 0.0
        %1752 = vmatpush2.msra.mxu0 0.0
        %1753 = vmatprep.subr.mxu0 0.0
        %1754 = vmatpush2.msra.mxu0 0.0
        %1755 = vmatprep.subr.mxu0 0.0
        %1756 = vmatpush2.msra.mxu0 0.0
        %1757 = vmatprep.subr.mxu0 0.0
        %1758 = vmatpush2.msra.mxu0 0.0
        %1759 = vmatprep.subr.mxu0 0.0
        %1760 = vmatpush2.msra.mxu0 0.0
        %1761 = vmatprep.subr.mxu0 0.0
        %1762 = vmatpush2.msra.mxu0 0.0
        %1763 = vmatprep.subr.mxu0 0.0
        %1764 = vmatpush2.msra.mxu0 0.0
        %1765 = vmatprep.subr.mxu0 0.0
        %1766 = vmatpush2.msra.mxu0 0.0
        %1767 = vmatprep.mubr.f32.mxu0 0.0
        %1768 = vmatmul.mubr.f32.gmra.mxu0 %v1474
        %v1769 = vpop.f32.mrf.mxu0
        %v1770 = vadd.f32 0.0, %v1769
        %v1771 = vpop.f32.mrf.mxu0
        %v1772 = vadd.f32 0.0, %v1771
        %1773 = vdwg.mxu0
        %v1774 = vadd.f32 %v1628, %v1699
        %v1775 = vadd.f32 %v1629, %v1701
        %v1776 = vadd.f32 %v1630, %v1770
        %v1777 = vadd.f32 %v1631, %v1772
        %v1778 = vxor.u32 %v1624, 2147483648
        %v1779 = vmul.f32 %v1778, 1.442695
        %v1780 = vpow.pop %v1779
        %v1781 = vadd.f32 %v1780, 1.0
        %v1782 = vrcp.pop %v1781
        %v1783 = vmul.f32 1.0, %v1782
        %v1784 = vxor.u32 %v1625, 2147483648
        %v1785 = vmul.f32 %v1784, 1.442695
        %v1786 = vpow.pop %v1785
        %v1787 = vadd.f32 %v1786, 1.0
        %v1788 = vrcp.pop %v1787
        %v1789 = vmul.f32 1.0, %v1788
        %v1790 = vtanh.pop %v1626
        %v1791 = vxor.u32 %v1627, 2147483648
        %v1792 = vmul.f32 %v1791, 1.442695
        %v1793 = vpow.pop %v1792
        %v1794 = vadd.f32 %v1793, 1.0
        %v1795 = vrcp.pop %v1794
        %v1796 = vmul.f32 1.0, %v1795
        %v1797 = vmul.f32 %v1789, %v1448
        %v1798 = vmul.f32 %v1783, %v1790
        %v1799 = vadd.f32 %v1797, %v1798
        %v1800 = vtanh.pop %v1799
        %v1801 = vmul.f32 %v1796, %v1800
        %v1802 = vxor.u32 %v1774, 2147483648
        %v1803 = vmul.f32 %v1802, 1.442695
        %v1804 = vpow.pop %v1803
        %v1805 = vadd.f32 %v1804, 1.0
        %v1806 = vrcp.pop %v1805
        %v1807 = vmul.f32 1.0, %v1806
        %v1808 = vxor.u32 %v1775, 2147483648
        %v1809 = vmul.f32 %v1808, 1.442695
        %v1810 = vpow.pop %v1809
        %v1811 = vadd.f32 %v1810, 1.0
        %v1812 = vrcp.pop %v1811
        %v1813 = vmul.f32 1.0, %v1812
        %v1814 = vtanh.pop %v1776
        %v1815 = vxor.u32 %v1777, 2147483648
        %v1816 = vmul.f32 %v1815, 1.442695
        %v1817 = vpow.pop %v1816
        %v1818 = vadd.f32 %v1817, 1.0
        %v1819 = vrcp.pop %v1818
        %v1820 = vmul.f32 1.0, %v1819
        %v1821 = vmul.f32 %v1813, %v1472
        %v1822 = vmul.f32 %v1807, %v1814
        %v1823 = vadd.f32 %v1821, %v1822
        %v1824 = vtanh.pop %v1823
        %v1825 = vmul.f32 %v1820, %v1824
        %1826 = vst [vmem:[%s1476] sm:$0xff] %v1801
        %1827 = vst [vmem:[#allocation2 + $0x8] sm:$0xff] %v1825
        %v1828 = vld [vmem:[#allocation12] sm:$0xff]
        %v1829 = vld [vmem:[#allocation12 + $0x8] sm:$0xff]
        %v1830 = vld [vmem:[#allocation12 + $0x10] sm:$0xff]
        %v1831 = vld [vmem:[#allocation12 + $0x18] sm:$0xff]
        %v1832 = vld [vmem:[#allocation12 + $0x20] sm:$0xff]
        %v1833 = vld [vmem:[#allocation12 + $0x28] sm:$0xff]
        %v1834 = vld [vmem:[#allocation12 + $0x30] sm:$0xff]
        %v1835 = vld [vmem:[#allocation12 + $0x38] sm:$0xff]
        %v1836 = vld [vmem:[#allocation12 + $0x40] sm:$0xff]
        %v1837 = vld [vmem:[#allocation12 + $0x48] sm:$0xff]
        %v1838 = vld [vmem:[#allocation12 + $0x50] sm:$0xff]
        %v1839 = vld [vmem:[#allocation12 + $0x58] sm:$0xff]
        %v1840 = vld [vmem:[#allocation12 + $0x60] sm:$0xff]
        %v1841 = vld [vmem:[#allocation12 + $0x68] sm:$0xff]
        %v1842 = vld [vmem:[#allocation12 + $0x70] sm:$0xff]
        %v1843 = vld [vmem:[#allocation12 + $0x78] sm:$0xff]
        %v1844 = vld [vmem:[#allocation12 + $0x80] sm:$0xff]
        %v1845 = vld [vmem:[#allocation12 + $0x88] sm:$0xff]
        %v1846 = vld [vmem:[#allocation12 + $0x90] sm:$0xff]
        %v1847 = vld [vmem:[#allocation12 + $0x98] sm:$0xff]
        %v1848 = vld [vmem:[#allocation12 + $0xa0] sm:$0xff]
        %v1849 = vld [vmem:[#allocation12 + $0xa8] sm:$0xff]
        %v1850 = vld [vmem:[#allocation12 + $0xb0] sm:$0xff]
        %v1851 = vld [vmem:[#allocation12 + $0xb8] sm:$0xff]
        %v1852 = vld [vmem:[#allocation12 + $0xc0] sm:$0xff]
        %v1853 = vld [vmem:[#allocation12 + $0xc8] sm:$0xff]
        %v1854 = vld [vmem:[#allocation12 + $0xd0] sm:$0xff]
        %v1855 = vld [vmem:[#allocation12 + $0xd8] sm:$0xff]
        %v1856 = vld [vmem:[#allocation12 + $0xe0] sm:$0xff]
        %v1857 = vld [vmem:[#allocation12 + $0xe8] sm:$0xff]
        %v1858 = vld [vmem:[#allocation12 + $0xf0] sm:$0xff]
        %v1859 = vld [vmem:[#allocation12 + $0xf8] sm:$0xff]
        %v1860 = vld [vmem:[#allocation12 + $0x100] sm:$0xff]
        %v1861 = vld [vmem:[#allocation12 + $0x108] sm:$0xff]
        %v1862 = vld [vmem:[#allocation12 + $0x110] sm:$0xff]
        %v1863 = vld [vmem:[#allocation12 + $0x118] sm:$0xff]
        %v1864 = vld [vmem:[#allocation12 + $0x120] sm:$0xff]
        %v1865 = vld [vmem:[#allocation12 + $0x128] sm:$0xff]
        %v1866 = vld [vmem:[#allocation12 + $0x130] sm:$0xff]
        %v1867 = vld [vmem:[#allocation12 + $0x138] sm:$0xff]
        %v1868 = vld [vmem:[#allocation12 + $0x140] sm:$0xff]
        %v1869 = vld [vmem:[#allocation12 + $0x148] sm:$0xff]
        %v1870 = vld [vmem:[#allocation12 + $0x150] sm:$0xff]
        %v1871 = vld [vmem:[#allocation12 + $0x158] sm:$0xff]
        %v1872 = vld [vmem:[#allocation12 + $0x160] sm:$0xff]
        %v1873 = vld [vmem:[#allocation12 + $0x168] sm:$0xff]
        %v1874 = vld [vmem:[#allocation12 + $0x170] sm:$0xff]
        %v1875 = vld [vmem:[#allocation12 + $0x178] sm:$0xff]
        %v1876 = vld [vmem:[#allocation12 + $0x180] sm:$0xff]
        %v1877 = vld [vmem:[#allocation12 + $0x188] sm:$0xff]
        %v1878 = vld [vmem:[#allocation12 + $0x190] sm:$0xff]
        %v1879 = vld [vmem:[#allocation12 + $0x198] sm:$0xff]
        %v1880 = vld [vmem:[#allocation12 + $0x1a0] sm:$0xff]
        %v1881 = vld [vmem:[#allocation12 + $0x1a8] sm:$0xff]
        %v1882 = vld [vmem:[#allocation12 + $0x1b0] sm:$0xff]
        %v1883 = vld [vmem:[#allocation12 + $0x1b8] sm:$0xff]
        %v1884 = vld [vmem:[#allocation12 + $0x1c0] sm:$0xff]
        %v1885 = vld [vmem:[#allocation12 + $0x1c8] sm:$0xff]
        %v1886 = vld [vmem:[#allocation12 + $0x1d0] sm:$0xff]
        %v1887 = vld [vmem:[#allocation12 + $0x1d8] sm:$0xff]
        %v1888 = vld [vmem:[#allocation12 + $0x1e0] sm:$0xff]
        %v1889 = vld [vmem:[#allocation12 + $0x1e8] sm:$0xff]
        %v1890 = vld [vmem:[#allocation12 + $0x1f0] sm:$0xff]
        %v1891 = vld [vmem:[#allocation12 + $0x1f8] sm:$0xff]
        %v1892 = vld [vmem:[#allocation12 + $0x200] sm:$0xff]
        %v1893 = vld [vmem:[#allocation12 + $0x208] sm:$0xff]
        %v1894 = vld [vmem:[#allocation12 + $0x210] sm:$0xff]
        %v1895 = vld [vmem:[#allocation12 + $0x218] sm:$0xff]
        %v1896 = vld [vmem:[#allocation12 + $0x220] sm:$0xff]
        %v1897 = vld [vmem:[#allocation12 + $0x228] sm:$0xff]
        %v1898 = vld [vmem:[#allocation12 + $0x230] sm:$0xff]
        %v1899 = vld [vmem:[#allocation12 + $0x238] sm:$0xff]
        %v1900 = vld [vmem:[#allocation12 + $0x240] sm:$0xff]
        %v1901 = vld [vmem:[#allocation12 + $0x248] sm:$0xff]
        %v1902 = vld [vmem:[#allocation12 + $0x250] sm:$0xff]
        %v1903 = vld [vmem:[#allocation12 + $0x258] sm:$0xff]
        %v1904 = vld [vmem:[#allocation12 + $0x260] sm:$0xff]
        %v1905 = vld [vmem:[#allocation12 + $0x268] sm:$0xff]
        %v1906 = vld [vmem:[#allocation12 + $0x270] sm:$0xff]
        %v1907 = vld [vmem:[#allocation12 + $0x278] sm:$0xff]
        %v1908 = vld [vmem:[#allocation12 + $0x280] sm:$0xff]
        %v1909 = vld [vmem:[#allocation12 + $0x288] sm:$0xff]
        %v1910 = vld [vmem:[#allocation12 + $0x290] sm:$0xff]
        %v1911 = vld [vmem:[#allocation12 + $0x298] sm:$0xff]
        %v1912 = vld [vmem:[#allocation12 + $0x2a0] sm:$0xff]
        %v1913 = vld [vmem:[#allocation12 + $0x2a8] sm:$0xff]
        %v1914 = vld [vmem:[#allocation12 + $0x2b0] sm:$0xff]
        %v1915 = vld [vmem:[#allocation12 + $0x2b8] sm:$0xff]
        %v1916 = vld [vmem:[#allocation12 + $0x2c0] sm:$0xff]
        %v1917 = vld [vmem:[#allocation12 + $0x2c8] sm:$0xff]
        %v1918 = vld [vmem:[#allocation12 + $0x2d0] sm:$0xff]
        %v1919 = vld [vmem:[#allocation12 + $0x2d8] sm:$0xff]
        %v1920 = vld [vmem:[#allocation12 + $0x2e0] sm:$0xff]
        %v1921 = vld [vmem:[#allocation12 + $0x2e8] sm:$0xff]
        %v1922 = vld [vmem:[#allocation12 + $0x2f0] sm:$0xff]
        %v1923 = vld [vmem:[#allocation12 + $0x2f8] sm:$0xff]
        %v1924 = vld [vmem:[#allocation12 + $0x300] sm:$0xff]
        %v1925 = vld [vmem:[#allocation12 + $0x308] sm:$0xff]
        %v1926 = vld [vmem:[#allocation12 + $0x310] sm:$0xff]
        %v1927 = vld [vmem:[#allocation12 + $0x318] sm:$0xff]
        %v1928 = vld [vmem:[#allocation12 + $0x320] sm:$0xff]
        %v1929 = vld [vmem:[#allocation12 + $0x328] sm:$0xff]
        %v1930 = vld [vmem:[#allocation12 + $0x330] sm:$0xff]
        %v1931 = vld [vmem:[#allocation12 + $0x338] sm:$0xff]
        %v1932 = vld [vmem:[#allocation12 + $0x340] sm:$0xff]
        %v1933 = vld [vmem:[#allocation12 + $0x348] sm:$0xff]
        %v1934 = vld [vmem:[#allocation12 + $0x350] sm:$0xff]
        %v1935 = vld [vmem:[#allocation12 + $0x358] sm:$0xff]
        %v1936 = vld [vmem:[#allocation12 + $0x360] sm:$0xff]
        %v1937 = vld [vmem:[#allocation12 + $0x368] sm:$0xff]
        %v1938 = vld [vmem:[#allocation12 + $0x370] sm:$0xff]
        %v1939 = vld [vmem:[#allocation12 + $0x378] sm:$0xff]
        %v1940 = vld [vmem:[#allocation12 + $0x380] sm:$0xff]
        %v1941 = vld [vmem:[#allocation12 + $0x388] sm:$0xff]
        %v1942 = vld [vmem:[#allocation12 + $0x390] sm:$0xff]
        %v1943 = vld [vmem:[#allocation12 + $0x398] sm:$0xff]
        %v1944 = vld [vmem:[#allocation12 + $0x3a0] sm:$0xff]
        %v1945 = vld [vmem:[#allocation12 + $0x3a8] sm:$0xff]
        %v1946 = vld [vmem:[#allocation12 + $0x3b0] sm:$0xff]
        %v1947 = vld [vmem:[#allocation12 + $0x3b8] sm:$0xff]
        %v1948 = vld [vmem:[#allocation12 + $0x3c0] sm:$0xff]
        %v1949 = vld [vmem:[#allocation12 + $0x3c8] sm:$0xff]
        %v1950 = vld [vmem:[#allocation12 + $0x3d0] sm:$0xff]
        %v1951 = vld [vmem:[#allocation12 + $0x3d8] sm:$0xff]
        %v1952 = vld [vmem:[#allocation12 + $0x3e0] sm:$0xff]
        %v1953 = vld [vmem:[#allocation12 + $0x3e8] sm:$0xff]
        %v1954 = vld [vmem:[#allocation12 + $0x3f0] sm:$0xff]
        %v1955 = vld [vmem:[#allocation12 + $0x3f8] sm:$0xff]
        %v1956 = vld [vmem:[#allocation12 + $0x400] sm:$0xff]
        %v1957 = vld [vmem:[#allocation12 + $0x408] sm:$0xff]
        %v1958 = vld [vmem:[#allocation12 + $0x410] sm:$0xff]
        %v1959 = vld [vmem:[#allocation12 + $0x418] sm:$0xff]
        %v1960 = vld [vmem:[#allocation12 + $0x420] sm:$0xff]
        %v1961 = vld [vmem:[#allocation12 + $0x428] sm:$0xff]
        %v1962 = vld [vmem:[#allocation12 + $0x430] sm:$0xff]
        %v1963 = vld [vmem:[#allocation12 + $0x438] sm:$0xff]
        %v1964 = vld [vmem:[#allocation12 + $0x440] sm:$0xff]
        %v1965 = vld [vmem:[#allocation12 + $0x448] sm:$0xff]
        %v1966 = vld [vmem:[#allocation12 + $0x450] sm:$0xff]
        %v1967 = vld [vmem:[#allocation12 + $0x458] sm:$0xff]
        %v1968 = vld [vmem:[#allocation12 + $0x460] sm:$0xff]
        %v1969 = vld [vmem:[#allocation12 + $0x468] sm:$0xff]
        %v1970 = vld [vmem:[#allocation12 + $0x470] sm:$0xff]
        %v1971 = vld [vmem:[#allocation12 + $0x478] sm:$0xff]
        %v1972 = vld [vmem:[#allocation12 + $0x480] sm:$0xff]
        %v1973 = vld [vmem:[#allocation12 + $0x488] sm:$0xff]
        %v1974 = vld [vmem:[#allocation12 + $0x490] sm:$0xff]
        %v1975 = vld [vmem:[#allocation12 + $0x498] sm:$0xff]
        %v1976 = vld [vmem:[#allocation12 + $0x4a0] sm:$0xff]
        %v1977 = vld [vmem:[#allocation12 + $0x4a8] sm:$0xff]
        %v1978 = vld [vmem:[#allocation12 + $0x4b0] sm:$0xff]
        %v1979 = vld [vmem:[#allocation12 + $0x4b8] sm:$0xff]
        %v1980 = vld [vmem:[#allocation12 + $0x4c0] sm:$0xff]
        %v1981 = vld [vmem:[#allocation12 + $0x4c8] sm:$0xff]
        %v1982 = vld [vmem:[#allocation12 + $0x4d0] sm:$0xff]
        %v1983 = vld [vmem:[#allocation12 + $0x4d8] sm:$0xff]
        %v1984 = vld [vmem:[#allocation12 + $0x4e0] sm:$0xff]
        %v1985 = vld [vmem:[#allocation12 + $0x4e8] sm:$0xff]
        %v1986 = vld [vmem:[#allocation12 + $0x4f0] sm:$0xff]
        %v1987 = vld [vmem:[#allocation12 + $0x4f8] sm:$0xff]
        %v1988 = vld [vmem:[#allocation12 + $0x500] sm:$0xff]
        %v1989 = vld [vmem:[#allocation12 + $0x508] sm:$0xff]
        %v1990 = vld [vmem:[#allocation12 + $0x510] sm:$0xff]
        %v1991 = vld [vmem:[#allocation12 + $0x518] sm:$0xff]
        %v1992 = vld [vmem:[#allocation12 + $0x520] sm:$0xff]
        %v1993 = vld [vmem:[#allocation12 + $0x528] sm:$0xff]
        %v1994 = vld [vmem:[#allocation12 + $0x530] sm:$0xff]
        %v1995 = vld [vmem:[#allocation12 + $0x538] sm:$0xff]
        %v1996 = vld [vmem:[#allocation12 + $0x540] sm:$0xff]
        %v1997 = vld [vmem:[#allocation12 + $0x548] sm:$0xff]
        %v1998 = vld [vmem:[#allocation12 + $0x550] sm:$0xff]
        %v1999 = vld [vmem:[#allocation12 + $0x558] sm:$0xff]
        %v2000 = vld [vmem:[#allocation12 + $0x560] sm:$0xff]
        %v2001 = vld [vmem:[#allocation12 + $0x568] sm:$0xff]
        %v2002 = vld [vmem:[#allocation12 + $0x570] sm:$0xff]
        %v2003 = vld [vmem:[#allocation12 + $0x578] sm:$0xff]
        %v2004 = vld [vmem:[#allocation12 + $0x580] sm:$0xff]
        %v2005 = vld [vmem:[#allocation12 + $0x588] sm:$0xff]
        %v2006 = vld [vmem:[#allocation12 + $0x590] sm:$0xff]
        %v2007 = vld [vmem:[#allocation12 + $0x598] sm:$0xff]
        %v2008 = vld [vmem:[#allocation12 + $0x5a0] sm:$0xff]
        %v2009 = vld [vmem:[#allocation12 + $0x5a8] sm:$0xff]
        %v2010 = vld [vmem:[#allocation12 + $0x5b0] sm:$0xff]
        %v2011 = vld [vmem:[#allocation12 + $0x5b8] sm:$0xff]
        %v2012 = vld [vmem:[#allocation12 + $0x5c0] sm:$0xff]
        %v2013 = vld [vmem:[#allocation12 + $0x5c8] sm:$0xff]
        %v2014 = vld [vmem:[#allocation12 + $0x5d0] sm:$0xff]
        %v2015 = vld [vmem:[#allocation12 + $0x5d8] sm:$0xff]
        %v2016 = vld [vmem:[#allocation12 + $0x5e0] sm:$0xff]
        %v2017 = vld [vmem:[#allocation12 + $0x5e8] sm:$0xff]
        %v2018 = vld [vmem:[#allocation12 + $0x5f0] sm:$0xff]
        %v2019 = vld [vmem:[#allocation12 + $0x5f8] sm:$0xff]
        %v2020 = vld [vmem:[#allocation12 + $0x600] sm:$0xff]
        %v2021 = vld [vmem:[#allocation12 + $0x608] sm:$0xff]
        %v2022 = vld [vmem:[#allocation12 + $0x610] sm:$0xff]
        %v2023 = vld [vmem:[#allocation12 + $0x618] sm:$0xff]
        %v2024 = vld [vmem:[#allocation12 + $0x620] sm:$0xff]
        %v2025 = vld [vmem:[#allocation12 + $0x628] sm:$0xff]
        %v2026 = vld [vmem:[#allocation12 + $0x630] sm:$0xff]
        %v2027 = vld [vmem:[#allocation12 + $0x638] sm:$0xff]
        %v2028 = vld [vmem:[#allocation12 + $0x640] sm:$0xff]
        %v2029 = vld [vmem:[#allocation12 + $0x648] sm:$0xff]
        %v2030 = vld [vmem:[#allocation12 + $0x650] sm:$0xff]
        %v2031 = vld [vmem:[#allocation12 + $0x658] sm:$0xff]
        %v2032 = vld [vmem:[#allocation12 + $0x660] sm:$0xff]
        %v2033 = vld [vmem:[#allocation12 + $0x668] sm:$0xff]
        %v2034 = vld [vmem:[#allocation12 + $0x670] sm:$0xff]
        %v2035 = vld [vmem:[#allocation12 + $0x678] sm:$0xff]
        %v2036 = vld [vmem:[#allocation12 + $0x680] sm:$0xff]
        %v2037 = vld [vmem:[#allocation12 + $0x688] sm:$0xff]
        %v2038 = vld [vmem:[#allocation12 + $0x690] sm:$0xff]
        %v2039 = vld [vmem:[#allocation12 + $0x698] sm:$0xff]
        %v2040 = vld [vmem:[#allocation12 + $0x6a0] sm:$0xff]
        %v2041 = vld [vmem:[#allocation12 + $0x6a8] sm:$0xff]
        %v2042 = vld [vmem:[#allocation12 + $0x6b0] sm:$0xff]
        %v2043 = vld [vmem:[#allocation12 + $0x6b8] sm:$0xff]
        %v2044 = vld [vmem:[#allocation12 + $0x6c0] sm:$0xff]
        %v2045 = vld [vmem:[#allocation12 + $0x6c8] sm:$0xff]
        %v2046 = vld [vmem:[#allocation12 + $0x6d0] sm:$0xff]
        %v2047 = vld [vmem:[#allocation12 + $0x6d8] sm:$0xff]
        %v2048 = vld [vmem:[#allocation12 + $0x6e0] sm:$0xff]
        %v2049 = vld [vmem:[#allocation12 + $0x6e8] sm:$0xff]
        %v2050 = vld [vmem:[#allocation12 + $0x6f0] sm:$0xff]
        %v2051 = vld [vmem:[#allocation12 + $0x6f8] sm:$0xff]
        %v2052 = vld [vmem:[#allocation12 + $0x700] sm:$0xff]
        %v2053 = vld [vmem:[#allocation12 + $0x708] sm:$0xff]
        %v2054 = vld [vmem:[#allocation12 + $0x710] sm:$0xff]
        %v2055 = vld [vmem:[#allocation12 + $0x718] sm:$0xff]
        %v2056 = vld [vmem:[#allocation12 + $0x720] sm:$0xff]
        %v2057 = vld [vmem:[#allocation12 + $0x728] sm:$0xff]
        %v2058 = vld [vmem:[#allocation12 + $0x730] sm:$0xff]
        %v2059 = vld [vmem:[#allocation12 + $0x738] sm:$0xff]
        %v2060 = vld [vmem:[#allocation12 + $0x740] sm:$0xff]
        %v2061 = vld [vmem:[#allocation12 + $0x748] sm:$0xff]
        %v2062 = vld [vmem:[#allocation12 + $0x750] sm:$0xff]
        %v2063 = vld [vmem:[#allocation12 + $0x758] sm:$0xff]
        %v2064 = vld [vmem:[#allocation12 + $0x760] sm:$0xff]
        %v2065 = vld [vmem:[#allocation12 + $0x768] sm:$0xff]
        %v2066 = vld [vmem:[#allocation12 + $0x770] sm:$0xff]
        %v2067 = vld [vmem:[#allocation12 + $0x778] sm:$0xff]
        %v2068 = vld [vmem:[#allocation12 + $0x780] sm:$0xff]
        %v2069 = vld [vmem:[#allocation12 + $0x788] sm:$0xff]
        %v2070 = vld [vmem:[#allocation12 + $0x790] sm:$0xff]
        %v2071 = vld [vmem:[#allocation12 + $0x798] sm:$0xff]
        %v2072 = vld [vmem:[#allocation12 + $0x7a0] sm:$0xff]
        %v2073 = vld [vmem:[#allocation12 + $0x7a8] sm:$0xff]
        %v2074 = vld [vmem:[#allocation12 + $0x7b0] sm:$0xff]
        %v2075 = vld [vmem:[#allocation12 + $0x7b8] sm:$0xff]
        %v2076 = vld [vmem:[#allocation12 + $0x7c0] sm:$0xff]
        %v2077 = vld [vmem:[#allocation12 + $0x7c8] sm:$0xff]
        %v2078 = vld [vmem:[#allocation12 + $0x7d0] sm:$0xff]
        %v2079 = vld [vmem:[#allocation12 + $0x7d8] sm:$0xff]
        %v2080 = vld [vmem:[#allocation12 + $0x7e0] sm:$0xff]
        %v2081 = vld [vmem:[#allocation12 + $0x7e8] sm:$0xff]
        %v2082 = vld [vmem:[#allocation12 + $0x7f0] sm:$0xff]
        %v2083 = vld [vmem:[#allocation12 + $0x7f8] sm:$0xff]
        %v2084 = vld [vmem:[%s6] sm:$0xff]
        %v2085 = vld [vmem:[#allocation14] sm:$0xff]
        %v2086 = vld [vmem:[#allocation14 + $0x8] sm:$0xff]
        %v2087 = vld [vmem:[#allocation14 + $0x10] sm:$0xff]
        %v2088 = vld [vmem:[#allocation14 + $0x18] sm:$0xff]
        %v2089 = vld [vmem:[#allocation14 + $0x20] sm:$0xff]
        %v2090 = vld [vmem:[#allocation14 + $0x28] sm:$0xff]
        %v2091 = vld [vmem:[#allocation14 + $0x30] sm:$0xff]
        %v2092 = vld [vmem:[#allocation14 + $0x38] sm:$0xff]
        %v2093 = vld [vmem:[#allocation14 + $0x40] sm:$0xff]
        %v2094 = vld [vmem:[#allocation14 + $0x48] sm:$0xff]
        %v2095 = vld [vmem:[#allocation14 + $0x50] sm:$0xff]
        %v2096 = vld [vmem:[#allocation14 + $0x58] sm:$0xff]
        %v2097 = vld [vmem:[#allocation14 + $0x60] sm:$0xff]
        %v2098 = vld [vmem:[#allocation14 + $0x68] sm:$0xff]
        %v2099 = vld [vmem:[#allocation14 + $0x70] sm:$0xff]
        %v2100 = vld [vmem:[#allocation14 + $0x78] sm:$0xff]
        %v2101 = vld [vmem:[#allocation14 + $0x80] sm:$0xff]
        %v2102 = vld [vmem:[#allocation14 + $0x88] sm:$0xff]
        %v2103 = vld [vmem:[#allocation14 + $0x90] sm:$0xff]
        %v2104 = vld [vmem:[#allocation14 + $0x98] sm:$0xff]
        %v2105 = vld [vmem:[#allocation14 + $0xa0] sm:$0xff]
        %v2106 = vld [vmem:[#allocation14 + $0xa8] sm:$0xff]
        %v2107 = vld [vmem:[#allocation14 + $0xb0] sm:$0xff]
        %v2108 = vld [vmem:[#allocation14 + $0xb8] sm:$0xff]
        %v2109 = vld [vmem:[#allocation14 + $0xc0] sm:$0xff]
        %v2110 = vld [vmem:[#allocation14 + $0xc8] sm:$0xff]
        %v2111 = vld [vmem:[#allocation14 + $0xd0] sm:$0xff]
        %v2112 = vld [vmem:[#allocation14 + $0xd8] sm:$0xff]
        %v2113 = vld [vmem:[#allocation14 + $0xe0] sm:$0xff]
        %v2114 = vld [vmem:[#allocation14 + $0xe8] sm:$0xff]
        %v2115 = vld [vmem:[#allocation14 + $0xf0] sm:$0xff]
        %v2116 = vld [vmem:[#allocation14 + $0xf8] sm:$0xff]
        %v2117 = vld [vmem:[#allocation14 + $0x100] sm:$0xff]
        %v2118 = vld [vmem:[#allocation14 + $0x108] sm:$0xff]
        %v2119 = vld [vmem:[#allocation14 + $0x110] sm:$0xff]
        %v2120 = vld [vmem:[#allocation14 + $0x118] sm:$0xff]
        %v2121 = vld [vmem:[#allocation14 + $0x120] sm:$0xff]
        %v2122 = vld [vmem:[#allocation14 + $0x128] sm:$0xff]
        %v2123 = vld [vmem:[#allocation14 + $0x130] sm:$0xff]
        %v2124 = vld [vmem:[#allocation14 + $0x138] sm:$0xff]
        %v2125 = vld [vmem:[#allocation14 + $0x140] sm:$0xff]
        %v2126 = vld [vmem:[#allocation14 + $0x148] sm:$0xff]
        %v2127 = vld [vmem:[#allocation14 + $0x150] sm:$0xff]
        %v2128 = vld [vmem:[#allocation14 + $0x158] sm:$0xff]
        %v2129 = vld [vmem:[#allocation14 + $0x160] sm:$0xff]
        %v2130 = vld [vmem:[#allocation14 + $0x168] sm:$0xff]
        %v2131 = vld [vmem:[#allocation14 + $0x170] sm:$0xff]
        %v2132 = vld [vmem:[#allocation14 + $0x178] sm:$0xff]
        %v2133 = vld [vmem:[#allocation14 + $0x180] sm:$0xff]
        %v2134 = vld [vmem:[#allocation14 + $0x188] sm:$0xff]
        %v2135 = vld [vmem:[#allocation14 + $0x190] sm:$0xff]
        %v2136 = vld [vmem:[#allocation14 + $0x198] sm:$0xff]
        %v2137 = vld [vmem:[#allocation14 + $0x1a0] sm:$0xff]
        %v2138 = vld [vmem:[#allocation14 + $0x1a8] sm:$0xff]
        %v2139 = vld [vmem:[#allocation14 + $0x1b0] sm:$0xff]
        %v2140 = vld [vmem:[#allocation14 + $0x1b8] sm:$0xff]
        %v2141 = vld [vmem:[#allocation14 + $0x1c0] sm:$0xff]
        %v2142 = vld [vmem:[#allocation14 + $0x1c8] sm:$0xff]
        %v2143 = vld [vmem:[#allocation14 + $0x1d0] sm:$0xff]
        %v2144 = vld [vmem:[#allocation14 + $0x1d8] sm:$0xff]
        %v2145 = vld [vmem:[#allocation14 + $0x1e0] sm:$0xff]
        %v2146 = vld [vmem:[#allocation14 + $0x1e8] sm:$0xff]
        %v2147 = vld [vmem:[#allocation14 + $0x1f0] sm:$0xff]
        %v2148 = vld [vmem:[#allocation14 + $0x1f8] sm:$0xff]
        %v2149 = vld [vmem:[#allocation15] sm:$0xff]
        %v2150 = vld [vmem:[#allocation15 + $0x8] sm:$0xff]
        %v2151 = vld [vmem:[#allocation15 + $0x10] sm:$0xff]
        %v2152 = vld [vmem:[#allocation15 + $0x18] sm:$0xff]
        %v2153 = vld [vmem:[#allocation15 + $0x20] sm:$0xff]
        %v2154 = vld [vmem:[#allocation15 + $0x28] sm:$0xff]
        %v2155 = vld [vmem:[#allocation15 + $0x30] sm:$0xff]
        %v2156 = vld [vmem:[#allocation15 + $0x38] sm:$0xff]
        %v2157 = vld [vmem:[#allocation15 + $0x40] sm:$0xff]
        %v2158 = vld [vmem:[#allocation15 + $0x48] sm:$0xff]
        %v2159 = vld [vmem:[#allocation15 + $0x50] sm:$0xff]
        %v2160 = vld [vmem:[#allocation15 + $0x58] sm:$0xff]
        %v2161 = vld [vmem:[#allocation15 + $0x60] sm:$0xff]
        %v2162 = vld [vmem:[#allocation15 + $0x68] sm:$0xff]
        %v2163 = vld [vmem:[#allocation15 + $0x70] sm:$0xff]
        %v2164 = vld [vmem:[#allocation15 + $0x78] sm:$0xff]
        %v2165 = vld [vmem:[#allocation15 + $0x80] sm:$0xff]
        %v2166 = vld [vmem:[#allocation15 + $0x88] sm:$0xff]
        %v2167 = vld [vmem:[#allocation15 + $0x90] sm:$0xff]
        %v2168 = vld [vmem:[#allocation15 + $0x98] sm:$0xff]
        %v2169 = vld [vmem:[#allocation15 + $0xa0] sm:$0xff]
        %v2170 = vld [vmem:[#allocation15 + $0xa8] sm:$0xff]
        %v2171 = vld [vmem:[#allocation15 + $0xb0] sm:$0xff]
        %v2172 = vld [vmem:[#allocation15 + $0xb8] sm:$0xff]
        %v2173 = vld [vmem:[#allocation15 + $0xc0] sm:$0xff]
        %v2174 = vld [vmem:[#allocation15 + $0xc8] sm:$0xff]
        %v2175 = vld [vmem:[#allocation15 + $0xd0] sm:$0xff]
        %v2176 = vld [vmem:[#allocation15 + $0xd8] sm:$0xff]
        %v2177 = vld [vmem:[#allocation15 + $0xe0] sm:$0xff]
        %v2178 = vld [vmem:[#allocation15 + $0xe8] sm:$0xff]
        %v2179 = vld [vmem:[#allocation15 + $0xf0] sm:$0xff]
        %v2180 = vld [vmem:[#allocation15 + $0xf8] sm:$0xff]
        %v2181 = vld [vmem:[#allocation15 + $0x100] sm:$0xff]
        %v2182 = vld [vmem:[#allocation15 + $0x108] sm:$0xff]
        %v2183 = vld [vmem:[#allocation15 + $0x110] sm:$0xff]
        %v2184 = vld [vmem:[#allocation15 + $0x118] sm:$0xff]
        %v2185 = vld [vmem:[#allocation15 + $0x120] sm:$0xff]
        %v2186 = vld [vmem:[#allocation15 + $0x128] sm:$0xff]
        %v2187 = vld [vmem:[#allocation15 + $0x130] sm:$0xff]
        %v2188 = vld [vmem:[#allocation15 + $0x138] sm:$0xff]
        %v2189 = vld [vmem:[#allocation15 + $0x140] sm:$0xff]
        %v2190 = vld [vmem:[#allocation15 + $0x148] sm:$0xff]
        %v2191 = vld [vmem:[#allocation15 + $0x150] sm:$0xff]
        %v2192 = vld [vmem:[#allocation15 + $0x158] sm:$0xff]
        %v2193 = vld [vmem:[#allocation15 + $0x160] sm:$0xff]
        %v2194 = vld [vmem:[#allocation15 + $0x168] sm:$0xff]
        %v2195 = vld [vmem:[#allocation15 + $0x170] sm:$0xff]
        %v2196 = vld [vmem:[#allocation15 + $0x178] sm:$0xff]
        %v2197 = vld [vmem:[#allocation15 + $0x180] sm:$0xff]
        %v2198 = vld [vmem:[#allocation15 + $0x188] sm:$0xff]
        %v2199 = vld [vmem:[#allocation15 + $0x190] sm:$0xff]
        %v2200 = vld [vmem:[#allocation15 + $0x198] sm:$0xff]
        %v2201 = vld [vmem:[#allocation15 + $0x1a0] sm:$0xff]
        %v2202 = vld [vmem:[#allocation15 + $0x1a8] sm:$0xff]
        %v2203 = vld [vmem:[#allocation15 + $0x1b0] sm:$0xff]
        %v2204 = vld [vmem:[#allocation15 + $0x1b8] sm:$0xff]
        %v2205 = vld [vmem:[#allocation15 + $0x1c0] sm:$0xff]
        %v2206 = vld [vmem:[#allocation15 + $0x1c8] sm:$0xff]
        %v2207 = vld [vmem:[#allocation15 + $0x1d0] sm:$0xff]
        %v2208 = vld [vmem:[#allocation15 + $0x1d8] sm:$0xff]
        %v2209 = vld [vmem:[#allocation15 + $0x1e0] sm:$0xff]
        %v2210 = vld [vmem:[#allocation15 + $0x1e8] sm:$0xff]
        %v2211 = vld [vmem:[#allocation15 + $0x1f0] sm:$0xff]
        %v2212 = vld [vmem:[#allocation15 + $0x1f8] sm:$0xff]
        %v2213 = vld [vmem:[#allocation2] sm:$0xff]
        %v2214 = vld [vmem:[#allocation2 + $0x8] sm:$0xff]
        %v2215 = vld [vmem:[#allocation2 + $0x10] sm:$0xff]
        %v2216 = vld [vmem:[#allocation2 + $0x18] sm:$0xff]
        %v2218 = vlaneseq
        %v2219 = vshrl.u32 %v2218, 7
        %v2220 = vsub.s32 0, %v2219
        %v2221 = vrot.slane %v2084, %v2220
        %v2222 = vlaneseq
        %v2223 = vshrl.u32 %v2222, 7
        %v2224 = vsub.s32 1, %v2223
        %v2225 = vrot.slane %v2084, %v2224
        %v2226 = vlaneseq
        %v2227 = vshrl.u32 %v2226, 7
        %v2228 = vsub.s32 2, %v2227
        %v2229 = vrot.slane %v2084, %v2228
        %v2230 = vlaneseq
        %v2231 = vshrl.u32 %v2230, 7
        %v2232 = vsub.s32 3, %v2231
        %v2233 = vrot.slane %v2084, %v2232
        %v2234 = vlaneseq
        %v2235 = vshrl.u32 %v2234, 7
        %v2236 = vsub.s32 4, %v2235
        %v2237 = vrot.slane %v2084, %v2236
        %v2238 = vlaneseq
        %v2239 = vshrl.u32 %v2238, 7
        %v2240 = vsub.s32 5, %v2239
        %v2241 = vrot.slane %v2084, %v2240
        %v2242 = vlaneseq
        %v2243 = vshrl.u32 %v2242, 7
        %v2244 = vsub.s32 6, %v2243
        %v2245 = vrot.slane %v2084, %v2244
        %v2246 = vlaneseq
        %v2247 = vshrl.u32 %v2246, 7
        %v2248 = vsub.s32 7, %v2247
        %v2249 = vrot.slane %v2084, %v2248
        %2258 = vmatprep.subr.mxu0 %v1949
        %2259 = vmatpush1.msra.mxu0 %v1948
        %2260 = vmatprep.subr.mxu0 %v1941
        %2261 = vmatpush1.msra.mxu0 %v1940
        %2262 = vmatprep.subr.mxu0 %v1933
        %2263 = vmatpush1.msra.mxu0 %v1932
        %2264 = vmatprep.subr.mxu0 %v1925
        %2265 = vmatpush1.msra.mxu0 %v1924
        %2266 = vmatprep.subr.mxu0 %v1917
        %2267 = vmatpush1.msra.mxu0 %v1916
        %2268 = vmatprep.subr.mxu0 %v1909
        %2269 = vmatpush1.msra.mxu0 %v1908
        %2270 = vmatprep.subr.mxu0 %v1901
        %2271 = vmatpush1.msra.mxu0 %v1900
        %2272 = vmatprep.subr.mxu0 %v1893
        %2273 = vmatpush1.msra.mxu0 %v1892
        %2274 = vmatprep.subr.mxu0 %v1885
        %2275 = vmatpush1.msra.mxu0 %v1884
        %2276 = vmatprep.subr.mxu0 %v1877
        %2277 = vmatpush1.msra.mxu0 %v1876
        %2278 = vmatprep.subr.mxu0 %v1869
        %2279 = vmatpush1.msra.mxu0 %v1868
        %2280 = vmatprep.subr.mxu0 %v1861
        %2281 = vmatpush1.msra.mxu0 %v1860
        %2282 = vmatprep.subr.mxu0 %v1853
        %2283 = vmatpush1.msra.mxu0 %v1852
        %2284 = vmatprep.subr.mxu0 %v1845
        %2285 = vmatpush1.msra.mxu0 %v1844
        %2286 = vmatprep.subr.mxu0 %v1837
        %2287 = vmatpush1.msra.mxu0 %v1836
        %2288 = vmatprep.subr.mxu0 %v1829
        %2289 = vmatpush1.msra.mxu0 %v1828
        %2290 = vmatprep.subr.mxu0 %v2077
        %2291 = vmatpush2.msra.mxu0 %v2076
        %2292 = vmatprep.subr.mxu0 %v2069
        %2293 = vmatpush2.msra.mxu0 %v2068
        %2294 = vmatprep.subr.mxu0 %v2061
        %2295 = vmatpush2.msra.mxu0 %v2060
        %2296 = vmatprep.subr.mxu0 %v2053
        %2297 = vmatpush2.msra.mxu0 %v2052
        %2298 = vmatprep.subr.mxu0 %v2045
        %2299 = vmatpush2.msra.mxu0 %v2044
        %2300 = vmatprep.subr.mxu0 %v2037
        %2301 = vmatpush2.msra.mxu0 %v2036
        %2302 = vmatprep.subr.mxu0 %v2029
        %2303 = vmatpush2.msra.mxu0 %v2028
        %2304 = vmatprep.subr.mxu0 %v2021
        %2305 = vmatpush2.msra.mxu0 %v2020
        %2306 = vmatprep.subr.mxu0 %v2013
        %2307 = vmatpush2.msra.mxu0 %v2012
        %2308 = vmatprep.subr.mxu0 %v2005
        %2309 = vmatpush2.msra.mxu0 %v2004
        %2310 = vmatprep.subr.mxu0 %v1997
        %2311 = vmatpush2.msra.mxu0 %v1996
        %2312 = vmatprep.subr.mxu0 %v1989
        %2313 = vmatpush2.msra.mxu0 %v1988
        %2314 = vmatprep.subr.mxu0 %v1981
        %2315 = vmatpush2.msra.mxu0 %v1980
        %2316 = vmatprep.subr.mxu0 %v1973
        %2317 = vmatpush2.msra.mxu0 %v1972
        %2318 = vmatprep.subr.mxu0 %v1965
        %2319 = vmatpush2.msra.mxu0 %v1964
        %2320 = vmatprep.subr.mxu0 %v1957
        %2321 = vmatpush2.msra.mxu0 %v1956
        %2322 = vmatprep.mubr.f32.mxu0 %v2214
        %2323 = vmatmul.mubr.f32.gmra.mxu0 %v2213
        %v2324 = vpop.f32.mrf.mxu0
        %v2325 = vadd.f32 %v2221, %v2324
        %v2326 = vpop.f32.mrf.mxu0
        %v2327 = vadd.f32 %v2225, %v2326
        %2328 = vmatprep.mubr.f32.mxu0 %v2216
        %2329 = vmatmul.mubr.f32.gmra.mxu0 %v2215
        %v2330 = vpop.f32.mrf.mxu0
        %v2331 = vadd.f32 %v2221, %v2330
        %v2332 = vpop.f32.mrf.mxu0
        %v2333 = vadd.f32 %v2225, %v2332
        %2334 = vdwg.mxu0
        %2335 = vmatprep.subr.mxu0 %v1951
        %2336 = vmatpush1.msra.mxu0 %v1950
        %2337 = vmatprep.subr.mxu0 %v1943
        %2338 = vmatpush1.msra.mxu0 %v1942
        %2339 = vmatprep.subr.mxu0 %v1935
        %2340 = vmatpush1.msra.mxu0 %v1934
        %2341 = vmatprep.subr.mxu0 %v1927
        %2342 = vmatpush1.msra.mxu0 %v1926
        %2343 = vmatprep.subr.mxu0 %v1919
        %2344 = vmatpush1.msra.mxu0 %v1918
        %2345 = vmatprep.subr.mxu0 %v1911
        %2346 = vmatpush1.msra.mxu0 %v1910
        %2347 = vmatprep.subr.mxu0 %v1903
        %2348 = vmatpush1.msra.mxu0 %v1902
        %2349 = vmatprep.subr.mxu0 %v1895
        %2350 = vmatpush1.msra.mxu0 %v1894
        %2351 = vmatprep.subr.mxu0 %v1887
        %2352 = vmatpush1.msra.mxu0 %v1886
        %2353 = vmatprep.subr.mxu0 %v1879
        %2354 = vmatpush1.msra.mxu0 %v1878
        %2355 = vmatprep.subr.mxu0 %v1871
        %2356 = vmatpush1.msra.mxu0 %v1870
        %2357 = vmatprep.subr.mxu0 %v1863
        %2358 = vmatpush1.msra.mxu0 %v1862
        %2359 = vmatprep.subr.mxu0 %v1855
        %2360 = vmatpush1.msra.mxu0 %v1854
        %2361 = vmatprep.subr.mxu0 %v1847
        %2362 = vmatpush1.msra.mxu0 %v1846
        %2363 = vmatprep.subr.mxu0 %v1839
        %2364 = vmatpush1.msra.mxu0 %v1838
        %2365 = vmatprep.subr.mxu0 %v1831
        %2366 = vmatpush1.msra.mxu0 %v1830
        %2367 = vmatprep.subr.mxu0 %v2079
        %2368 = vmatpush2.msra.mxu0 %v2078
        %2369 = vmatprep.subr.mxu0 %v2071
        %2370 = vmatpush2.msra.mxu0 %v2070
        %2371 = vmatprep.subr.mxu0 %v2063
        %2372 = vmatpush2.msra.mxu0 %v2062
        %2373 = vmatprep.subr.mxu0 %v2055
        %2374 = vmatpush2.msra.mxu0 %v2054
        %2375 = vmatprep.subr.mxu0 %v2047
        %2376 = vmatpush2.msra.mxu0 %v2046
        %2377 = vmatprep.subr.mxu0 %v2039
        %2378 = vmatpush2.msra.mxu0 %v2038
        %2379 = vmatprep.subr.mxu0 %v2031
        %2380 = vmatpush2.msra.mxu0 %v2030
        %2381 = vmatprep.subr.mxu0 %v2023
        %2382 = vmatpush2.msra.mxu0 %v2022
        %2383 = vmatprep.subr.mxu0 %v2015
        %2384 = vmatpush2.msra.mxu0 %v2014
        %2385 = vmatprep.subr.mxu0 %v2007
        %2386 = vmatpush2.msra.mxu0 %v2006
        %2387 = vmatprep.subr.mxu0 %v1999
        %2388 = vmatpush2.msra.mxu0 %v1998
        %2389 = vmatprep.subr.mxu0 %v1991
        %2390 = vmatpush2.msra.mxu0 %v1990
        %2391 = vmatprep.subr.mxu0 %v1983
        %2392 = vmatpush2.msra.mxu0 %v1982
        %2393 = vmatprep.subr.mxu0 %v1975
        %2394 = vmatpush2.msra.mxu0 %v1974
        %2395 = vmatprep.subr.mxu0 %v1967
        %2396 = vmatpush2.msra.mxu0 %v1966
        %2397 = vmatprep.subr.mxu0 %v1959
        %2398 = vmatpush2.msra.mxu0 %v1958
        %2399 = vmatprep.mubr.f32.mxu0 %v2214
        %2400 = vmatmul.mubr.f32.gmra.mxu0 %v2213
        %v2401 = vpop.f32.mrf.mxu0
        %v2402 = vadd.f32 %v2229, %v2401
        %v2403 = vpop.f32.mrf.mxu0
        %v2404 = vadd.f32 %v2233, %v2403
        %2405 = vmatprep.mubr.f32.mxu0 %v2216
        %2406 = vmatmul.mubr.f32.gmra.mxu0 %v2215
        %v2407 = vpop.f32.mrf.mxu0
        %v2408 = vadd.f32 %v2229, %v2407
        %v2409 = vpop.f32.mrf.mxu0
        %v2410 = vadd.f32 %v2233, %v2409
        %2411 = vdwg.mxu0
        %2412 = vmatprep.subr.mxu0 %v1953
        %2413 = vmatpush1.msra.mxu0 %v1952
        %2414 = vmatprep.subr.mxu0 %v1945
        %2415 = vmatpush1.msra.mxu0 %v1944
        %2416 = vmatprep.subr.mxu0 %v1937
        %2417 = vmatpush1.msra.mxu0 %v1936
        %2418 = vmatprep.subr.mxu0 %v1929
        %2419 = vmatpush1.msra.mxu0 %v1928
        %2420 = vmatprep.subr.mxu0 %v1921
        %2421 = vmatpush1.msra.mxu0 %v1920
        %2422 = vmatprep.subr.mxu0 %v1913
        %2423 = vmatpush1.msra.mxu0 %v1912
        %2424 = vmatprep.subr.mxu0 %v1905
        %2425 = vmatpush1.msra.mxu0 %v1904
        %2426 = vmatprep.subr.mxu0 %v1897
        %2427 = vmatpush1.msra.mxu0 %v1896
        %2428 = vmatprep.subr.mxu0 %v1889
        %2429 = vmatpush1.msra.mxu0 %v1888
        %2430 = vmatprep.subr.mxu0 %v1881
        %2431 = vmatpush1.msra.mxu0 %v1880
        %2432 = vmatprep.subr.mxu0 %v1873
        %2433 = vmatpush1.msra.mxu0 %v1872
        %2434 = vmatprep.subr.mxu0 %v1865
        %2435 = vmatpush1.msra.mxu0 %v1864
        %2436 = vmatprep.subr.mxu0 %v1857
        %2437 = vmatpush1.msra.mxu0 %v1856
        %2438 = vmatprep.subr.mxu0 %v1849
        %2439 = vmatpush1.msra.mxu0 %v1848
        %2440 = vmatprep.subr.mxu0 %v1841
        %2441 = vmatpush1.msra.mxu0 %v1840
        %2442 = vmatprep.subr.mxu0 %v1833
        %2443 = vmatpush1.msra.mxu0 %v1832
        %2444 = vmatprep.subr.mxu0 %v2081
        %2445 = vmatpush2.msra.mxu0 %v2080
        %2446 = vmatprep.subr.mxu0 %v2073
        %2447 = vmatpush2.msra.mxu0 %v2072
        %2448 = vmatprep.subr.mxu0 %v2065
        %2449 = vmatpush2.msra.mxu0 %v2064
        %2450 = vmatprep.subr.mxu0 %v2057
        %2451 = vmatpush2.msra.mxu0 %v2056
        %2452 = vmatprep.subr.mxu0 %v2049
        %2453 = vmatpush2.msra.mxu0 %v2048
        %2454 = vmatprep.subr.mxu0 %v2041
        %2455 = vmatpush2.msra.mxu0 %v2040
        %2456 = vmatprep.subr.mxu0 %v2033
        %2457 = vmatpush2.msra.mxu0 %v2032
        %2458 = vmatprep.subr.mxu0 %v2025
        %2459 = vmatpush2.msra.mxu0 %v2024
        %2460 = vmatprep.subr.mxu0 %v2017
        %2461 = vmatpush2.msra.mxu0 %v2016
        %2462 = vmatprep.subr.mxu0 %v2009
        %2463 = vmatpush2.msra.mxu0 %v2008
        %2464 = vmatprep.subr.mxu0 %v2001
        %2465 = vmatpush2.msra.mxu0 %v2000
        %2466 = vmatprep.subr.mxu0 %v1993
        %2467 = vmatpush2.msra.mxu0 %v1992
        %2468 = vmatprep.subr.mxu0 %v1985
        %2469 = vmatpush2.msra.mxu0 %v1984
        %2470 = vmatprep.subr.mxu0 %v1977
        %2471 = vmatpush2.msra.mxu0 %v1976
        %2472 = vmatprep.subr.mxu0 %v1969
        %2473 = vmatpush2.msra.mxu0 %v1968
        %2474 = vmatprep.subr.mxu0 %v1961
        %2475 = vmatpush2.msra.mxu0 %v1960
        %2476 = vmatprep.mubr.f32.mxu0 %v2214
        %2477 = vmatmul.mubr.f32.gmra.mxu0 %v2213
        %v2478 = vpop.f32.mrf.mxu0
        %v2479 = vadd.f32 %v2237, %v2478
        %v2480 = vpop.f32.mrf.mxu0
        %v2481 = vadd.f32 %v2241, %v2480
        %2482 = vmatprep.mubr.f32.mxu0 %v2216
        %2483 = vmatmul.mubr.f32.gmra.mxu0 %v2215
        %v2484 = vpop.f32.mrf.mxu0
        %v2485 = vadd.f32 %v2237, %v2484
        %v2486 = vpop.f32.mrf.mxu0
        %v2487 = vadd.f32 %v2241, %v2486
        %2488 = vdwg.mxu0
        %2489 = vmatprep.subr.mxu0 %v1955
        %2490 = vmatpush1.msra.mxu0 %v1954
        %2491 = vmatprep.subr.mxu0 %v1947
        %2492 = vmatpush1.msra.mxu0 %v1946
        %2493 = vmatprep.subr.mxu0 %v1939
        %2494 = vmatpush1.msra.mxu0 %v1938
        %2495 = vmatprep.subr.mxu0 %v1931
        %2496 = vmatpush1.msra.mxu0 %v1930
        %2497 = vmatprep.subr.mxu0 %v1923
        %2498 = vmatpush1.msra.mxu0 %v1922
        %2499 = vmatprep.subr.mxu0 %v1915
        %2500 = vmatpush1.msra.mxu0 %v1914
        %2501 = vmatprep.subr.mxu0 %v1907
        %2502 = vmatpush1.msra.mxu0 %v1906
        %2503 = vmatprep.subr.mxu0 %v1899
        %2504 = vmatpush1.msra.mxu0 %v1898
        %2505 = vmatprep.subr.mxu0 %v1891
        %2506 = vmatpush1.msra.mxu0 %v1890
        %2507 = vmatprep.subr.mxu0 %v1883
        %2508 = vmatpush1.msra.mxu0 %v1882
        %2509 = vmatprep.subr.mxu0 %v1875
        %2510 = vmatpush1.msra.mxu0 %v1874
        %2511 = vmatprep.subr.mxu0 %v1867
        %2512 = vmatpush1.msra.mxu0 %v1866
        %2513 = vmatprep.subr.mxu0 %v1859
        %2514 = vmatpush1.msra.mxu0 %v1858
        %2515 = vmatprep.subr.mxu0 %v1851
        %2516 = vmatpush1.msra.mxu0 %v1850
        %2517 = vmatprep.subr.mxu0 %v1843
        %2518 = vmatpush1.msra.mxu0 %v1842
        %2519 = vmatprep.subr.mxu0 %v1835
        %2520 = vmatpush1.msra.mxu0 %v1834
        %2521 = vmatprep.subr.mxu0 %v2083
        %2522 = vmatpush2.msra.mxu0 %v2082
        %2523 = vmatprep.subr.mxu0 %v2075
        %2524 = vmatpush2.msra.mxu0 %v2074
        %2525 = vmatprep.subr.mxu0 %v2067
        %2526 = vmatpush2.msra.mxu0 %v2066
        %2527 = vmatprep.subr.mxu0 %v2059
        %2528 = vmatpush2.msra.mxu0 %v2058
        %2529 = vmatprep.subr.mxu0 %v2051
        %2530 = vmatpush2.msra.mxu0 %v2050
        %2531 = vmatprep.subr.mxu0 %v2043
        %2532 = vmatpush2.msra.mxu0 %v2042
        %2533 = vmatprep.subr.mxu0 %v2035
        %2534 = vmatpush2.msra.mxu0 %v2034
        %2535 = vmatprep.subr.mxu0 %v2027
        %2536 = vmatpush2.msra.mxu0 %v2026
        %2537 = vmatprep.subr.mxu0 %v2019
        %2538 = vmatpush2.msra.mxu0 %v2018
        %2539 = vmatprep.subr.mxu0 %v2011
        %2540 = vmatpush2.msra.mxu0 %v2010
        %2541 = vmatprep.subr.mxu0 %v2003
        %2542 = vmatpush2.msra.mxu0 %v2002
        %2543 = vmatprep.subr.mxu0 %v1995
        %2544 = vmatpush2.msra.mxu0 %v1994
        %2545 = vmatprep.subr.mxu0 %v1987
        %2546 = vmatpush2.msra.mxu0 %v1986
        %2547 = vmatprep.subr.mxu0 %v1979
        %2548 = vmatpush2.msra.mxu0 %v1978
        %2549 = vmatprep.subr.mxu0 %v1971
        %2550 = vmatpush2.msra.mxu0 %v1970
        %2551 = vmatprep.subr.mxu0 %v1963
        %2552 = vmatpush2.msra.mxu0 %v1962
        %2553 = vmatprep.mubr.f32.mxu0 %v2214
        %2554 = vmatmul.mubr.f32.gmra.mxu0 %v2213
        %v2555 = vpop.f32.mrf.mxu0
        %v2556 = vadd.f32 %v2245, %v2555
        %v2557 = vpop.f32.mrf.mxu0
        %v2558 = vadd.f32 %v2249, %v2557
        %2559 = vmatprep.mubr.f32.mxu0 %v2216
        %2560 = vmatmul.mubr.f32.gmra.mxu0 %v2215
        %v2561 = vpop.f32.mrf.mxu0
        %v2562 = vadd.f32 %v2245, %v2561
        %v2563 = vpop.f32.mrf.mxu0
        %v2564 = vadd.f32 %v2249, %v2563
        %2565 = vdwg.mxu0
        %2566 = vst [vmem:[#allocation3] sm:$0xff] %v2325
        %2567 = vst [vmem:[#allocation3 + $0x8] sm:$0xff] %v2327
        %2568 = vst [vmem:[#allocation3 + $0x10] sm:$0xff] %v2402
        %2569 = vst [vmem:[#allocation3 + $0x18] sm:$0xff] %v2404
        %2570 = vst [vmem:[#allocation3 + $0x20] sm:$0xff] %v2479
        %2571 = vst [vmem:[#allocation3 + $0x28] sm:$0xff] %v2481
        %2572 = vst [vmem:[#allocation3 + $0x30] sm:$0xff] %v2556
        %2573 = vst [vmem:[#allocation3 + $0x38] sm:$0xff] %v2558
        %2574 = vst [vmem:[#allocation3 + $0x40] sm:$0xff] %v2331
        %2575 = vst [vmem:[#allocation3 + $0x48] sm:$0xff] %v2333
        %2576 = vst [vmem:[#allocation3 + $0x50] sm:$0xff] %v2408
        %2577 = vst [vmem:[#allocation3 + $0x58] sm:$0xff] %v2410
        %2578 = vst [vmem:[#allocation3 + $0x60] sm:$0xff] %v2485
        %2579 = vst [vmem:[#allocation3 + $0x68] sm:$0xff] %v2487
        %2580 = vst [vmem:[#allocation3 + $0x70] sm:$0xff] %v2562
        %2581 = vst [vmem:[#allocation3 + $0x78] sm:$0xff] %v2564
        %v2582 = vld [vmem:[#allocation3] sm:$0xff]
        %v2583 = vld [vmem:[#allocation3 + $0x8] sm:$0xff]
        %v2584 = vld [vmem:[#allocation3 + $0x10] sm:$0xff]
        %v2585 = vld [vmem:[#allocation3 + $0x18] sm:$0xff]
        %2586 = vmatprep.subr.mxu0 %v2146
        %2587 = vmatpush1.msra.mxu0 %v2145
        %2588 = vmatprep.subr.mxu0 %v2142
        %2589 = vmatpush1.msra.mxu0 %v2141
        %2590 = vmatprep.subr.mxu0 %v2138
        %2591 = vmatpush1.msra.mxu0 %v2137
        %2592 = vmatprep.subr.mxu0 %v2134
        %2593 = vmatpush1.msra.mxu0 %v2133
        %2594 = vmatprep.subr.mxu0 %v2130
        %2595 = vmatpush1.msra.mxu0 %v2129
        %2596 = vmatprep.subr.mxu0 %v2126
        %2597 = vmatpush1.msra.mxu0 %v2125
        %2598 = vmatprep.subr.mxu0 %v2122
        %2599 = vmatpush1.msra.mxu0 %v2121
        %2600 = vmatprep.subr.mxu0 %v2118
        %2601 = vmatpush1.msra.mxu0 %v2117
        %2602 = vmatprep.subr.mxu0 %v2114
        %2603 = vmatpush1.msra.mxu0 %v2113
        %2604 = vmatprep.subr.mxu0 %v2110
        %2605 = vmatpush1.msra.mxu0 %v2109
        %2606 = vmatprep.subr.mxu0 %v2106
        %2607 = vmatpush1.msra.mxu0 %v2105
        %2608 = vmatprep.subr.mxu0 %v2102
        %2609 = vmatpush1.msra.mxu0 %v2101
        %2610 = vmatprep.subr.mxu0 %v2098
        %2611 = vmatpush1.msra.mxu0 %v2097
        %2612 = vmatprep.subr.mxu0 %v2094
        %2613 = vmatpush1.msra.mxu0 %v2093
        %2614 = vmatprep.subr.mxu0 %v2090
        %2615 = vmatpush1.msra.mxu0 %v2089
        %2616 = vmatprep.subr.mxu0 %v2086
        %2617 = vmatpush1.msra.mxu0 %v2085
        %2618 = vmatprep.subr.mxu0 0.0
        %2619 = vmatpush2.msra.mxu0 0.0
        %2620 = vmatprep.subr.mxu0 0.0
        %2621 = vmatpush2.msra.mxu0 0.0
        %2622 = vmatprep.subr.mxu0 0.0
        %2623 = vmatpush2.msra.mxu0 0.0
        %2624 = vmatprep.subr.mxu0 0.0
        %2625 = vmatpush2.msra.mxu0 0.0
        %2626 = vmatprep.subr.mxu0 0.0
        %2627 = vmatpush2.msra.mxu0 0.0
        %2628 = vmatprep.subr.mxu0 0.0
        %2629 = vmatpush2.msra.mxu0 0.0
        %2630 = vmatprep.subr.mxu0 0.0
        %2631 = vmatpush2.msra.mxu0 0.0
        %2632 = vmatprep.subr.mxu0 0.0
        %2633 = vmatpush2.msra.mxu0 0.0
        %2634 = vmatprep.subr.mxu0 0.0
        %2635 = vmatpush2.msra.mxu0 0.0
        %2636 = vmatprep.subr.mxu0 0.0
        %2637 = vmatpush2.msra.mxu0 0.0
        %2638 = vmatprep.subr.mxu0 0.0
        %2639 = vmatpush2.msra.mxu0 0.0
        %2640 = vmatprep.subr.mxu0 0.0
        %2641 = vmatpush2.msra.mxu0 0.0
        %2642 = vmatprep.subr.mxu0 0.0
        %2643 = vmatpush2.msra.mxu0 0.0
        %2644 = vmatprep.subr.mxu0 0.0
        %2645 = vmatpush2.msra.mxu0 0.0
        %2646 = vmatprep.subr.mxu0 0.0
        %2647 = vmatpush2.msra.mxu0 0.0
        %2648 = vmatprep.subr.mxu0 0.0
        %2649 = vmatpush2.msra.mxu0 0.0
        %2650 = vmatprep.mubr.f32.mxu0 0.0
        %2651 = vmatmul.mubr.f32.gmra.mxu0 0.0
        %v2652 = vpop.f32.mrf.mxu0
        %v2653 = vadd.f32 0.0, %v2652
        %v2654 = vpop.f32.mrf.mxu0
        %v2655 = vadd.f32 0.0, %v2654
        %2656 = vdwg.mxu0
        %2657 = vmatprep.subr.mxu0 %v2148
        %2658 = vmatpush1.msra.mxu0 %v2147
        %2659 = vmatprep.subr.mxu0 %v2144
        %2660 = vmatpush1.msra.mxu0 %v2143
        %2661 = vmatprep.subr.mxu0 %v2140
        %2662 = vmatpush1.msra.mxu0 %v2139
        %2663 = vmatprep.subr.mxu0 %v2136
        %2664 = vmatpush1.msra.mxu0 %v2135
        %2665 = vmatprep.subr.mxu0 %v2132
        %2666 = vmatpush1.msra.mxu0 %v2131
        %2667 = vmatprep.subr.mxu0 %v2128
        %2668 = vmatpush1.msra.mxu0 %v2127
        %2669 = vmatprep.subr.mxu0 %v2124
        %2670 = vmatpush1.msra.mxu0 %v2123
        %2671 = vmatprep.subr.mxu0 %v2120
        %2672 = vmatpush1.msra.mxu0 %v2119
        %2673 = vmatprep.subr.mxu0 %v2116
        %2674 = vmatpush1.msra.mxu0 %v2115
        %2675 = vmatprep.subr.mxu0 %v2112
        %2676 = vmatpush1.msra.mxu0 %v2111
        %2677 = vmatprep.subr.mxu0 %v2108
        %2678 = vmatpush1.msra.mxu0 %v2107
        %2679 = vmatprep.subr.mxu0 %v2104
        %2680 = vmatpush1.msra.mxu0 %v2103
        %2681 = vmatprep.subr.mxu0 %v2100
        %2682 = vmatpush1.msra.mxu0 %v2099
        %2683 = vmatprep.subr.mxu0 %v2096
        %2684 = vmatpush1.msra.mxu0 %v2095
        %2685 = vmatprep.subr.mxu0 %v2092
        %2686 = vmatpush1.msra.mxu0 %v2091
        %2687 = vmatprep.subr.mxu0 %v2088
        %2688 = vmatpush1.msra.mxu0 %v2087
        %2689 = vmatprep.subr.mxu0 0.0
        %2690 = vmatpush2.msra.mxu0 0.0
        %2691 = vmatprep.subr.mxu0 0.0
        %2692 = vmatpush2.msra.mxu0 0.0
        %2693 = vmatprep.subr.mxu0 0.0
        %2694 = vmatpush2.msra.mxu0 0.0
        %2695 = vmatprep.subr.mxu0 0.0
        %2696 = vmatpush2.msra.mxu0 0.0
        %2697 = vmatprep.subr.mxu0 0.0
        %2698 = vmatpush2.msra.mxu0 0.0
        %2699 = vmatprep.subr.mxu0 0.0
        %2700 = vmatpush2.msra.mxu0 0.0
        %2701 = vmatprep.subr.mxu0 0.0
        %2702 = vmatpush2.msra.mxu0 0.0
        %2703 = vmatprep.subr.mxu0 0.0
        %2704 = vmatpush2.msra.mxu0 0.0
        %2705 = vmatprep.subr.mxu0 0.0
        %2706 = vmatpush2.msra.mxu0 0.0
        %2707 = vmatprep.subr.mxu0 0.0
        %2708 = vmatpush2.msra.mxu0 0.0
        %2709 = vmatprep.subr.mxu0 0.0
        %2710 = vmatpush2.msra.mxu0 0.0
        %2711 = vmatprep.subr.mxu0 0.0
        %2712 = vmatpush2.msra.mxu0 0.0
        %2713 = vmatprep.subr.mxu0 0.0
        %2714 = vmatpush2.msra.mxu0 0.0
        %2715 = vmatprep.subr.mxu0 0.0
        %2716 = vmatpush2.msra.mxu0 0.0
        %2717 = vmatprep.subr.mxu0 0.0
        %2718 = vmatpush2.msra.mxu0 0.0
        %2719 = vmatprep.subr.mxu0 0.0
        %2720 = vmatpush2.msra.mxu0 0.0
        %2721 = vmatprep.mubr.f32.mxu0 0.0
        %2722 = vmatmul.mubr.f32.gmra.mxu0 0.0
        %v2723 = vpop.f32.mrf.mxu0
        %v2724 = vadd.f32 0.0, %v2723
        %v2725 = vpop.f32.mrf.mxu0
        %v2726 = vadd.f32 0.0, %v2725
        %2727 = vdwg.mxu0
        %v2728 = vadd.f32 %v2582, %v2653
        %v2729 = vadd.f32 %v2583, %v2655
        %v2730 = vadd.f32 %v2584, %v2724
        %v2731 = vadd.f32 %v2585, %v2726
        %v2732 = vld [vmem:[%s1276 + $0x20] sm:$0xff]
        %v2733 = vld [vmem:[%s1276 + $0x28] sm:$0xff]
        %v2734 = vld [vmem:[%s1276 + $0x30] sm:$0xff]
        %v2735 = vld [vmem:[%s1276 + $0x38] sm:$0xff]
        %2736 = vmatprep.subr.mxu0 %v2210
        %2737 = vmatpush1.msra.mxu0 %v2209
        %2738 = vmatprep.subr.mxu0 %v2206
        %2739 = vmatpush1.msra.mxu0 %v2205
        %2740 = vmatprep.subr.mxu0 %v2202
        %2741 = vmatpush1.msra.mxu0 %v2201
        %2742 = vmatprep.subr.mxu0 %v2198
        %2743 = vmatpush1.msra.mxu0 %v2197
        %2744 = vmatprep.subr.mxu0 %v2194
        %2745 = vmatpush1.msra.mxu0 %v2193
        %2746 = vmatprep.subr.mxu0 %v2190
        %2747 = vmatpush1.msra.mxu0 %v2189
        %2748 = vmatprep.subr.mxu0 %v2186
        %2749 = vmatpush1.msra.mxu0 %v2185
        %2750 = vmatprep.subr.mxu0 %v2182
        %2751 = vmatpush1.msra.mxu0 %v2181
        %2752 = vmatprep.subr.mxu0 %v2178
        %2753 = vmatpush1.msra.mxu0 %v2177
        %2754 = vmatprep.subr.mxu0 %v2174
        %2755 = vmatpush1.msra.mxu0 %v2173
        %2756 = vmatprep.subr.mxu0 %v2170
        %2757 = vmatpush1.msra.mxu0 %v2169
        %2758 = vmatprep.subr.mxu0 %v2166
        %2759 = vmatpush1.msra.mxu0 %v2165
        %2760 = vmatprep.subr.mxu0 %v2162
        %2761 = vmatpush1.msra.mxu0 %v2161
        %2762 = vmatprep.subr.mxu0 %v2158
        %2763 = vmatpush1.msra.mxu0 %v2157
        %2764 = vmatprep.subr.mxu0 %v2154
        %2765 = vmatpush1.msra.mxu0 %v2153
        %2766 = vmatprep.subr.mxu0 %v2150
        %2767 = vmatpush1.msra.mxu0 %v2149
        %2768 = vmatprep.subr.mxu0 0.0
        %2769 = vmatpush2.msra.mxu0 0.0
        %2770 = vmatprep.subr.mxu0 0.0
        %2771 = vmatpush2.msra.mxu0 0.0
        %2772 = vmatprep.subr.mxu0 0.0
        %2773 = vmatpush2.msra.mxu0 0.0
        %2774 = vmatprep.subr.mxu0 0.0
        %2775 = vmatpush2.msra.mxu0 0.0
        %2776 = vmatprep.subr.mxu0 0.0
        %2777 = vmatpush2.msra.mxu0 0.0
        %2778 = vmatprep.subr.mxu0 0.0
        %2779 = vmatpush2.msra.mxu0 0.0
        %2780 = vmatprep.subr.mxu0 0.0
        %2781 = vmatpush2.msra.mxu0 0.0
        %2782 = vmatprep.subr.mxu0 0.0
        %2783 = vmatpush2.msra.mxu0 0.0
        %2784 = vmatprep.subr.mxu0 0.0
        %2785 = vmatpush2.msra.mxu0 0.0
        %2786 = vmatprep.subr.mxu0 0.0
        %2787 = vmatpush2.msra.mxu0 0.0
        %2788 = vmatprep.subr.mxu0 0.0
        %2789 = vmatpush2.msra.mxu0 0.0
        %2790 = vmatprep.subr.mxu0 0.0
        %2791 = vmatpush2.msra.mxu0 0.0
        %2792 = vmatprep.subr.mxu0 0.0
        %2793 = vmatpush2.msra.mxu0 0.0
        %2794 = vmatprep.subr.mxu0 0.0
        %2795 = vmatpush2.msra.mxu0 0.0
        %2796 = vmatprep.subr.mxu0 0.0
        %2797 = vmatpush2.msra.mxu0 0.0
        %2798 = vmatprep.subr.mxu0 0.0
        %2799 = vmatpush2.msra.mxu0 0.0
        %2800 = vmatprep.mubr.f32.mxu0 0.0
        %2801 = vmatmul.mubr.f32.gmra.mxu0 0.0
        %v2802 = vpop.f32.mrf.mxu0
        %v2803 = vadd.f32 0.0, %v2802
        %v2804 = vpop.f32.mrf.mxu0
        %v2805 = vadd.f32 0.0, %v2804
        %2806 = vdwg.mxu0
        %2807 = vmatprep.subr.mxu0 %v2212
        %2808 = vmatpush1.msra.mxu0 %v2211
        %2809 = vmatprep.subr.mxu0 %v2208
        %2810 = vmatpush1.msra.mxu0 %v2207
        %2811 = vmatprep.subr.mxu0 %v2204
        %2812 = vmatpush1.msra.mxu0 %v2203
        %2813 = vmatprep.subr.mxu0 %v2200
        %2814 = vmatpush1.msra.mxu0 %v2199
        %2815 = vmatprep.subr.mxu0 %v2196
        %2816 = vmatpush1.msra.mxu0 %v2195
        %2817 = vmatprep.subr.mxu0 %v2192
        %2818 = vmatpush1.msra.mxu0 %v2191
        %2819 = vmatprep.subr.mxu0 %v2188
        %2820 = vmatpush1.msra.mxu0 %v2187
        %2821 = vmatprep.subr.mxu0 %v2184
        %2822 = vmatpush1.msra.mxu0 %v2183
        %2823 = vmatprep.subr.mxu0 %v2180
        %2824 = vmatpush1.msra.mxu0 %v2179
        %2825 = vmatprep.subr.mxu0 %v2176
        %2826 = vmatpush1.msra.mxu0 %v2175
        %2827 = vmatprep.subr.mxu0 %v2172
        %2828 = vmatpush1.msra.mxu0 %v2171
        %2829 = vmatprep.subr.mxu0 %v2168
        %2830 = vmatpush1.msra.mxu0 %v2167
        %2831 = vmatprep.subr.mxu0 %v2164
        %2832 = vmatpush1.msra.mxu0 %v2163
        %2833 = vmatprep.subr.mxu0 %v2160
        %2834 = vmatpush1.msra.mxu0 %v2159
        %2835 = vmatprep.subr.mxu0 %v2156
        %2836 = vmatpush1.msra.mxu0 %v2155
        %2837 = vmatprep.subr.mxu0 %v2152
        %2838 = vmatpush1.msra.mxu0 %v2151
        %2839 = vmatprep.subr.mxu0 0.0
        %2840 = vmatpush2.msra.mxu0 0.0
        %2841 = vmatprep.subr.mxu0 0.0
        %2842 = vmatpush2.msra.mxu0 0.0
        %2843 = vmatprep.subr.mxu0 0.0
        %2844 = vmatpush2.msra.mxu0 0.0
        %2845 = vmatprep.subr.mxu0 0.0
        %2846 = vmatpush2.msra.mxu0 0.0
        %2847 = vmatprep.subr.mxu0 0.0
        %2848 = vmatpush2.msra.mxu0 0.0
        %2849 = vmatprep.subr.mxu0 0.0
        %2850 = vmatpush2.msra.mxu0 0.0
        %2851 = vmatprep.subr.mxu0 0.0
        %2852 = vmatpush2.msra.mxu0 0.0
        %2853 = vmatprep.subr.mxu0 0.0
        %2854 = vmatpush2.msra.mxu0 0.0
        %2855 = vmatprep.subr.mxu0 0.0
        %2856 = vmatpush2.msra.mxu0 0.0
        %2857 = vmatprep.subr.mxu0 0.0
        %2858 = vmatpush2.msra.mxu0 0.0
        %2859 = vmatprep.subr.mxu0 0.0
        %2860 = vmatpush2.msra.mxu0 0.0
        %2861 = vmatprep.subr.mxu0 0.0
        %2862 = vmatpush2.msra.mxu0 0.0
        %2863 = vmatprep.subr.mxu0 0.0
        %2864 = vmatpush2.msra.mxu0 0.0
        %2865 = vmatprep.subr.mxu0 0.0
        %2866 = vmatpush2.msra.mxu0 0.0
        %2867 = vmatprep.subr.mxu0 0.0
        %2868 = vmatpush2.msra.mxu0 0.0
        %2869 = vmatprep.subr.mxu0 0.0
        %2870 = vmatpush2.msra.mxu0 0.0
        %2871 = vmatprep.mubr.f32.mxu0 0.0
        %2872 = vmatmul.mubr.f32.gmra.mxu0 0.0
        %v2873 = vpop.f32.mrf.mxu0
        %v2874 = vadd.f32 0.0, %v2873
        %v2875 = vpop.f32.mrf.mxu0
        %v2876 = vadd.f32 0.0, %v2875
        %2877 = vdwg.mxu0
        %v2878 = vadd.f32 %v2732, %v2803
        %v2879 = vadd.f32 %v2733, %v2805
        %v2880 = vadd.f32 %v2734, %v2874
        %v2881 = vadd.f32 %v2735, %v2876
        %v2882 = vxor.u32 %v2728, 2147483648
        %v2883 = vmul.f32 %v2882, 1.442695
        %v2884 = vpow.pop %v2883
        %v2885 = vadd.f32 %v2884, 1.0
        %v2886 = vrcp.pop %v2885
        %v2887 = vmul.f32 1.0, %v2886
        %v2888 = vxor.u32 %v2729, 2147483648
        %v2889 = vmul.f32 %v2888, 1.442695
        %v2890 = vpow.pop %v2889
        %v2891 = vadd.f32 %v2890, 1.0
        %v2892 = vrcp.pop %v2891
        %v2893 = vmul.f32 1.0, %v2892
        %v2894 = vtanh.pop %v2730
        %v2895 = vxor.u32 %v2731, 2147483648
        %v2896 = vmul.f32 %v2895, 1.442695
        %v2897 = vpow.pop %v2896
        %v2898 = vadd.f32 %v2897, 1.0
        %v2899 = vrcp.pop %v2898
        %v2900 = vmul.f32 1.0, %v2899
        %v2901 = vmul.f32 %v2893, 0.0
        %v2902 = vmul.f32 %v2887, %v2894
        %v2903 = vadd.f32 %v2901, %v2902
        %v2904 = vtanh.pop %v2903
        %v2905 = vmul.f32 %v2900, %v2904
        %v2906 = vxor.u32 %v2878, 2147483648
        %v2907 = vmul.f32 %v2906, 1.442695
        %v2908 = vpow.pop %v2907
        %v2909 = vadd.f32 %v2908, 1.0
        %v2910 = vrcp.pop %v2909
        %v2911 = vmul.f32 1.0, %v2910
        %v2912 = vxor.u32 %v2879, 2147483648
        %v2913 = vmul.f32 %v2912, 1.442695
        %v2914 = vpow.pop %v2913
        %v2915 = vadd.f32 %v2914, 1.0
        %v2916 = vrcp.pop %v2915
        %v2917 = vmul.f32 1.0, %v2916
        %v2918 = vtanh.pop %v2880
        %v2919 = vxor.u32 %v2881, 2147483648
        %v2920 = vmul.f32 %v2919, 1.442695
        %v2921 = vpow.pop %v2920
        %v2922 = vadd.f32 %v2921, 1.0
        %v2923 = vrcp.pop %v2922
        %v2924 = vmul.f32 1.0, %v2923
        %v2925 = vmul.f32 %v2917, 0.0
        %v2926 = vmul.f32 %v2911, %v2918
        %v2927 = vadd.f32 %v2925, %v2926
        %v2928 = vtanh.pop %v2927
        %v2929 = vmul.f32 %v2924, %v2928
        %2930 = vst [vmem:[#allocation2] sm:$0xff] %v2905
        %2931 = vst [vmem:[%s1476 + $0x8] sm:$0xff] %v2929
        %v2932 = vld [vmem:[%s1276] sm:$0xff]
        %v2933 = vld [vmem:[%s1276 + $0x8] sm:$0xff]
        %v2934 = vld [vmem:[%s1276 + $0x10] sm:$0xff]
        %v2935 = vld [vmem:[%s1276 + $0x18] sm:$0xff]
        %2936 = vmatprep.subr.mxu0 %v2146
        %2937 = vmatpush1.msra.mxu0 %v2145
        %2938 = vmatprep.subr.mxu0 %v2142
        %2939 = vmatpush1.msra.mxu0 %v2141
        %2940 = vmatprep.subr.mxu0 %v2138
        %2941 = vmatpush1.msra.mxu0 %v2137
        %2942 = vmatprep.subr.mxu0 %v2134
        %2943 = vmatpush1.msra.mxu0 %v2133
        %2944 = vmatprep.subr.mxu0 %v2130
        %2945 = vmatpush1.msra.mxu0 %v2129
        %2946 = vmatprep.subr.mxu0 %v2126
        %2947 = vmatpush1.msra.mxu0 %v2125
        %2948 = vmatprep.subr.mxu0 %v2122
        %2949 = vmatpush1.msra.mxu0 %v2121
        %2950 = vmatprep.subr.mxu0 %v2118
        %2951 = vmatpush1.msra.mxu0 %v2117
        %2952 = vmatprep.subr.mxu0 %v2114
        %2953 = vmatpush1.msra.mxu0 %v2113
        %2954 = vmatprep.subr.mxu0 %v2110
        %2955 = vmatpush1.msra.mxu0 %v2109
        %2956 = vmatprep.subr.mxu0 %v2106
        %2957 = vmatpush1.msra.mxu0 %v2105
        %2958 = vmatprep.subr.mxu0 %v2102
        %2959 = vmatpush1.msra.mxu0 %v2101
        %2960 = vmatprep.subr.mxu0 %v2098
        %2961 = vmatpush1.msra.mxu0 %v2097
        %2962 = vmatprep.subr.mxu0 %v2094
        %2963 = vmatpush1.msra.mxu0 %v2093
        %2964 = vmatprep.subr.mxu0 %v2090
        %2965 = vmatpush1.msra.mxu0 %v2089
        %2966 = vmatprep.subr.mxu0 %v2086
        %2967 = vmatpush1.msra.mxu0 %v2085
        %2968 = vmatprep.subr.mxu0 0.0
        %2969 = vmatpush2.msra.mxu0 0.0
        %2970 = vmatprep.subr.mxu0 0.0
        %2971 = vmatpush2.msra.mxu0 0.0
        %2972 = vmatprep.subr.mxu0 0.0
        %2973 = vmatpush2.msra.mxu0 0.0
        %2974 = vmatprep.subr.mxu0 0.0
        %2975 = vmatpush2.msra.mxu0 0.0
        %2976 = vmatprep.subr.mxu0 0.0
        %2977 = vmatpush2.msra.mxu0 0.0
        %2978 = vmatprep.subr.mxu0 0.0
        %2979 = vmatpush2.msra.mxu0 0.0
        %2980 = vmatprep.subr.mxu0 0.0
        %2981 = vmatpush2.msra.mxu0 0.0
        %2982 = vmatprep.subr.mxu0 0.0
        %2983 = vmatpush2.msra.mxu0 0.0
        %2984 = vmatprep.subr.mxu0 0.0
        %2985 = vmatpush2.msra.mxu0 0.0
        %2986 = vmatprep.subr.mxu0 0.0
        %2987 = vmatpush2.msra.mxu0 0.0
        %2988 = vmatprep.subr.mxu0 0.0
        %2989 = vmatpush2.msra.mxu0 0.0
        %2990 = vmatprep.subr.mxu0 0.0
        %2991 = vmatpush2.msra.mxu0 0.0
        %2992 = vmatprep.subr.mxu0 0.0
        %2993 = vmatpush2.msra.mxu0 0.0
        %2994 = vmatprep.subr.mxu0 0.0
        %2995 = vmatpush2.msra.mxu0 0.0
        %2996 = vmatprep.subr.mxu0 0.0
        %2997 = vmatpush2.msra.mxu0 0.0
        %2998 = vmatprep.subr.mxu0 0.0
        %2999 = vmatpush2.msra.mxu0 0.0
        %3000 = vmatprep.mubr.f32.mxu0 0.0
        %3001 = vmatmul.mubr.f32.gmra.mxu0 %v2905
        %v3002 = vpop.f32.mrf.mxu0
        %v3003 = vadd.f32 0.0, %v3002
        %v3004 = vpop.f32.mrf.mxu0
        %v3005 = vadd.f32 0.0, %v3004
        %3006 = vdwg.mxu0
        %3007 = vmatprep.subr.mxu0 %v2148
        %3008 = vmatpush1.msra.mxu0 %v2147
        %3009 = vmatprep.subr.mxu0 %v2144
        %3010 = vmatpush1.msra.mxu0 %v2143
        %3011 = vmatprep.subr.mxu0 %v2140
        %3012 = vmatpush1.msra.mxu0 %v2139
        %3013 = vmatprep.subr.mxu0 %v2136
        %3014 = vmatpush1.msra.mxu0 %v2135
        %3015 = vmatprep.subr.mxu0 %v2132
        %3016 = vmatpush1.msra.mxu0 %v2131
        %3017 = vmatprep.subr.mxu0 %v2128
        %3018 = vmatpush1.msra.mxu0 %v2127
        %3019 = vmatprep.subr.mxu0 %v2124
        %3020 = vmatpush1.msra.mxu0 %v2123
        %3021 = vmatprep.subr.mxu0 %v2120
        %3022 = vmatpush1.msra.mxu0 %v2119
        %3023 = vmatprep.subr.mxu0 %v2116
        %3024 = vmatpush1.msra.mxu0 %v2115
        %3025 = vmatprep.subr.mxu0 %v2112
        %3026 = vmatpush1.msra.mxu0 %v2111
        %3027 = vmatprep.subr.mxu0 %v2108
        %3028 = vmatpush1.msra.mxu0 %v2107
        %3029 = vmatprep.subr.mxu0 %v2104
        %3030 = vmatpush1.msra.mxu0 %v2103
        %3031 = vmatprep.subr.mxu0 %v2100
        %3032 = vmatpush1.msra.mxu0 %v2099
        %3033 = vmatprep.subr.mxu0 %v2096
        %3034 = vmatpush1.msra.mxu0 %v2095
        %3035 = vmatprep.subr.mxu0 %v2092
        %3036 = vmatpush1.msra.mxu0 %v2091
        %3037 = vmatprep.subr.mxu0 %v2088
        %3038 = vmatpush1.msra.mxu0 %v2087
        %3039 = vmatprep.subr.mxu0 0.0
        %3040 = vmatpush2.msra.mxu0 0.0
        %3041 = vmatprep.subr.mxu0 0.0
        %3042 = vmatpush2.msra.mxu0 0.0
        %3043 = vmatprep.subr.mxu0 0.0
        %3044 = vmatpush2.msra.mxu0 0.0
        %3045 = vmatprep.subr.mxu0 0.0
        %3046 = vmatpush2.msra.mxu0 0.0
        %3047 = vmatprep.subr.mxu0 0.0
        %3048 = vmatpush2.msra.mxu0 0.0
        %3049 = vmatprep.subr.mxu0 0.0
        %3050 = vmatpush2.msra.mxu0 0.0
        %3051 = vmatprep.subr.mxu0 0.0
        %3052 = vmatpush2.msra.mxu0 0.0
        %3053 = vmatprep.subr.mxu0 0.0
        %3054 = vmatpush2.msra.mxu0 0.0
        %3055 = vmatprep.subr.mxu0 0.0
        %3056 = vmatpush2.msra.mxu0 0.0
        %3057 = vmatprep.subr.mxu0 0.0
        %3058 = vmatpush2.msra.mxu0 0.0
        %3059 = vmatprep.subr.mxu0 0.0
        %3060 = vmatpush2.msra.mxu0 0.0
        %3061 = vmatprep.subr.mxu0 0.0
        %3062 = vmatpush2.msra.mxu0 0.0
        %3063 = vmatprep.subr.mxu0 0.0
        %3064 = vmatpush2.msra.mxu0 0.0
        %3065 = vmatprep.subr.mxu0 0.0
        %3066 = vmatpush2.msra.mxu0 0.0
        %3067 = vmatprep.subr.mxu0 0.0
        %3068 = vmatpush2.msra.mxu0 0.0
        %3069 = vmatprep.subr.mxu0 0.0
        %3070 = vmatpush2.msra.mxu0 0.0
        %3071 = vmatprep.mubr.f32.mxu0 0.0
        %3072 = vmatmul.mubr.f32.gmra.mxu0 %v2905
        %v3073 = vpop.f32.mrf.mxu0
        %v3074 = vadd.f32 0.0, %v3073
        %v3075 = vpop.f32.mrf.mxu0
        %v3076 = vadd.f32 0.0, %v3075
        %3077 = vdwg.mxu0
        %v3078 = vadd.f32 %v2932, %v3003
        %v3079 = vadd.f32 %v2933, %v3005
        %v3080 = vadd.f32 %v2934, %v3074
        %v3081 = vadd.f32 %v2935, %v3076
        %v3082 = vld [vmem:[#allocation3 + $0x20] sm:$0xff]
        %v3083 = vld [vmem:[#allocation3 + $0x28] sm:$0xff]
        %v3084 = vld [vmem:[#allocation3 + $0x30] sm:$0xff]
        %v3085 = vld [vmem:[#allocation3 + $0x38] sm:$0xff]
        %3086 = vmatprep.subr.mxu0 %v2210
        %3087 = vmatpush1.msra.mxu0 %v2209
        %3088 = vmatprep.subr.mxu0 %v2206
        %3089 = vmatpush1.msra.mxu0 %v2205
        %3090 = vmatprep.subr.mxu0 %v2202
        %3091 = vmatpush1.msra.mxu0 %v2201
        %3092 = vmatprep.subr.mxu0 %v2198
        %3093 = vmatpush1.msra.mxu0 %v2197
        %3094 = vmatprep.subr.mxu0 %v2194
        %3095 = vmatpush1.msra.mxu0 %v2193
        %3096 = vmatprep.subr.mxu0 %v2190
        %3097 = vmatpush1.msra.mxu0 %v2189
        %3098 = vmatprep.subr.mxu0 %v2186
        %3099 = vmatpush1.msra.mxu0 %v2185
        %3100 = vmatprep.subr.mxu0 %v2182
        %3101 = vmatpush1.msra.mxu0 %v2181
        %3102 = vmatprep.subr.mxu0 %v2178
        %3103 = vmatpush1.msra.mxu0 %v2177
        %3104 = vmatprep.subr.mxu0 %v2174
        %3105 = vmatpush1.msra.mxu0 %v2173
        %3106 = vmatprep.subr.mxu0 %v2170
        %3107 = vmatpush1.msra.mxu0 %v2169
        %3108 = vmatprep.subr.mxu0 %v2166
        %3109 = vmatpush1.msra.mxu0 %v2165
        %3110 = vmatprep.subr.mxu0 %v2162
        %3111 = vmatpush1.msra.mxu0 %v2161
        %3112 = vmatprep.subr.mxu0 %v2158
        %3113 = vmatpush1.msra.mxu0 %v2157
        %3114 = vmatprep.subr.mxu0 %v2154
        %3115 = vmatpush1.msra.mxu0 %v2153
        %3116 = vmatprep.subr.mxu0 %v2150
        %3117 = vmatpush1.msra.mxu0 %v2149
        %3118 = vmatprep.subr.mxu0 0.0
        %3119 = vmatpush2.msra.mxu0 0.0
        %3120 = vmatprep.subr.mxu0 0.0
        %3121 = vmatpush2.msra.mxu0 0.0
        %3122 = vmatprep.subr.mxu0 0.0
        %3123 = vmatpush2.msra.mxu0 0.0
        %3124 = vmatprep.subr.mxu0 0.0
        %3125 = vmatpush2.msra.mxu0 0.0
        %3126 = vmatprep.subr.mxu0 0.0
        %3127 = vmatpush2.msra.mxu0 0.0
        %3128 = vmatprep.subr.mxu0 0.0
        %3129 = vmatpush2.msra.mxu0 0.0
        %3130 = vmatprep.subr.mxu0 0.0
        %3131 = vmatpush2.msra.mxu0 0.0
        %3132 = vmatprep.subr.mxu0 0.0
        %3133 = vmatpush2.msra.mxu0 0.0
        %3134 = vmatprep.subr.mxu0 0.0
        %3135 = vmatpush2.msra.mxu0 0.0
        %3136 = vmatprep.subr.mxu0 0.0
        %3137 = vmatpush2.msra.mxu0 0.0
        %3138 = vmatprep.subr.mxu0 0.0
        %3139 = vmatpush2.msra.mxu0 0.0
        %3140 = vmatprep.subr.mxu0 0.0
        %3141 = vmatpush2.msra.mxu0 0.0
        %3142 = vmatprep.subr.mxu0 0.0
        %3143 = vmatpush2.msra.mxu0 0.0
        %3144 = vmatprep.subr.mxu0 0.0
        %3145 = vmatpush2.msra.mxu0 0.0
        %3146 = vmatprep.subr.mxu0 0.0
        %3147 = vmatpush2.msra.mxu0 0.0
        %3148 = vmatprep.subr.mxu0 0.0
        %3149 = vmatpush2.msra.mxu0 0.0
        %3150 = vmatprep.mubr.f32.mxu0 0.0
        %3151 = vmatmul.mubr.f32.gmra.mxu0 %v2929
        %v3152 = vpop.f32.mrf.mxu0
        %v3153 = vadd.f32 0.0, %v3152
        %v3154 = vpop.f32.mrf.mxu0
        %v3155 = vadd.f32 0.0, %v3154
        %3156 = vdwg.mxu0
        %3157 = vmatprep.subr.mxu0 %v2212
        %3158 = vmatpush1.msra.mxu0 %v2211
        %3159 = vmatprep.subr.mxu0 %v2208
        %3160 = vmatpush1.msra.mxu0 %v2207
        %3161 = vmatprep.subr.mxu0 %v2204
        %3162 = vmatpush1.msra.mxu0 %v2203
        %3163 = vmatprep.subr.mxu0 %v2200
        %3164 = vmatpush1.msra.mxu0 %v2199
        %3165 = vmatprep.subr.mxu0 %v2196
        %3166 = vmatpush1.msra.mxu0 %v2195
        %3167 = vmatprep.subr.mxu0 %v2192
        %3168 = vmatpush1.msra.mxu0 %v2191
        %3169 = vmatprep.subr.mxu0 %v2188
        %3170 = vmatpush1.msra.mxu0 %v2187
        %3171 = vmatprep.subr.mxu0 %v2184
        %3172 = vmatpush1.msra.mxu0 %v2183
        %3173 = vmatprep.subr.mxu0 %v2180
        %3174 = vmatpush1.msra.mxu0 %v2179
        %3175 = vmatprep.subr.mxu0 %v2176
        %3176 = vmatpush1.msra.mxu0 %v2175
        %3177 = vmatprep.subr.mxu0 %v2172
        %3178 = vmatpush1.msra.mxu0 %v2171
        %3179 = vmatprep.subr.mxu0 %v2168
        %3180 = vmatpush1.msra.mxu0 %v2167
        %3181 = vmatprep.subr.mxu0 %v2164
        %3182 = vmatpush1.msra.mxu0 %v2163
        %3183 = vmatprep.subr.mxu0 %v2160
        %3184 = vmatpush1.msra.mxu0 %v2159
        %3185 = vmatprep.subr.mxu0 %v2156
        %3186 = vmatpush1.msra.mxu0 %v2155
        %3187 = vmatprep.subr.mxu0 %v2152
        %3188 = vmatpush1.msra.mxu0 %v2151
        %3189 = vmatprep.subr.mxu0 0.0
        %3190 = vmatpush2.msra.mxu0 0.0
        %3191 = vmatprep.subr.mxu0 0.0
        %3192 = vmatpush2.msra.mxu0 0.0
        %3193 = vmatprep.subr.mxu0 0.0
        %3194 = vmatpush2.msra.mxu0 0.0
        %3195 = vmatprep.subr.mxu0 0.0
        %3196 = vmatpush2.msra.mxu0 0.0
        %3197 = vmatprep.subr.mxu0 0.0
        %3198 = vmatpush2.msra.mxu0 0.0
        %3199 = vmatprep.subr.mxu0 0.0
        %3200 = vmatpush2.msra.mxu0 0.0
        %3201 = vmatprep.subr.mxu0 0.0
        %3202 = vmatpush2.msra.mxu0 0.0
        %3203 = vmatprep.subr.mxu0 0.0
        %3204 = vmatpush2.msra.mxu0 0.0
        %3205 = vmatprep.subr.mxu0 0.0
        %3206 = vmatpush2.msra.mxu0 0.0
        %3207 = vmatprep.subr.mxu0 0.0
        %3208 = vmatpush2.msra.mxu0 0.0
        %3209 = vmatprep.subr.mxu0 0.0
        %3210 = vmatpush2.msra.mxu0 0.0
        %3211 = vmatprep.subr.mxu0 0.0
        %3212 = vmatpush2.msra.mxu0 0.0
        %3213 = vmatprep.subr.mxu0 0.0
        %3214 = vmatpush2.msra.mxu0 0.0
        %3215 = vmatprep.subr.mxu0 0.0
        %3216 = vmatpush2.msra.mxu0 0.0
        %3217 = vmatprep.subr.mxu0 0.0
        %3218 = vmatpush2.msra.mxu0 0.0
        %3219 = vmatprep.subr.mxu0 0.0
        %3220 = vmatpush2.msra.mxu0 0.0
        %3221 = vmatprep.mubr.f32.mxu0 0.0
        %3222 = vmatmul.mubr.f32.gmra.mxu0 %v2929
        %v3223 = vpop.f32.mrf.mxu0
        %v3224 = vadd.f32 0.0, %v3223
        %v3225 = vpop.f32.mrf.mxu0
        %v3226 = vadd.f32 0.0, %v3225
        %3227 = vdwg.mxu0
        %v3228 = vadd.f32 %v3082, %v3153
        %v3229 = vadd.f32 %v3083, %v3155
        %v3230 = vadd.f32 %v3084, %v3224
        %v3231 = vadd.f32 %v3085, %v3226
        %v3232 = vxor.u32 %v3078, 2147483648
        %v3233 = vmul.f32 %v3232, 1.442695
        %v3234 = vpow.pop %v3233
        %v3235 = vadd.f32 %v3234, 1.0
        %v3236 = vrcp.pop %v3235
        %v3237 = vmul.f32 1.0, %v3236
        %v3238 = vxor.u32 %v3079, 2147483648
        %v3239 = vmul.f32 %v3238, 1.442695
        %v3240 = vpow.pop %v3239
        %v3241 = vadd.f32 %v3240, 1.0
        %v3242 = vrcp.pop %v3241
        %v3243 = vmul.f32 1.0, %v3242
        %v3244 = vtanh.pop %v3080
        %v3245 = vxor.u32 %v3081, 2147483648
        %v3246 = vmul.f32 %v3245, 1.442695
        %v3247 = vpow.pop %v3246
        %v3248 = vadd.f32 %v3247, 1.0
        %v3249 = vrcp.pop %v3248
        %v3250 = vmul.f32 1.0, %v3249
        %v3251 = vmul.f32 %v3243, %v2903
        %v3252 = vmul.f32 %v3237, %v3244
        %v3253 = vadd.f32 %v3251, %v3252
        %v3254 = vtanh.pop %v3253
        %v3255 = vmul.f32 %v3250, %v3254
        %v3256 = vxor.u32 %v3228, 2147483648
        %v3257 = vmul.f32 %v3256, 1.442695
        %v3258 = vpow.pop %v3257
        %v3259 = vadd.f32 %v3258, 1.0
        %v3260 = vrcp.pop %v3259
        %v3261 = vmul.f32 1.0, %v3260
        %v3262 = vxor.u32 %v3229, 2147483648
        %v3263 = vmul.f32 %v3262, 1.442695
        %v3264 = vpow.pop %v3263
        %v3265 = vadd.f32 %v3264, 1.0
        %v3266 = vrcp.pop %v3265
        %v3267 = vmul.f32 1.0, %v3266
        %v3268 = vtanh.pop %v3230
        %v3269 = vxor.u32 %v3231, 2147483648
        %v3270 = vmul.f32 %v3269, 1.442695
        %v3271 = vpow.pop %v3270
        %v3272 = vadd.f32 %v3271, 1.0
        %v3273 = vrcp.pop %v3272
        %v3274 = vmul.f32 1.0, %v3273
        %v3275 = vmul.f32 %v3267, %v2927
        %v3276 = vmul.f32 %v3261, %v3268
        %v3277 = vadd.f32 %v3275, %v3276
        %v3278 = vtanh.pop %v3277
        %v3279 = vmul.f32 %v3274, %v3278
        %3280 = vst [vmem:[%s1476] sm:$0xff] %v3255
        %3281 = vst [vmem:[#allocation2 + $0x8] sm:$0xff] %v3279
        %v3282 = vld [vmem:[#allocation2] sm:$0xff]
        %v3283 = vld [vmem:[#allocation2 + $0x8] sm:$0xff]
        %v3284 = vld [vmem:[#allocation2 + $0x10] sm:$0xff]
        %v3285 = vld [vmem:[#allocation2 + $0x18] sm:$0xff]
        %v3286 = vld [vmem:[#allocation17] sm:$0xff]
        %v3287 = vld [vmem:[#allocation17 + $0x8] sm:$0xff]
        %v3288 = vld [vmem:[#allocation17 + $0x10] sm:$0xff]
        %v3289 = vld [vmem:[#allocation17 + $0x18] sm:$0xff]
        %v3290 = vld [vmem:[#allocation17 + $0x20] sm:$0xff]
        %v3291 = vld [vmem:[#allocation17 + $0x28] sm:$0xff]
        %v3292 = vld [vmem:[#allocation17 + $0x30] sm:$0xff]
        %v3293 = vld [vmem:[#allocation17 + $0x38] sm:$0xff]
        %v3294 = vld [vmem:[#allocation17 + $0x40] sm:$0xff]
        %v3295 = vld [vmem:[#allocation17 + $0x48] sm:$0xff]
        %v3296 = vld [vmem:[#allocation17 + $0x50] sm:$0xff]
        %v3297 = vld [vmem:[#allocation17 + $0x58] sm:$0xff]
        %v3298 = vld [vmem:[#allocation17 + $0x60] sm:$0xff]
        %v3299 = vld [vmem:[#allocation17 + $0x68] sm:$0xff]
        %v3300 = vld [vmem:[#allocation17 + $0x70] sm:$0xff]
        %v3301 = vld [vmem:[#allocation17 + $0x78] sm:$0xff]
        %v3302 = vld [vmem:[#allocation17 + $0x80] sm:$0xff]
        %v3303 = vld [vmem:[#allocation17 + $0x88] sm:$0xff]
        %v3304 = vld [vmem:[#allocation17 + $0x90] sm:$0xff]
        %v3305 = vld [vmem:[#allocation17 + $0x98] sm:$0xff]
        %v3306 = vld [vmem:[#allocation17 + $0xa0] sm:$0xff]
        %v3307 = vld [vmem:[#allocation17 + $0xa8] sm:$0xff]
        %v3308 = vld [vmem:[#allocation17 + $0xb0] sm:$0xff]
        %v3309 = vld [vmem:[#allocation17 + $0xb8] sm:$0xff]
        %v3310 = vld [vmem:[#allocation17 + $0xc0] sm:$0xff]
        %v3311 = vld [vmem:[#allocation17 + $0xc8] sm:$0xff]
        %v3312 = vld [vmem:[#allocation17 + $0xd0] sm:$0xff]
        %v3313 = vld [vmem:[#allocation17 + $0xd8] sm:$0xff]
        %v3314 = vld [vmem:[#allocation17 + $0xe0] sm:$0xff]
        %v3315 = vld [vmem:[#allocation17 + $0xe8] sm:$0xff]
        %v3316 = vld [vmem:[#allocation17 + $0xf0] sm:$0xff]
        %v3317 = vld [vmem:[#allocation17 + $0xf8] sm:$0xff]
        %v3318 = vld [vmem:[%s10] sm:$0x1]
        %v3320 = vlaneseq
        %v3321 = vshrl.u32 %v3320, 7
        %v3322 = vsub.s32 0, %v3321
        %v3323 = vrot.slane %v3318, %v3322
        %3325 = vmatprep.subr.mxu0 0.0
        %3326 = vmatpush1.msra.mxu0 %v3301
        %3327 = vmatprep.subr.mxu0 0.0
        %3328 = vmatpush1.msra.mxu0 %v3300
        %3329 = vmatprep.subr.mxu0 0.0
        %3330 = vmatpush1.msra.mxu0 %v3299
        %3331 = vmatprep.subr.mxu0 0.0
        %3332 = vmatpush1.msra.mxu0 %v3298
        %3333 = vmatprep.subr.mxu0 0.0
        %3334 = vmatpush1.msra.mxu0 %v3297
        %3335 = vmatprep.subr.mxu0 0.0
        %3336 = vmatpush1.msra.mxu0 %v3296
        %3337 = vmatprep.subr.mxu0 0.0
        %3338 = vmatpush1.msra.mxu0 %v3295
        %3339 = vmatprep.subr.mxu0 0.0
        %3340 = vmatpush1.msra.mxu0 %v3294
        %3341 = vmatprep.subr.mxu0 0.0
        %3342 = vmatpush1.msra.mxu0 %v3293
        %3343 = vmatprep.subr.mxu0 0.0
        %3344 = vmatpush1.msra.mxu0 %v3292
        %3345 = vmatprep.subr.mxu0 0.0
        %3346 = vmatpush1.msra.mxu0 %v3291
        %3347 = vmatprep.subr.mxu0 0.0
        %3348 = vmatpush1.msra.mxu0 %v3290
        %3349 = vmatprep.subr.mxu0 0.0
        %3350 = vmatpush1.msra.mxu0 %v3289
        %3351 = vmatprep.subr.mxu0 0.0
        %3352 = vmatpush1.msra.mxu0 %v3288
        %3353 = vmatprep.subr.mxu0 0.0
        %3354 = vmatpush1.msra.mxu0 %v3287
        %3355 = vmatprep.subr.mxu0 0.0
        %3356 = vmatpush1.msra.mxu0 %v3286
        %3357 = vmatprep.subr.mxu0 0.0
        %3358 = vmatpush2.msra.mxu0 %v3317
        %3359 = vmatprep.subr.mxu0 0.0
        %3360 = vmatpush2.msra.mxu0 %v3316
        %3361 = vmatprep.subr.mxu0 0.0
        %3362 = vmatpush2.msra.mxu0 %v3315
        %3363 = vmatprep.subr.mxu0 0.0
        %3364 = vmatpush2.msra.mxu0 %v3314
        %3365 = vmatprep.subr.mxu0 0.0
        %3366 = vmatpush2.msra.mxu0 %v3313
        %3367 = vmatprep.subr.mxu0 0.0
        %3368 = vmatpush2.msra.mxu0 %v3312
        %3369 = vmatprep.subr.mxu0 0.0
        %3370 = vmatpush2.msra.mxu0 %v3311
        %3371 = vmatprep.subr.mxu0 0.0
        %3372 = vmatpush2.msra.mxu0 %v3310
        %3373 = vmatprep.subr.mxu0 0.0
        %3374 = vmatpush2.msra.mxu0 %v3309
        %3375 = vmatprep.subr.mxu0 0.0
        %3376 = vmatpush2.msra.mxu0 %v3308
        %3377 = vmatprep.subr.mxu0 0.0
        %3378 = vmatpush2.msra.mxu0 %v3307
        %3379 = vmatprep.subr.mxu0 0.0
        %3380 = vmatpush2.msra.mxu0 %v3306
        %3381 = vmatprep.subr.mxu0 0.0
        %3382 = vmatpush2.msra.mxu0 %v3305
        %3383 = vmatprep.subr.mxu0 0.0
        %3384 = vmatpush2.msra.mxu0 %v3304
        %3385 = vmatprep.subr.mxu0 0.0
        %3386 = vmatpush2.msra.mxu0 %v3303
        %3387 = vmatprep.subr.mxu0 0.0
        %3388 = vmatpush2.msra.mxu0 %v3302
        %3389 = vmatprep.mubr.f32.mxu0 %v3283
        %3390 = vmatmul.mubr.f32.gmra.mxu0 %v3282
        %v3391 = vpop.f32.mrf.mxu0
        %v3392 = vadd.f32 %v3323, %v3391
        %v3393 = vpop.f32.mrf.mxu0
        %3394 = vmatprep.mubr.f32.mxu0 %v3285
        %3395 = vmatmul.mubr.f32.gmra.mxu0 %v3284
        %v3396 = vpop.f32.mrf.mxu0
        %v3397 = vadd.f32 %v3323, %v3396
        %v3398 = vpop.f32.mrf.mxu0
        %3399 = vdwg.mxu0
        %3400 = vmax.xlane.f32.xlu0 %v3392
        %v3401 = vpop.xlane.xlu0 %3400
        %3402 = vmax.xlane.f32.xlu0 %v3397
        %v3403 = vpop.xlane.xlu0 %3402
        %v3404 = vsub.f32 %v3392, %v3401
        %v3405 = vsub.f32 %v3397, %v3403
        %v3406 = vmul.f32 %v3404, 1.442695
        %v3407 = vpow.pop %v3406
        %v3408 = vmul.f32 %v3405, 1.442695
        %v3409 = vpow.pop %v3408
        %3410 = vadd.xlane.f32.xlu0 %v3407
        %v3411 = vpop.xlane.xlu0 %3410
        %3412 = vadd.xlane.f32.xlu0 %v3409
        %v3413 = vpop.xlane.xlu0 %3412
        %v3414 = vrcp.pop %v3411
        %v3415 = vmul.f32 %v3407, %v3414
        %v3416 = vrcp.pop %v3413
        %v3417 = vmul.f32 %v3409, %v3416
        %3418 = vst [vmem:[%s599] sm:$0xff] %v3415
        %3419 = vst [vmem:[%s599 + $0x8] sm:$0xff] %v3417
        %v3420 = vld [vmem:[#allocation4] sm:$0xf]
        %v3421 = vld [vmem:[#allocation2] sm:$0xff]
        %v3422 = vld [vmem:[#allocation2 + $0x8] sm:$0xff]
        %v3423 = vld [vmem:[#allocation2 + $0x10] sm:$0xff]
        %v3424 = vld [vmem:[#allocation2 + $0x18] sm:$0xff]
        %v3425 = vrot.slane %v3421, 4
        %v3426 = vadd.f32 %v3421, %v3425
        %v3427 = vrot.slane %v3426, 2
        %v3428 = vadd.f32 %v3426, %v3427
        %v3429 = vrot.slane %v3428, 1
        %v3430 = vadd.f32 %v3428, %v3429
        %v3431 = vrot.slane %v3422, 4
        %v3432 = vadd.f32 %v3422, %v3431
        %v3433 = vrot.slane %v3432, 2
        %v3434 = vadd.f32 %v3432, %v3433
        %v3435 = vrot.slane %v3434, 1
        %v3436 = vadd.f32 %v3434, %v3435
        %v3437 = vrot.slane %v3423, 4
        %v3438 = vadd.f32 %v3423, %v3437
        %v3439 = vrot.slane %v3438, 2
        %v3440 = vadd.f32 %v3438, %v3439
        %v3441 = vrot.slane %v3440, 1
        %v3442 = vadd.f32 %v3440, %v3441
        %v3443 = vrot.slane %v3424, 4
        %v3444 = vadd.f32 %v3424, %v3443
        %v3445 = vrot.slane %v3444, 2
        %v3446 = vadd.f32 %v3444, %v3445
        %v3447 = vrot.slane %v3446, 1
        %v3448 = vadd.f32 %v3446, %v3447
        %v3453 = vcombine.low %v3430, %v3436
        %v3455 = vunpack.c.l.s4 1983009808
        %v3456 = vunpack.c.0.s8 %v3455
        %v3457 = vlaneseq
        %v3458 = vshrl.u32 %v3457, 7
        %v3459 = vsub.s32 %v3456, %v3458
        %v3460 = vrot.slane %v3453, %v3459
        %v3461 = vcombine.low %v3442, %v3448
        %v3463 = vunpack.c.l.s4 1983009808
        %v3464 = vunpack.c.0.s8 %v3463
        %v3465 = vlaneseq
        %v3466 = vshrl.u32 %v3465, 7
        %v3467 = vsub.s32 %v3464, %v3466
        %v3468 = vrot.slane %v3461, %v3467
        %vm3469 = vcmask 1044484
        %v3470 = vsel %vm3469, %v3460, %v3460
        %vm3471 = vcmask 1046534
        %v3472 = vsel %vm3471, %v3460, %v3470
        %v3473 = vrot.slane %v3468, 7
        %vm3474 = vcmask 1041409
        %v3475 = vsel %vm3474, %v3473, %v3472
        %vm3476 = vcmask 1043459
        %v3477 = vsel %vm3476, %v3473, %v3475
        %vm3478 = vcmask 1045509
        %v3479 = vsel %vm3478, %v3473, %v3477
        %vm3480 = vcmask 1047559
        %v3481 = vsel %vm3480, %v3473, %v3479
        %v3483 = vadd.f32 %v3420, %v3481
        %3484 = vst [vmem:[#allocation4] sm:$0xf] %v3483
        %p3485 = scmp.eq.s32.totalorder %s31, 1
        // Predicated region
        $region143: #{_lambda_.1} parent=105 // pred_check
          %p3486 = pneg %p3485
        $region144: #{_lambda_.1} parent=105 // pred_check_branch
          %3488 = sbr.rel (%p3486) target = $region146
        $region145: #{_lambda_.1} parent=105 // pred_region
          %v3489 = vld [vmem:[#allocation4] sm:$0xf]
          %v3490 = vmul.f32 %v3489, 0.0625
          %v3491 = vld [vmem:[%s11] sm:$0xff]
          %v3492 = vld [vmem:[%s11 + $0x8] sm:$0xff]
          %v3493 = vld [vmem:[%s11 + $0x10] sm:$0xff]
          %v3494 = vld [vmem:[%s11 + $0x18] sm:$0xff]
          %v3495 = vld [vmem:[%s11 + $0x20] sm:$0xff]
          %v3496 = vld [vmem:[%s11 + $0x28] sm:$0xff]
          %v3497 = vld [vmem:[%s11 + $0x30] sm:$0xff]
          %v3498 = vld [vmem:[%s11 + $0x38] sm:$0xff]
          %v3499 = vld [vmem:[%s11 + $0x40] sm:$0xff]
          %v3500 = vld [vmem:[%s11 + $0x48] sm:$0xff]
          %v3501 = vld [vmem:[%s11 + $0x50] sm:$0xff]
          %v3502 = vld [vmem:[%s11 + $0x58] sm:$0xff]
          %v3503 = vld [vmem:[%s11 + $0x60] sm:$0xff]
          %v3504 = vld [vmem:[%s11 + $0x68] sm:$0xff]
          %v3505 = vld [vmem:[%s11 + $0x70] sm:$0xff]
          %v3506 = vld [vmem:[%s11 + $0x78] sm:$0xff]
          %v3507 = vld [vmem:[%s11 + $0x80] sm:$0xff]
          %v3508 = vld [vmem:[%s11 + $0x88] sm:$0xff]
          %v3509 = vld [vmem:[%s11 + $0x90] sm:$0xff]
          %v3510 = vld [vmem:[%s11 + $0x98] sm:$0xff]
          %v3511 = vld [vmem:[%s11 + $0xa0] sm:$0xff]
          %v3512 = vld [vmem:[%s11 + $0xa8] sm:$0xff]
          %v3513 = vld [vmem:[%s11 + $0xb0] sm:$0xff]
          %v3514 = vld [vmem:[%s11 + $0xb8] sm:$0xff]
          %v3515 = vld [vmem:[%s11 + $0xc0] sm:$0xff]
          %v3516 = vld [vmem:[%s11 + $0xc8] sm:$0xff]
          %v3517 = vld [vmem:[%s11 + $0xd0] sm:$0xff]
          %v3518 = vld [vmem:[%s11 + $0xd8] sm:$0xff]
          %v3519 = vld [vmem:[%s11 + $0xe0] sm:$0xff]
          %v3520 = vld [vmem:[%s11 + $0xe8] sm:$0xff]
          %v3521 = vld [vmem:[%s11 + $0xf0] sm:$0xff]
          %v3522 = vld [vmem:[%s11 + $0xf8] sm:$0xff]
          %v3523 = vld [vmem:[%s12] sm:$0x1]
          %v3525 = vlaneseq
          %v3526 = vshrl.u32 %v3525, 7
          %v3527 = vsub.s32 0, %v3526
          %v3528 = vrot.slane %v3523, %v3527
          %v3532 = vunpack.c.l.s4 1983009808
          %v3533 = vunpack.c.0.s8 %v3532
          %v3534 = vlaneseq
          %v3535 = vshrl.u32 %v3534, 7
          %v3536 = vsub.s32 %v3533, %v3535
          %v3537 = vrot.slane %v3490, %v3536
          %v3538 = vcombine.high %v3537, %v3537
          %3541 = vmatprep.subr.mxu0 0.0
          %3542 = vmatpush1.msra.mxu0 %v3506
          %3543 = vmatprep.subr.mxu0 0.0
          %3544 = vmatpush1.msra.mxu0 %v3505
          %3545 = vmatprep.subr.mxu0 0.0
          %3546 = vmatpush1.msra.mxu0 %v3504
          %3547 = vmatprep.subr.mxu0 0.0
          %3548 = vmatpush1.msra.mxu0 %v3503
          %3549 = vmatprep.subr.mxu0 0.0
          %3550 = vmatpush1.msra.mxu0 %v3502
          %3551 = vmatprep.subr.mxu0 0.0
          %3552 = vmatpush1.msra.mxu0 %v3501
          %3553 = vmatprep.subr.mxu0 0.0
          %3554 = vmatpush1.msra.mxu0 %v3500
          %3555 = vmatprep.subr.mxu0 0.0
          %3556 = vmatpush1.msra.mxu0 %v3499
          %3557 = vmatprep.subr.mxu0 0.0
          %3558 = vmatpush1.msra.mxu0 %v3498
          %3559 = vmatprep.subr.mxu0 0.0
          %3560 = vmatpush1.msra.mxu0 %v3497
          %3561 = vmatprep.subr.mxu0 0.0
          %3562 = vmatpush1.msra.mxu0 %v3496
          %3563 = vmatprep.subr.mxu0 0.0
          %3564 = vmatpush1.msra.mxu0 %v3495
          %3565 = vmatprep.subr.mxu0 0.0
          %3566 = vmatpush1.msra.mxu0 %v3494
          %3567 = vmatprep.subr.mxu0 0.0
          %3568 = vmatpush1.msra.mxu0 %v3493
          %3569 = vmatprep.subr.mxu0 0.0
          %3570 = vmatpush1.msra.mxu0 %v3492
          %3571 = vmatprep.subr.mxu0 0.0
          %3572 = vmatpush1.msra.mxu0 %v3491
          %3573 = vmatprep.subr.mxu0 0.0
          %3574 = vmatpush2.msra.mxu0 %v3522
          %3575 = vmatprep.subr.mxu0 0.0
          %3576 = vmatpush2.msra.mxu0 %v3521
          %3577 = vmatprep.subr.mxu0 0.0
          %3578 = vmatpush2.msra.mxu0 %v3520
          %3579 = vmatprep.subr.mxu0 0.0
          %3580 = vmatpush2.msra.mxu0 %v3519
          %3581 = vmatprep.subr.mxu0 0.0
          %3582 = vmatpush2.msra.mxu0 %v3518
          %3583 = vmatprep.subr.mxu0 0.0
          %3584 = vmatpush2.msra.mxu0 %v3517
          %3585 = vmatprep.subr.mxu0 0.0
          %3586 = vmatpush2.msra.mxu0 %v3516
          %3587 = vmatprep.subr.mxu0 0.0
          %3588 = vmatpush2.msra.mxu0 %v3515
          %3589 = vmatprep.subr.mxu0 0.0
          %3590 = vmatpush2.msra.mxu0 %v3514
          %3591 = vmatprep.subr.mxu0 0.0
          %3592 = vmatpush2.msra.mxu0 %v3513
          %3593 = vmatprep.subr.mxu0 0.0
          %3594 = vmatpush2.msra.mxu0 %v3512
          %3595 = vmatprep.subr.mxu0 0.0
          %3596 = vmatpush2.msra.mxu0 %v3511
          %3597 = vmatprep.subr.mxu0 0.0
          %3598 = vmatpush2.msra.mxu0 %v3510
          %3599 = vmatprep.subr.mxu0 0.0
          %3600 = vmatpush2.msra.mxu0 %v3509
          %3601 = vmatprep.subr.mxu0 0.0
          %3602 = vmatpush2.msra.mxu0 %v3508
          %3603 = vmatprep.subr.mxu0 0.0
          %3604 = vmatpush2.msra.mxu0 %v3507
          %3605 = vmatprep.mubr.f32.mxu0 %v3538
          %3606 = vmatmul.mubr.f32.gmra.mxu0 %v3537
          %v3607 = vpop.f32.mrf.mxu0
          %v3608 = vadd.f32 %v3528, %v3607
          %v3609 = vpop.f32.mrf.mxu0
          %3610 = vdwg.mxu0
          %vm3611 = vcmask 1041408
          %v3612 = vsel %vm3611, %v3608, -inf
          %3613 = vmax.xlane.f32.xlu0 %v3612
          %v3614 = vpop.xlane.xlu0 %3613
          %v3615 = vsub.f32 %v3608, %v3614
          %v3616 = vmul.f32 %v3615, 1.442695
          %v3617 = vpow.pop %v3616
          %v3618 = vsel %vm3611, %v3617, 0.0
          %3619 = vadd.xlane.f32.xlu0 %v3618
          %v3620 = vpop.xlane.xlu0 %3619
          %v3621 = vrcp.pop %v3620
          %v3622 = vmul.f32 %v3617, %v3621
          %3623 = vst [vmem:[#allocation19] sm:$0x3] %v3622
        $region146: #{_lambda_.1} parent=105 // pred_fallthru
          _
        %s3624 = sand.u32 %s317, 1
        %s3625 = sand.u32 %s317, 1
        %s3626 = smul.addr %s3625, 16
        %s3627 = scalar_lea.vmem [#allocation18], %s3626
        // Predicated region
        $region147: #{_lambda_.1} parent=105 // pred_check
          %p3628 = pneg %p327
        $region148: #{_lambda_.1} parent=105 // pred_check_branch
          %3630 = sbr.rel (%p3628) target = $region150
        $region149: #{_lambda_.1} parent=105 // pred_region
          %s3631 = smul.addr %s31, 8
          %s3632 = scalar_lea.vmem %s13, %s3631
          // Predicated region
          $region151: #{_lambda_.1} parent=149 // pred_check
            _
          $region152: #{_lambda_.1} parent=149 // pred_check_branch
            %3634 = sbr.rel (0) target = $region154
          $region153: #{_lambda_.1} parent=149 // pred_region
            // Predicated region
            $region155: #{_lambda_.1} parent=153 // pred_check
              _
            $region156: #{_lambda_.1} parent=153 // pred_check_branch
              %3636 = sbr.rel (0) target = $region158
            $region157: #{_lambda_.1} parent=153 // pred_region
              // Predicated region
              $region170: #{_lambda_.1} parent=157 // pred_check
                _
              $region171: #{_lambda_.1} parent=157 // pred_check_branch
                %3654 = sbr.rel (0) target = $region173
              $region172: #{_lambda_.1} parent=157 // pred_region
                loop: start=0, step=1, limit=1
                $region174: #{_lambda_.1} parent=172 // loop_pre_header
                  _
                $region175: #{_lambda_.1} parent=172 // loop_header
                  %s3656 = sphi 0, %s3660
                  %p3657 = scmp.ge.s32.totalorder %s3656, 1
                  %s3661 = sphi %s3627, %s3627
                  %s3662 = sphi %s3632, %s3632
                $region176: #{_lambda_.1} parent=172 // loop_header_branch
                  %3659 = sbr.rel (%p3657) target = $region180
                $region177: #{_lambda_.1} parent=172 // loop_body
                  %v3663 = vld [vmem:[%s3661] sm:$0xff]
                  %3664 = vst [vmem:[%s3662] sm:$0xff] %v3663
                  %v3665 = vld [vmem:[%s3661 + $0x8] sm:$0xff]
                  %3666 = vst [vmem:[%s3662 + $0x10] sm:$0xff] %v3665
                $region178: #{_lambda_.1} parent=172 // loop_footer
                  %s3660 = sadd.s32 1, %s3656
                $region179: #{_lambda_.1} parent=172 // loop_footer_branch
                  %3655 = sbr.rel target = $region175
                $region180: #{_lambda_.1} parent=172 // loop_exit
                  _
              $region173: #{_lambda_.1} parent=157 // pred_fallthru
                _
              // Predicated region
              $region181: #{_lambda_.1} parent=157 // pred_check
                _
              $region182: #{_lambda_.1} parent=157 // pred_check_branch
                %3668 = sbr.rel target = $region184
              $region183: #{_lambda_.1} parent=157 // pred_region
                _
              $region184: #{_lambda_.1} parent=157 // pred_fallthru
                _
            $region158: #{_lambda_.1} parent=153 // pred_fallthru
              _
            // Predicated region
            $region159: #{_lambda_.1} parent=153 // pred_check
              _
            $region160: #{_lambda_.1} parent=153 // pred_check_branch
              %3638 = sbr.rel target = $region162
            $region161: #{_lambda_.1} parent=153 // pred_region
              %s3640 = ssub.s32 256, 1
              loop: start=0, step=1, limit=1
              $region163: #{_lambda_.1} parent=161 // loop_pre_header
                _
              $region164: #{_lambda_.1} parent=161 // loop_header
                %s3642 = sphi 0, %s3646
                %p3643 = scmp.ge.s32.totalorder %s3642, 1
                %s3647 = sphi %s3627, %s3627
                %s3648 = sphi %s3632, %s3632
              $region165: #{_lambda_.1} parent=161 // loop_header_branch
                %3645 = sbr.rel (%p3643) target = $region169
              $region166: #{_lambda_.1} parent=161 // loop_body
                %v3649 = vld [vmem:[%s3647] sm:%s3640]
                %3650 = vst [vmem:[%s3648] sm:%s3640] %v3649
                %v3651 = vld [vmem:[%s3647 + $0x8] sm:%s3640]
                %3652 = vst [vmem:[%s3648 + $0x10] sm:%s3640] %v3651
              $region167: #{_lambda_.1} parent=161 // loop_footer
                %s3646 = sadd.s32 1, %s3642
              $region168: #{_lambda_.1} parent=161 // loop_footer_branch
                %3641 = sbr.rel target = $region164
              $region169: #{_lambda_.1} parent=161 // loop_exit
                _
            $region162: #{_lambda_.1} parent=153 // pred_fallthru
              _
          $region154: #{_lambda_.1} parent=149 // pred_fallthru
            _
          %3669 = vnop
        $region150: #{_lambda_.1} parent=105 // pred_fallthru
          _
        // Predicated region
        $region185: #{_lambda_.1} parent=105 // pred_check
          %p3670 = pneg %p348
        $region186: #{_lambda_.1} parent=105 // pred_check_branch
          %3672 = sbr.rel (%p3670) target = $region188
        $region187: #{_lambda_.1} parent=105 // pred_region
          %s3674 = ssub.s32 32, 32
          %3675 = vsyncadd [#allocation8], %s3674
          %s3677 = sshll.u32 [#allocation19], 4
          %s3678 = int_to_ptr.vmem [resolvable:$true] %s3677
          %3680 = dma.vmem_to_hbm [thread:$0]  %s3678, 32, %s14, [#allocation8]
        $region188: #{_lambda_.1} parent=105 // pred_fallthru
          _
        // Predicated region
        $region189: #{_lambda_.1} parent=105 // pred_check
          %p3681 = pneg %p348
        $region190: #{_lambda_.1} parent=105 // pred_check_branch
          %3683 = sbr.rel (%p3681) target = $region192
        $region191: #{_lambda_.1} parent=105 // pred_region
          %3684 = dma.done [#allocation8], 32
        $region192: #{_lambda_.1} parent=105 // pred_fallthru
          _
      $region106: #{_lambda_.1} parent=5 // pred_fallthru
        _
      %p3685 = scmp.le.s32.totalorder 2, %s26
      // Predicated region
      $region193: #{_lambda_.1} parent=5 // pred_check
        %p3686 = pneg %p3685
      $region194: #{_lambda_.1} parent=5 // pred_check_branch
        %3688 = sbr.rel (%p3686) target = $region196
      $region195: #{_lambda_.1} parent=5 // pred_region
        %s3689 = ssub.s32 %s26, 2
        // Predicated region
        $region197: #{_lambda_.1} parent=195 // pred_check
          %p3690 = pneg %p333
        $region198: #{_lambda_.1} parent=195 // pred_check_branch
          %3692 = sbr.rel (%p3690) target = $region200
        $region199: #{_lambda_.1} parent=195 // pred_region
          %s3693 = sand.u32 %s318, 1
          %s3694 = sand.u32 %s318, 1
          %s3695 = smul.addr %s3694, 16
          %s3696 = scalar_lea.vmem [#allocation18], %s3695
        $region200: #{_lambda_.1} parent=195 // pred_fallthru
          _
      $region196: #{_lambda_.1} parent=5 // pred_fallthru
        _
    $region6: #{_lambda_.1} parent=1 // loop_footer
      %s30 = sadd.s32 1, %s26
    $region7: #{_lambda_.1} parent=1 // loop_footer_branch
      %25 = sbr.rel target = $region3
    $region8: #{_lambda_.1} parent=1 // loop_exit
      _
    %3697 = vsyncpa [#allocation7], 1
    %s3698 = scalar_lea.sflag [#allocation7], 1
    %3699 = vsyncpa %s3698, 1
    %3700 = vsyncpa [#allocation10], 1
    %3701 = vsyncpa [#allocation13], 1
    %3702 = vsyncpa [#allocation16], 1
    %3703 = vsyncpa [#allocation8], 1
    %s3704 = scalar_lea.sflag [#allocation8], 1
    %3705 = vsyncpa %s3704, 1

</llo_original>
